<compile_context>
chip_gen: v6e
topology: v6e:2x2x1
jax: 0.10.0
libtpu: 0.0.40
codegen_flags: <defaults>
</compile_context>

<pallas_src>
import functools

import jax
import jax.numpy as jnp
from jax.experimental import pallas as pl
from jax.experimental.pallas import tpu as pltpu

BN_EPS = 1e-3          # YOLOv7 Conv uses BatchNorm2d(eps=0.001)


# ----------------------------------------------------------------------------
# In-kernel helpers
# ----------------------------------------------------------------------------
def _silu(y):
    # SiLU in f32 via tanh (EUP slot only): sigmoid(y) = 0.5*tanh(0.5*y) + 0.5.
    return y * (0.5 * jnp.tanh(0.5 * y) + 0.5)


def _shifted(x, row, col, H, W, dr, dw, fill):
    """result[c, h*W+w] = x[c, (h+dr)*W + (w+dw)] if in range, else `fill`.

    x is the flat (C, H*W) tile; row/col are int32 (C, H*W) index maps.
    The circular wrap of pltpu.roll is always covered by the row/col masks.
    """
    L = x.shape[-1]
    s = dr * W + dw
    y = x if s == 0 else pltpu.roll(x, shift=(-s) % L, axis=1)
    m = None
    if dr > 0:
        m = row < (H - dr)
    if dr < 0:
        m = row >= (-dr)
    if dw > 0:
        c = col < (W - dw)
        m = c if m is None else jnp.logical_and(m, c)
    if dw < 0:
        c = col >= (-dw)
        m = c if m is None else jnp.logical_and(m, c)
    if m is not None:
        y = jnp.where(m, y, fill)
    return y


# ----------------------------------------------------------------------------
# Kernel 1: cv1 + cv2 (two 1x1 convs sharing the same input block)
# ----------------------------------------------------------------------------
def _cv1_cv2_kernel(w1_ref, b1_ref, w2_ref, b2_ref, x_ref, t1_ref, y2_ref):
    x = x_ref[...]
    a = jnp.dot(w1_ref[...], x, preferred_element_type=jnp.float32) + b1_ref[...]
    t1_ref[...] = _silu(a).astype(t1_ref.dtype)
    b = jnp.dot(w2_ref[...], x, preferred_element_type=jnp.float32) + b2_ref[...]
    y2_ref[...] = _silu(b).astype(y2_ref.dtype)


# ----------------------------------------------------------------------------
# Kernel 2: cv3 (3x3) + cv4 (1x1), 3x3 = 9 shifted matmuls, zero-fill borders
# ----------------------------------------------------------------------------
def _conv3x3_pw_kernel(w3_ref, b3_ref, w4_ref, b4_ref, rc_ref, x_ref, o_ref,
                       *, H, W):
    x = x_ref[...]
    rc = rc_ref[...]
    row = jnp.broadcast_to(rc[0:1], x.shape)
    col = jnp.broadcast_to(rc[1:2], x.shape)
    acc = jnp.zeros((w3_ref.shape[1], x.shape[-1]), jnp.float32)
    for dr in (-1, 0, 1):
        for dw in (-1, 0, 1):
            xs = _shifted(x, row, col, H, W, dr, dw, 0.0)
            k = (dr + 1) * 3 + (dw + 1)
            acc = acc + jnp.dot(w3_ref[k], xs, preferred_element_type=jnp.float32)
    y3 = _silu(acc + b3_ref[...]).astype(x.dtype)
    y4 = jnp.dot(w4_ref[...], y3, preferred_element_type=jnp.float32) + b4_ref[...]
    o_ref[...] = _silu(y4).astype(o_ref.dtype)


# ----------------------------------------------------------------------------
# Kernel 3: SPPF cascade (pool5 -> pool9 -> pool13) fused with cv5 (1x1)
# ----------------------------------------------------------------------------
def _spp_cv5_kernel(w5_ref, b5_ref, rc_ref, x_ref, o_ref, *, H, W):
    x = x_ref[...]
    rc = rc_ref[...]
    row = jnp.broadcast_to(rc[0:1], x.shape)
    col = jnp.broadcast_to(rc[1:2], x.shape)
    neg = float("-inf")

    # identity branch of the concat goes straight into cv5's first weight slice
    acc = jnp.dot(w5_ref[0], x, preferred_element_type=jnp.float32)
    cur = x
    for g in range(3):                       # clamped pool5 cascade = 5, 9, 13
        cm = cur                             # separable: W direction first
        for dw in (-2, -1, 1, 2):
            cm = jnp.maximum(cm, _shifted(cur, row, col, H, W, 0, dw, neg))
        nxt = cm                             # then H direction
        for dr in (-2, -1, 1, 2):
            nxt = jnp.maximum(nxt, _shifted(cm, row, col, H, W, dr, 0, neg))
        cur = nxt
        acc = acc + jnp.dot(w5_ref[g + 1], cur, preferred_element_type=jnp.float32)
    o_ref[...] = _silu(acc + b5_ref[...]).astype(o_ref.dtype)


# ----------------------------------------------------------------------------
# Kernel 4: cv6 (3x3) + cv7 (1x1 on the [y1, y2] concat, weights pre-split)
# ----------------------------------------------------------------------------
def _conv3x3_cat_pw_kernel(w6_ref, b6_ref, w7a_ref, w7b_ref, b7_ref,
                           rc_ref, t_ref, y2_ref, o_ref, *, H, W):
    t = t_ref[...]
    rc = rc_ref[...]
    row = jnp.broadcast_to(rc[0:1], t.shape)
    col = jnp.broadcast_to(rc[1:2], t.shape)
    acc = jnp.zeros((w6_ref.shape[1], t.shape[-1]), jnp.float32)
    for dr in (-1, 0, 1):
        for dw in (-1, 0, 1):
            xs = _shifted(t, row, col, H, W, dr, dw, 0.0)
            k = (dr + 1) * 3 + (dw + 1)
            acc = acc + jnp.dot(w6_ref[k], xs, preferred_element_type=jnp.float32)
    y1 = _silu(acc + b6_ref[...]).astype(t.dtype)
    z = (jnp.dot(w7a_ref[...], y1, preferred_element_type=jnp.float32)
         + jnp.dot(w7b_ref[...], y2_ref[...], preferred_element_type=jnp.float32)
         + b7_ref[...])
    o_ref[...] = _silu(z).astype(o_ref.dtype)


# ----------------------------------------------------------------------------
# pallas_call wrappers (grid over batch; full lane-dense (C, H*W) blocks)
# ----------------------------------------------------------------------------
def _full_spec(shape):
    nd = len(shape)
    return pl.BlockSpec(shape, lambda b: (0,) * nd)


def _bspec(c, l):
    return pl.BlockSpec((pl.Squeezed(), c, l), lambda b: (b, 0, 0))


_PARALLEL = pltpu.CompilerParams(dimension_semantics=("parallel",))


def _call_cv1_cv2(w1, b1, w2, b2, x):
    B, C1, L = x.shape
    co = w1.shape[0]
    return pl.pallas_call(
        _cv1_cv2_kernel,
        out_shape=(jax.ShapeDtypeStruct((B, co, L), x.dtype),
                   jax.ShapeDtypeStruct((B, co, L), x.dtype)),
        grid=(B,),
        in_specs=[_full_spec(w1.shape), _full_spec(b1.shape),
                  _full_spec(w2.shape), _full_spec(b2.shape),
                  _bspec(C1, L)],
        out_specs=(_bspec(co, L), _bspec(co, L)),
        compiler_params=_PARALLEL,
    )(w1, b1, w2, b2, x)


def _call_conv3x3_pw(w3, b3, w4, b4, rc, x, H, W):
    B, Ci, L = x.shape
    co = w4.shape[0]
    kern = functools.partial(_conv3x3_pw_kernel, H=H, W=W)
    return pl.pallas_call(
        kern,
        out_shape=jax.ShapeDtypeStruct((B, co, L), x.dtype),
        grid=(B,),
        in_specs=[_full_spec(w3.shape), _full_spec(b3.shape),
                  _full_spec(w4.shape), _full_spec(b4.shape),
                  _full_spec(rc.shape), _bspec(Ci, L)],
        out_specs=_bspec(co, L),
        compiler_params=_PARALLEL,
    )(w3, b3, w4, b4, rc, x)


def _call_spp_cv5(w5, b5, rc, x, H, W):
    B, C, L = x.shape
    co = w5.shape[1]
    kern = functools.partial(_spp_cv5_kernel, H=H, W=W)
    return pl.pallas_call(
        kern,
        out_shape=jax.ShapeDtypeStruct((B, co, L), x.dtype),
        grid=(B,),
        in_specs=[_full_spec(w5.shape), _full_spec(b5.shape),
                  _full_spec(rc.shape), _bspec(C, L)],
        out_specs=_bspec(co, L),
        compiler_params=_PARALLEL,
    )(w5, b5, rc, x)


def _call_conv3x3_cat_pw(w6, b6, w7a, w7b, b7, rc, t, y2, H, W, out_dtype):
    B, Ci, L = t.shape
    co = w7a.shape[0]
    kern = functools.partial(_conv3x3_cat_pw_kernel, H=H, W=W)
    return pl.pallas_call(
        kern,
        out_shape=jax.ShapeDtypeStruct((B, co, L), out_dtype),
        grid=(B,),
        in_specs=[_full_spec(w6.shape), _full_spec(b6.shape),
                  _full_spec(w7a.shape), _full_spec(w7b.shape),
                  _full_spec(b7.shape), _full_spec(rc.shape),
                  _bspec(Ci, L), _bspec(y2.shape[1], L)],
        out_specs=_bspec(co, L),
        compiler_params=_PARALLEL,
    )(w6, b6, w7a, w7b, b7, rc, t, y2)


# ----------------------------------------------------------------------------
# Wrapper-side parameter folding (pure XLA, constant-folded under jit)
# ----------------------------------------------------------------------------
def _fold_bn(p):
    scale = p["gamma"] / jnp.sqrt(p["var"] + BN_EPS)
    w = p["w"] * scale[:, None, None, None]
    b = p["beta"] - p["mean"] * scale
    return w, b


def _fold_1x1(p, dtype):
    w, b = _fold_bn(p)
    return w[:, :, 0, 0].astype(dtype), b.reshape(-1, 1).astype(jnp.float32)


def _fold_3x3(p, dtype):
    w, b = _fold_bn(p)
    co, ci = w.shape[0], w.shape[1]
    w9 = jnp.transpose(w, (2, 3, 0, 1)).reshape(9, co, ci)   # tap k = kh*3 + kw
    return w9.astype(dtype), b.reshape(-1, 1).astype(jnp.float32)


def sppcspc_pallas(params, x, compute_dtype=jnp.bfloat16):
    B, C1, H, W = x.shape
    L = H * W
    cd = compute_dtype
    xf = x.reshape(B, C1, L).astype(cd)

    # flat-index -> (row, col) lookup used for border masking inside kernels
    lidx = jnp.arange(L, dtype=jnp.int32)
    rc = jnp.stack([lidx // W, lidx % W]).astype(jnp.int32)          # (2, L)

    w1, b1 = _fold_1x1(params["cv1"], cd)
    w2, b2 = _fold_1x1(params["cv2"], cd)
    t1, y2 = _call_cv1_cv2(w1, b1, w2, b2, xf)                       # cv1, cv2

    w3, b3 = _fold_3x3(params["cv3"], cd)
    w4, b4 = _fold_1x1(params["cv4"], cd)
    x1 = _call_conv3x3_pw(w3, b3, w4, b4, rc, t1, H, W)              # cv3+cv4

    w5_2d, b5 = _fold_1x1(params["cv5"], cd)
    c_ = x1.shape[1]
    w5 = w5_2d.reshape(w5_2d.shape[0], 4, c_).transpose(1, 0, 2)     # (4,Co,c_)
    t5 = _call_spp_cv5(w5, b5, rc, x1, H, W)                         # SPP+cv5

    w6, b6 = _fold_3x3(params["cv6"], cd)
    w7_2d, b7 = _fold_1x1(params["cv7"], cd)
    w7a, w7b = w7_2d[:, :c_], w7_2d[:, c_:]                          # y1 / y2
    out = _call_conv3x3_cat_pw(w6, b6, w7a, w7b, b7, rc, t5, y2, H, W,
                               jnp.float32)                          # cv6+cv7
    return out.reshape(B, -1, H, W)


# ----------------------------------------------------------------------------
# Pure-JAX reference (lax.conv + BN + SiLU + reduce_window) for verification
# ----------------------------------------------------------------------------
KS = (5, 9, 13)


def _conv_bn_silu_ref(x, p, pad):
    y = jax.lax.conv_general_dilated(
        x, p["w"], window_strides=(1, 1), padding=[(pad, pad), (pad, pad)],
        dimension_numbers=("NCHW", "OIHW", "NCHW"),
        precision=jax.lax.Precision.HIGHEST)
    scale = p["gamma"] / jnp.sqrt(p["var"] + BN_EPS)
    y = y * scale[None, :, None, None] + \
        (p["beta"] - p["mean"] * scale)[None, :, None, None]
    return y * jax.nn.sigmoid(y)


def _maxpool_ref(x, k):
    p = k // 2
    return jax.lax.reduce_window(x, -jnp.inf, jax.lax.max,
                                 (1, 1, k, k), (1, 1, 1, 1),
                                 [(0, 0), (0, 0), (p, p), (p, p)])


def sppcspc_ref(params, x):
    x1 = _conv_bn_silu_ref(
        _conv_bn_silu_ref(_conv_bn_silu_ref(x, params["cv1"], 0),
                          params["cv3"], 1),
        params["cv4"], 0)
    cat1 = jnp.concatenate([x1] + [_maxpool_ref(x1, k) for k in KS], axis=1)
    y1 = _conv_bn_silu_ref(_conv_bn_silu_ref(cat1, params["cv5"], 0),
                           params["cv6"], 1)
    y2 = _conv_bn_silu_ref(x, params["cv2"], 0)
    return _conv_bn_silu_ref(jnp.concatenate([y1, y2], axis=1),
                             params["cv7"], 0)


# ----------------------------------------------------------------------------
# Parameter init (Conv2d weight + BatchNorm2d running stats / affine)
# ----------------------------------------------------------------------------
def init_conv_params(key, c_out, c_in, k):
    kw, kg, kb, km, kv = jax.random.split(key, 5)
    return dict(
        w=jax.random.normal(kw, (c_out, c_in, k, k), jnp.float32)
          * (c_in * k * k) ** -0.5,
        gamma=1.0 + 0.1 * jax.random.normal(kg, (c_out,), jnp.float32),
        beta=0.1 * jax.random.normal(kb, (c_out,), jnp.float32),
        mean=0.1 * jax.random.normal(km, (c_out,), jnp.float32),
        var=0.5 + 0.5 * jnp.abs(jax.random.normal(kv, (c_out,), jnp.float32)),
    )


if __name__ == "__main__":
    key = jax.random.PRNGKey(0)
    keys = jax.random.split(key, 8)

    B, C1, C2, H, W = 2, 8, 8, 16, 16          # small shapes; H*W = 256 lanes
    E = 0.5
    c_ = int(2 * C2 * E)

    x = jax.random.normal(keys[0], (B, C1, H, W), jnp.float32)
    params = {
        "cv1": init_conv_params(keys[1], c_, C1, 1),
        "cv2": init_conv_params(keys[2], c_, C1, 1),
        "cv3": init_conv_params(keys[3], c_, c_, 3),
        "cv4": init_conv_params(keys[4], c_, c_, 1),
        "cv5": init_conv_params(keys[5], c_, 4 * c_, 1),
        "cv6": init_conv_params(keys[6], c_, c_, 3),
        "cv7": init_conv_params(keys[7], C2, 2 * c_, 1),
    }

    ref = jax.block_until_ready(sppcspc_ref(params, x))

    # f32 compute path: tight correctness check of the fused kernels.
    fwd_f32 = jax.jit(functools.partial(sppcspc_pallas, compute_dtype=jnp.float32))
    out_f32 = jax.block_until_ready(fwd_f32(params, x))
    assert out_f32.shape == (B, C2, H, W), out_f32.shape
    err_f32 = float(jnp.max(jnp.abs(out_f32 - ref)))
    assert jnp.allclose(out_f32, ref, atol=2e-3, rtol=2e-3), err_f32

    # bf16 compute path (default, MXU-native): looser end-to-end tolerance.
    fwd_bf16 = jax.jit(sppcspc_pallas)
    out_bf16 = jax.block_until_ready(fwd_bf16(params, x))
    assert out_bf16.shape == (B, C2, H, W), out_bf16.shape
    err_bf16 = float(jnp.max(jnp.abs(out_bf16 - ref)))
    assert jnp.allclose(out_bf16, ref, atol=6e-2, rtol=6e-2), err_bf16

    print("KERNEL_OK")
</pallas_src>

<mosaic_0001>
module attributes {stable_mosaic.version = 11 : i64} {
  func.func @_cv1_cv2_kernel(%arg0: i32, %arg1: memref<8x8xf32, #tpu.memory_space<vmem>>, %arg2: memref<8x1xf32, #tpu.memory_space<vmem>>, %arg3: memref<8x8xf32, #tpu.memory_space<vmem>>, %arg4: memref<8x1xf32, #tpu.memory_space<vmem>>, %arg5: memref<1x8x256xf32, #tpu.memory_space<vmem>>, %arg6: memref<1x8x256xf32, #tpu.memory_space<vmem>>, %arg7: memref<1x8x256xf32, #tpu.memory_space<vmem>>) attributes {dimension_semantics = [#tpu.dimension_semantics<parallel>], iteration_bounds = array<i64: 2>, scalar_prefetch = 0 : i64, scratch_operands = 0 : i64, tpu.core_type = #tpu.core_type<tc>, window_params = [{pipeline_mode = #tpu.pipeline_mode<synchronous>, transform_indices = @transform_0, window_bounds = array<i64: 8, 8>}, {pipeline_mode = #tpu.pipeline_mode<synchronous>, transform_indices = @transform_1, window_bounds = array<i64: 8, 1>}, {pipeline_mode = #tpu.pipeline_mode<synchronous>, transform_indices = @transform_2, window_bounds = array<i64: 8, 8>}, {pipeline_mode = #tpu.pipeline_mode<synchronous>, transform_indices = @transform_3, window_bounds = array<i64: 8, 1>}, {transform_indices = @transform_4, window_bounds = array<i64: 1, 8, 256>}, {transform_indices = @transform_5, window_bounds = array<i64: 1, 8, 256>}, {transform_indices = @transform_6, window_bounds = array<i64: 1, 8, 256>}]} {
    %c0 = arith.constant 0 : index
    %c0_0 = arith.constant 0 : index
    %c0_1 = arith.constant 0 : index
    %0 = vector.load %arg5[%c0, %c0_0, %c0_1] : memref<1x8x256xf32, #tpu.memory_space<vmem>>, vector<1x8x256xf32>
    %1 = vector.shape_cast %0 : vector<1x8x256xf32> to vector<8x256xf32>
    %c0_2 = arith.constant 0 : index
    %c0_3 = arith.constant 0 : index
    %2 = vector.load %arg1[%c0_2, %c0_3] : memref<8x8xf32, #tpu.memory_space<vmem>>, vector<8x8xf32>
    %cst = arith.constant dense<0.000000e+00> : vector<8x256xf32>
    %3 = tpu.matmul %2, %1, %cst {dimension_numbers = #tpu.dot_dimension_numbers<[1], [0], [0], [1], [0, 0, 1, 1], [], []>} : vector<8x8xf32>, vector<8x256xf32>, vector<8x256xf32> -> vector<8x256xf32>
    %c0_4 = arith.constant 0 : index
    %c0_5 = arith.constant 0 : index
    %4 = vector.load %arg2[%c0_4, %c0_5] : memref<8x1xf32, #tpu.memory_space<vmem>>, vector<8x1xf32>
    %5 = vector.broadcast %4 : vector<8x1xf32> to vector<8x256xf32>
    %6 = arith.addf %3, %5 : vector<8x256xf32>
    %cst_6 = arith.constant 5.000000e-01 : f32
    %7 = vector.broadcast %cst_6 : f32 to vector<8x256xf32>
    %8 = arith.mulf %7, %6 : vector<8x256xf32>
    %9 = math.tanh %8 : vector<8x256xf32>
    %cst_7 = arith.constant 5.000000e-01 : f32
    %10 = vector.broadcast %cst_7 : f32 to vector<8x256xf32>
    %11 = arith.mulf %10, %9 : vector<8x256xf32>
    %cst_8 = arith.constant 5.000000e-01 : f32
    %12 = vector.broadcast %cst_8 : f32 to vector<8x256xf32>
    %13 = arith.addf %11, %12 : vector<8x256xf32>
    %14 = arith.mulf %6, %13 : vector<8x256xf32>
    %c0_9 = arith.constant 0 : index
    %c0_10 = arith.constant 0 : index
    %c0_11 = arith.constant 0 : index
    %15 = vector.load %arg6[%c0_9, %c0_10, %c0_11] : memref<1x8x256xf32, #tpu.memory_space<vmem>>, vector<1x8x256xf32>
    %16 = vector.shape_cast %15 : vector<1x8x256xf32> to vector<8x256xf32>
    %17 = vector.shape_cast %14 : vector<8x256xf32> to vector<1x8x256xf32>
    tpu.vector_store %arg6[%c0_9, %c0_10, %c0_11], %17 {strides = array<i32>} : memref<1x8x256xf32, #tpu.memory_space<vmem>>, vector<1x8x256xf32>,
    %c0_12 = arith.constant 0 : index
    %c0_13 = arith.constant 0 : index
    %18 = vector.load %arg3[%c0_12, %c0_13] : memref<8x8xf32, #tpu.memory_space<vmem>>, vector<8x8xf32>
    %cst_14 = arith.constant dense<0.000000e+00> : vector<8x256xf32>
    %19 = tpu.matmul %18, %1, %cst_14 {dimension_numbers = #tpu.dot_dimension_numbers<[1], [0], [0], [1], [0, 0, 1, 1], [], []>} : vector<8x8xf32>, vector<8x256xf32>, vector<8x256xf32> -> vector<8x256xf32>
    %c0_15 = arith.constant 0 : index
    %c0_16 = arith.constant 0 : index
    %20 = vector.load %arg4[%c0_15, %c0_16] : memref<8x1xf32, #tpu.memory_space<vmem>>, vector<8x1xf32>
    %21 = vector.broadcast %20 : vector<8x1xf32> to vector<8x256xf32>
    %22 = arith.addf %19, %21 : vector<8x256xf32>
    %cst_17 = arith.constant 5.000000e-01 : f32
    %23 = vector.broadcast %cst_17 : f32 to vector<8x256xf32>
    %24 = arith.mulf %23, %22 : vector<8x256xf32>
    %25 = math.tanh %24 : vector<8x256xf32>
    %cst_18 = arith.constant 5.000000e-01 : f32
    %26 = vector.broadcast %cst_18 : f32 to vector<8x256xf32>
    %27 = arith.mulf %26, %25 : vector<8x256xf32>
    %cst_19 = arith.constant 5.000000e-01 : f32
    %28 = vector.broadcast %cst_19 : f32 to vector<8x256xf32>
    %29 = arith.addf %27, %28 : vector<8x256xf32>
    %30 = arith.mulf %22, %29 : vector<8x256xf32>
    %c0_20 = arith.constant 0 : index
    %c0_21 = arith.constant 0 : index
    %c0_22 = arith.constant 0 : index
    %31 = vector.load %arg7[%c0_20, %c0_21, %c0_22] : memref<1x8x256xf32, #tpu.memory_space<vmem>>, vector<1x8x256xf32>
    %32 = vector.shape_cast %31 : vector<1x8x256xf32> to vector<8x256xf32>
    %33 = vector.shape_cast %30 : vector<8x256xf32> to vector<1x8x256xf32>
    tpu.vector_store %arg7[%c0_20, %c0_21, %c0_22], %33 {strides = array<i32>} : memref<1x8x256xf32, #tpu.memory_space<vmem>>, vector<1x8x256xf32>,
    return
  }
  func.func @transform_0(%arg0: i32) -> (i32, i32) {
    %c0_i32 = arith.constant 0 : i32
    %c0_i32_0 = arith.constant 0 : i32
    %c0_i32_1 = arith.constant 0 : i32
    return %c0_i32, %c0_i32_0 : i32, i32
  }
  func.func @transform_1(%arg0: i32) -> (i32, i32) {
    %c0_i32 = arith.constant 0 : i32
    %c0_i32_0 = arith.constant 0 : i32
    %c0_i32_1 = arith.constant 0 : i32
    return %c0_i32, %c0_i32_0 : i32, i32
  }
  func.func @transform_2(%arg0: i32) -> (i32, i32) {
    %c0_i32 = arith.constant 0 : i32
    %c0_i32_0 = arith.constant 0 : i32
    %c0_i32_1 = arith.constant 0 : i32
    return %c0_i32, %c0_i32_0 : i32, i32
  }
  func.func @transform_3(%arg0: i32) -> (i32, i32) {
    %c0_i32 = arith.constant 0 : i32
    %c0_i32_0 = arith.constant 0 : i32
    %c0_i32_1 = arith.constant 0 : i32
    return %c0_i32, %c0_i32_0 : i32, i32
  }
  func.func @transform_4(%arg0: i32) -> (i32, i32, i32) {
    %c0_i32 = arith.constant 0 : i32
    %c0_i32_0 = arith.constant 0 : i32
    %c0_i32_1 = arith.constant 0 : i32
    return %arg0, %c0_i32, %c0_i32_0 : i32, i32, i32
  }
  func.func @transform_5(%arg0: i32) -> (i32, i32, i32) {
    %c0_i32 = arith.constant 0 : i32
    %c0_i32_0 = arith.constant 0 : i32
    %c0_i32_1 = arith.constant 0 : i32
    return %arg0, %c0_i32, %c0_i32_0 : i32, i32, i32
  }
  func.func @transform_6(%arg0: i32) -> (i32, i32, i32) {
    %c0_i32 = arith.constant 0 : i32
    %c0_i32_0 = arith.constant 0 : i32
    %c0_i32_1 = arith.constant 0 : i32
    return %arg0, %c0_i32, %c0_i32_0 : i32, i32, i32
  }
}

module attributes {stable_mosaic.version = 11 : i64} {
  func.func @_conv3x3_pw_kernel(%arg0: i32, %arg1: memref<9x8x8xf32, #tpu.memory_space<vmem>>, %arg2: memref<8x1xf32, #tpu.memory_space<vmem>>, %arg3: memref<8x8xf32, #tpu.memory_space<vmem>>, %arg4: memref<8x1xf32, #tpu.memory_space<vmem>>, %arg5: memref<2x256xi32, #tpu.memory_space<vmem>>, %arg6: memref<1x8x256xf32, #tpu.memory_space<vmem>>, %arg7: memref<1x8x256xf32, #tpu.memory_space<vmem>>) attributes {dimension_semantics = [#tpu.dimension_semantics<parallel>], iteration_bounds = array<i64: 2>, scalar_prefetch = 0 : i64, scratch_operands = 0 : i64, tpu.core_type = #tpu.core_type<tc>, window_params = [{pipeline_mode = #tpu.pipeline_mode<synchronous>, transform_indices = @transform_0, window_bounds = array<i64: 9, 8, 8>}, {pipeline_mode = #tpu.pipeline_mode<synchronous>, transform_indices = @transform_1, window_bounds = array<i64: 8, 1>}, {pipeline_mode = #tpu.pipeline_mode<synchronous>, transform_indices = @transform_2, window_bounds = array<i64: 8, 8>}, {pipeline_mode = #tpu.pipeline_mode<synchronous>, transform_indices = @transform_3, window_bounds = array<i64: 8, 1>}, {pipeline_mode = #tpu.pipeline_mode<synchronous>, transform_indices = @transform_4, window_bounds = array<i64: 2, 256>}, {transform_indices = @transform_5, window_bounds = array<i64: 1, 8, 256>}, {transform_indices = @transform_6, window_bounds = array<i64: 1, 8, 256>}]} {
    %c0 = arith.constant 0 : index
    %c0_0 = arith.constant 0 : index
    %c0_1 = arith.constant 0 : index
    %0 = vector.load %arg6[%c0, %c0_0, %c0_1] : memref<1x8x256xf32, #tpu.memory_space<vmem>>, vector<1x8x256xf32>
    %1 = vector.shape_cast %0 : vector<1x8x256xf32> to vector<8x256xf32>
    %c0_2 = arith.constant 0 : index
    %c0_3 = arith.constant 0 : index
    %2 = vector.load %arg5[%c0_2, %c0_3] : memref<2x256xi32, #tpu.memory_space<vmem>>, vector<2x256xi32>
    %3 = vector.extract_strided_slice %2 {offsets = [0, 0], sizes = [1, 256], strides = [1, 1]} : vector<2x256xi32> to vector<1x256xi32>
    %4 = vector.shape_cast %3 : vector<1x256xi32> to vector<1x256xi32>
    %5 = vector.broadcast %4 : vector<1x256xi32> to vector<8x256xi32>
    %6 = vector.extract_strided_slice %2 {offsets = [1, 0], sizes = [1, 256], strides = [1, 1]} : vector<2x256xi32> to vector<1x256xi32>
    %7 = vector.shape_cast %6 : vector<1x256xi32> to vector<1x256xi32>
    %8 = vector.broadcast %7 : vector<1x256xi32> to vector<8x256xi32>
    %cst = arith.constant 0.000000e+00 : f32
    %9 = vector.broadcast %cst : f32 to vector<8x256xf32>
    %c17_i32 = arith.constant 17 : i32
    %10 = tpu.dynamic_rotate %1 by %c17_i32 dim 1 : vector<8x256xf32>, i32 -> vector<8x256xf32>
    %c1_i32 = arith.constant 1 : i32
    %11 = vector.broadcast %c1_i32 : i32 to vector<8x256xi32>
    %12 = arith.cmpi sge, %5, %11 : vector<8x256xi32>
    %c1_i32_4 = arith.constant 1 : i32
    %13 = vector.broadcast %c1_i32_4 : i32 to vector<8x256xi32>
    %14 = arith.cmpi sge, %8, %13 : vector<8x256xi32>
    %15 = arith.andi %12, %14 : vector<8x256xi1>
    %cst_5 = arith.constant 0.000000e+00 : f32
    %16 = vector.broadcast %cst_5 : f32 to vector<8x256xf32>
    %17 = arith.select %15, %10, %16 : vector<8x256xi1>, vector<8x256xf32>
    %c0_6 = arith.constant 0 : index
    %c0_7 = arith.constant 0 : index
    %c0_8 = arith.constant 0 : index
    %18 = vector.load %arg1[%c0_6, %c0_7, %c0_8] : memref<9x8x8xf32, #tpu.memory_space<vmem>>, vector<1x8x8xf32>
    %19 = vector.shape_cast %18 : vector<1x8x8xf32> to vector<8x8xf32>
    %cst_9 = arith.constant dense<0.000000e+00> : vector<8x256xf32>
    %20 = tpu.matmul %19, %17, %cst_9 {dimension_numbers = #tpu.dot_dimension_numbers<[1], [0], [0], [1], [0, 0, 1, 1], [], []>} : vector<8x8xf32>, vector<8x256xf32>, vector<8x256xf32> -> vector<8x256xf32>
    %21 = arith.addf %9, %20 : vector<8x256xf32>
    %c16_i32 = arith.constant 16 : i32
    %22 = tpu.dynamic_rotate %1 by %c16_i32 dim 1 : vector<8x256xf32>, i32 -> vector<8x256xf32>
    %c1_i32_10 = arith.constant 1 : i32
    %23 = vector.broadcast %c1_i32_10 : i32 to vector<8x256xi32>
    %24 = arith.cmpi sge, %5, %23 : vector<8x256xi32>
    %cst_11 = arith.constant 0.000000e+00 : f32
    %25 = vector.broadcast %cst_11 : f32 to vector<8x256xf32>
    %26 = arith.select %24, %22, %25 : vector<8x256xi1>, vector<8x256xf32>
    %c1 = arith.constant 1 : index
    %c0_12 = arith.constant 0 : index
    %c0_13 = arith.constant 0 : index
    %27 = vector.load %arg1[%c1, %c0_12, %c0_13] : memref<9x8x8xf32, #tpu.memory_space<vmem>>, vector<1x8x8xf32>
    %28 = vector.shape_cast %27 : vector<1x8x8xf32> to vector<8x8xf32>
    %cst_14 = arith.constant dense<0.000000e+00> : vector<8x256xf32>
    %29 = tpu.matmul %28, %26, %cst_14 {dimension_numbers = #tpu.dot_dimension_numbers<[1], [0], [0], [1], [0, 0, 1, 1], [], []>} : vector<8x8xf32>, vector<8x256xf32>, vector<8x256xf32> -> vector<8x256xf32>
    %30 = arith.addf %21, %29 : vector<8x256xf32>
    %c15_i32 = arith.constant 15 : i32
    %31 = tpu.dynamic_rotate %1 by %c15_i32 dim 1 : vector<8x256xf32>, i32 -> vector<8x256xf32>
    %c1_i32_15 = arith.constant 1 : i32
    %32 = vector.broadcast %c1_i32_15 : i32 to vector<8x256xi32>
    %33 = arith.cmpi sge, %5, %32 : vector<8x256xi32>
    %c15_i32_16 = arith.constant 15 : i32
    %34 = vector.broadcast %c15_i32_16 : i32 to vector<8x256xi32>
    %35 = arith.cmpi slt, %8, %34 : vector<8x256xi32>
    %36 = arith.andi %33, %35 : vector<8x256xi1>
    %cst_17 = arith.constant 0.000000e+00 : f32
    %37 = vector.broadcast %cst_17 : f32 to vector<8x256xf32>
    %38 = arith.select %36, %31, %37 : vector<8x256xi1>, vector<8x256xf32>
    %c2 = arith.constant 2 : index
    %c0_18 = arith.constant 0 : index
    %c0_19 = arith.constant 0 : index
    %39 = vector.load %arg1[%c2, %c0_18, %c0_19] : memref<9x8x8xf32, #tpu.memory_space<vmem>>, vector<1x8x8xf32>
    %40 = vector.shape_cast %39 : vector<1x8x8xf32> to vector<8x8xf32>
    %cst_20 = arith.constant dense<0.000000e+00> : vector<8x256xf32>
    %41 = tpu.matmul %40, %38, %cst_20 {dimension_numbers = #tpu.dot_dimension_numbers<[1], [0], [0], [1], [0, 0, 1, 1], [], []>} : vector<8x8xf32>, vector<8x256xf32>, vector<8x256xf32> -> vector<8x256xf32>
    %42 = arith.addf %30, %41 : vector<8x256xf32>
    %c1_i32_21 = arith.constant 1 : i32
    %43 = tpu.dynamic_rotate %1 by %c1_i32_21 dim 1 : vector<8x256xf32>, i32 -> vector<8x256xf32>
    %c1_i32_22 = arith.constant 1 : i32
    %44 = vector.broadcast %c1_i32_22 : i32 to vector<8x256xi32>
    %45 = arith.cmpi sge, %8, %44 : vector<8x256xi32>
    %cst_23 = arith.constant 0.000000e+00 : f32
    %46 = vector.broadcast %cst_23 : f32 to vector<8x256xf32>
    %47 = arith.select %45, %43, %46 : vector<8x256xi1>, vector<8x256xf32>
    %c3 = arith.constant 3 : index
    %c0_24 = arith.constant 0 : index
    %c0_25 = arith.constant 0 : index
    %48 = vector.load %arg1[%c3, %c0_24, %c0_25] : memref<9x8x8xf32, #tpu.memory_space<vmem>>, vector<1x8x8xf32>
    %49 = vector.shape_cast %48 : vector<1x8x8xf32> to vector<8x8xf32>
    %cst_26 = arith.constant dense<0.000000e+00> : vector<8x256xf32>
    %50 = tpu.matmul %49, %47, %cst_26 {dimension_numbers = #tpu.dot_dimension_numbers<[1], [0], [0], [1], [0, 0, 1, 1], [], []>} : vector<8x8xf32>, vector<8x256xf32>, vector<8x256xf32> -> vector<8x256xf32>
    %51 = arith.addf %42, %50 : vector<8x256xf32>
    %c4 = arith.constant 4 : index
    %c0_27 = arith.constant 0 : index
    %c0_28 = arith.constant 0 : index
    %52 = vector.load %arg1[%c4, %c0_27, %c0_28] : memref<9x8x8xf32, #tpu.memory_space<vmem>>, vector<1x8x8xf32>
    %53 = vector.shape_cast %52 : vector<1x8x8xf32> to vector<8x8xf32>
    %cst_29 = arith.constant dense<0.000000e+00> : vector<8x256xf32>
    %54 = tpu.matmul %53, %1, %cst_29 {dimension_numbers = #tpu.dot_dimension_numbers<[1], [0], [0], [1], [0, 0, 1, 1], [], []>} : vector<8x8xf32>, vector<8x256xf32>, vector<8x256xf32> -> vector<8x256xf32>
    %55 = arith.addf %51, %54 : vector<8x256xf32>
    %c255_i32 = arith.constant 255 : i32
    %56 = tpu.dynamic_rotate %1 by %c255_i32 dim 1 : vector<8x256xf32>, i32 -> vector<8x256xf32>
    %c15_i32_30 = arith.constant 15 : i32
    %57 = vector.broadcast %c15_i32_30 : i32 to vector<8x256xi32>
    %58 = arith.cmpi slt, %8, %57 : vector<8x256xi32>
    %cst_31 = arith.constant 0.000000e+00 : f32
    %59 = vector.broadcast %cst_31 : f32 to vector<8x256xf32>
    %60 = arith.select %58, %56, %59 : vector<8x256xi1>, vector<8x256xf32>
    %c5 = arith.constant 5 : index
    %c0_32 = arith.constant 0 : index
    %c0_33 = arith.constant 0 : index
    %61 = vector.load %arg1[%c5, %c0_32, %c0_33] : memref<9x8x8xf32, #tpu.memory_space<vmem>>, vector<1x8x8xf32>
    %62 = vector.shape_cast %61 : vector<1x8x8xf32> to vector<8x8xf32>
    %cst_34 = arith.constant dense<0.000000e+00> : vector<8x256xf32>
    %63 = tpu.matmul %62, %60, %cst_34 {dimension_numbers = #tpu.dot_dimension_numbers<[1], [0], [0], [1], [0, 0, 1, 1], [], []>} : vector<8x8xf32>, vector<8x256xf32>, vector<8x256xf32> -> vector<8x256xf32>
    %64 = arith.addf %55, %63 : vector<8x256xf32>
    %c241_i32 = arith.constant 241 : i32
    %65 = tpu.dynamic_rotate %1 by %c241_i32 dim 1 : vector<8x256xf32>, i32 -> vector<8x256xf32>
    %c15_i32_35 = arith.constant 15 : i32
    %66 = vector.broadcast %c15_i32_35 : i32 to vector<8x256xi32>
    %67 = arith.cmpi slt, %5, %66 : vector<8x256xi32>
    %c1_i32_36 = arith.constant 1 : i32
    %68 = vector.broadcast %c1_i32_36 : i32 to vector<8x256xi32>
    %69 = arith.cmpi sge, %8, %68 : vector<8x256xi32>
    %70 = arith.andi %67, %69 : vector<8x256xi1>
    %cst_37 = arith.constant 0.000000e+00 : f32
    %71 = vector.broadcast %cst_37 : f32 to vector<8x256xf32>
    %72 = arith.select %70, %65, %71 : vector<8x256xi1>, vector<8x256xf32>
    %c6 = arith.constant 6 : index
    %c0_38 = arith.constant 0 : index
    %c0_39 = arith.constant 0 : index
    %73 = vector.load %arg1[%c6, %c0_38, %c0_39] : memref<9x8x8xf32, #tpu.memory_space<vmem>>, vector<1x8x8xf32>
    %74 = vector.shape_cast %73 : vector<1x8x8xf32> to vector<8x8xf32>
    %cst_40 = arith.constant dense<0.000000e+00> : vector<8x256xf32>
    %75 = tpu.matmul %74, %72, %cst_40 {dimension_numbers = #tpu.dot_dimension_numbers<[1], [0], [0], [1], [0, 0, 1, 1], [], []>} : vector<8x8xf32>, vector<8x256xf32>, vector<8x256xf32> -> vector<8x256xf32>
    %76 = arith.addf %64, %75 : vector<8x256xf32>
    %c240_i32 = arith.constant 240 : i32
    %77 = tpu.dynamic_rotate %1 by %c240_i32 dim 1 : vector<8x256xf32>, i32 -> vector<8x256xf32>
    %c15_i32_41 = arith.constant 15 : i32
    %78 = vector.broadcast %c15_i32_41 : i32 to vector<8x256xi32>
    %79 = arith.cmpi slt, %5, %78 : vector<8x256xi32>
    %cst_42 = arith.constant 0.000000e+00 : f32
    %80 = vector.broadcast %cst_42 : f32 to vector<8x256xf32>
    %81 = arith.select %79, %77, %80 : vector<8x256xi1>, vector<8x256xf32>
    %c7 = arith.constant 7 : index
    %c0_43 = arith.constant 0 : index
    %c0_44 = arith.constant 0 : index
    %82 = vector.load %arg1[%c7, %c0_43, %c0_44] : memref<9x8x8xf32, #tpu.memory_space<vmem>>, vector<1x8x8xf32>
    %83 = vector.shape_cast %82 : vector<1x8x8xf32> to vector<8x8xf32>
    %cst_45 = arith.constant dense<0.000000e+00> : vector<8x256xf32>
    %84 = tpu.matmul %83, %81, %cst_45 {dimension_numbers = #tpu.dot_dimension_numbers<[1], [0], [0], [1], [0, 0, 1, 1], [], []>} : vector<8x8xf32>, vector<8x256xf32>, vector<8x256xf32> -> vector<8x256xf32>
    %85 = arith.addf %76, %84 : vector<8x256xf32>
    %c239_i32 = arith.constant 239 : i32
    %86 = tpu.dynamic_rotate %1 by %c239_i32 dim 1 : vector<8x256xf32>, i32 -> vector<8x256xf32>
    %c15_i32_46 = arith.constant 15 : i32
    %87 = vector.broadcast %c15_i32_46 : i32 to vector<8x256xi32>
    %88 = arith.cmpi slt, %5, %87 : vector<8x256xi32>
    %c15_i32_47 = arith.constant 15 : i32
    %89 = vector.broadcast %c15_i32_47 : i32 to vector<8x256xi32>
    %90 = arith.cmpi slt, %8, %89 : vector<8x256xi32>
    %91 = arith.andi %88, %90 : vector<8x256xi1>
    %cst_48 = arith.constant 0.000000e+00 : f32
    %92 = vector.broadcast %cst_48 : f32 to vector<8x256xf32>
    %93 = arith.select %91, %86, %92 : vector<8x256xi1>, vector<8x256xf32>
    %c8 = arith.constant 8 : index
    %c0_49 = arith.constant 0 : index
    %c0_50 = arith.constant 0 : index
    %94 = vector.load %arg1[%c8, %c0_49, %c0_50] : memref<9x8x8xf32, #tpu.memory_space<vmem>>, vector<1x8x8xf32>
    %95 = vector.shape_cast %94 : vector<1x8x8xf32> to vector<8x8xf32>
    %cst_51 = arith.constant dense<0.000000e+00> : vector<8x256xf32>
    %96 = tpu.matmul %95, %93, %cst_51 {dimension_numbers = #tpu.dot_dimension_numbers<[1], [0], [0], [1], [0, 0, 1, 1], [], []>} : vector<8x8xf32>, vector<8x256xf32>, vector<8x256xf32> -> vector<8x256xf32>
    %97 = arith.addf %85, %96 : vector<8x256xf32>
    %c0_52 = arith.constant 0 : index
    %c0_53 = arith.constant 0 : index
    %98 = vector.load %arg2[%c0_52, %c0_53] : memref<8x1xf32, #tpu.memory_space<vmem>>, vector<8x1xf32>
    %99 = vector.broadcast %98 : vector<8x1xf32> to vector<8x256xf32>
    %100 = arith.addf %97, %99 : vector<8x256xf32>
    %cst_54 = arith.constant 5.000000e-01 : f32
    %101 = vector.broadcast %cst_54 : f32 to vector<8x256xf32>
    %102 = arith.mulf %101, %100 : vector<8x256xf32>
    %103 = math.tanh %102 : vector<8x256xf32>
    %cst_55 = arith.constant 5.000000e-01 : f32
    %104 = vector.broadcast %cst_55 : f32 to vector<8x256xf32>
    %105 = arith.mulf %104, %103 : vector<8x256xf32>
    %cst_56 = arith.constant 5.000000e-01 : f32
    %106 = vector.broadcast %cst_56 : f32 to vector<8x256xf32>
    %107 = arith.addf %105, %106 : vector<8x256xf32>
    %108 = arith.mulf %100, %107 : vector<8x256xf32>
    %c0_57 = arith.constant 0 : index
    %c0_58 = arith.constant 0 : index
    %109 = vector.load %arg3[%c0_57, %c0_58] : memref<8x8xf32, #tpu.memory_space<vmem>>, vector<8x8xf32>
    %cst_59 = arith.constant dense<0.000000e+00> : vector<8x256xf32>
    %110 = tpu.matmul %109, %108, %cst_59 {dimension_numbers = #tpu.dot_dimension_numbers<[1], [0], [0], [1], [0, 0, 1, 1], [], []>} : vector<8x8xf32>, vector<8x256xf32>, vector<8x256xf32> -> vector<8x256xf32>
    %c0_60 = arith.constant 0 : index
    %c0_61 = arith.constant 0 : index
    %111 = vector.load %arg4[%c0_60, %c0_61] : memref<8x1xf32, #tpu.memory_space<vmem>>, vector<8x1xf32>
    %112 = vector.broadcast %111 : vector<8x1xf32> to vector<8x256xf32>
    %113 = arith.addf %110, %112 : vector<8x256xf32>
    %cst_62 = arith.constant 5.000000e-01 : f32
    %114 = vector.broadcast %cst_62 : f32 to vector<8x256xf32>
    %115 = arith.mulf %114, %113 : vector<8x256xf32>
    %116 = math.tanh %115 : vector<8x256xf32>
    %cst_63 = arith.constant 5.000000e-01 : f32
    %117 = vector.broadcast %cst_63 : f32 to vector<8x256xf32>
    %118 = arith.mulf %117, %116 : vector<8x256xf32>
    %cst_64 = arith.constant 5.000000e-01 : f32
    %119 = vector.broadcast %cst_64 : f32 to vector<8x256xf32>
    %120 = arith.addf %118, %119 : vector<8x256xf32>
    %121 = arith.mulf %113, %120 : vector<8x256xf32>
    %c0_65 = arith.constant 0 : index
    %c0_66 = arith.constant 0 : index
    %c0_67 = arith.constant 0 : index
    %122 = vector.load %arg7[%c0_65, %c0_66, %c0_67] : memref<1x8x256xf32, #tpu.memory_space<vmem>>, vector<1x8x256xf32>
    %123 = vector.shape_cast %122 : vector<1x8x256xf32> to vector<8x256xf32>
    %124 = vector.shape_cast %121 : vector<8x256xf32> to vector<1x8x256xf32>
    tpu.vector_store %arg7[%c0_65, %c0_66, %c0_67], %124 {strides = array<i32>} : memref<1x8x256xf32, #tpu.memory_space<vmem>>, vector<1x8x256xf32>,
    return
  }
  func.func @transform_0(%arg0: i32) -> (i32, i32, i32) {
    %c0_i32 = arith.constant 0 : i32
    %c0_i32_0 = arith.constant 0 : i32
    %c0_i32_1 = arith.constant 0 : i32
    %c0_i32_2 = arith.constant 0 : i32
    return %c0_i32, %c0_i32_0, %c0_i32_1 : i32, i32, i32
  }
  func.func @transform_1(%arg0: i32) -> (i32, i32) {
    %c0_i32 = arith.constant 0 : i32
    %c0_i32_0 = arith.constant 0 : i32
    %c0_i32_1 = arith.constant 0 : i32
    return %c0_i32, %c0_i32_0 : i32, i32
  }
  func.func @transform_2(%arg0: i32) -> (i32, i32) {
    %c0_i32 = arith.constant 0 : i32
    %c0_i32_0 = arith.constant 0 : i32
    %c0_i32_1 = arith.constant 0 : i32
    return %c0_i32, %c0_i32_0 : i32, i32
  }
  func.func @transform_3(%arg0: i32) -> (i32, i32) {
    %c0_i32 = arith.constant 0 : i32
    %c0_i32_0 = arith.constant 0 : i32
    %c0_i32_1 = arith.constant 0 : i32
    return %c0_i32, %c0_i32_0 : i32, i32
  }
  func.func @transform_4(%arg0: i32) -> (i32, i32) {
    %c0_i32 = arith.constant 0 : i32
    %c0_i32_0 = arith.constant 0 : i32
    %c0_i32_1 = arith.constant 0 : i32
    return %c0_i32, %c0_i32_0 : i32, i32
  }
  func.func @transform_5(%arg0: i32) -> (i32, i32, i32) {
    %c0_i32 = arith.constant 0 : i32
    %c0_i32_0 = arith.constant 0 : i32
    %c0_i32_1 = arith.constant 0 : i32
    return %arg0, %c0_i32, %c0_i32_0 : i32, i32, i32
  }
  func.func @transform_6(%arg0: i32) -> (i32, i32, i32) {
    %c0_i32 = arith.constant 0 : i32
    %c0_i32_0 = arith.constant 0 : i32
    %c0_i32_1 = arith.constant 0 : i32
    return %arg0, %c0_i32, %c0_i32_0 : i32, i32, i32
  }
}

module attributes {stable_mosaic.version = 11 : i64} {
  func.func @_spp_cv5_kernel(%arg0: i32, %arg1: memref<4x8x8xf32, #tpu.memory_space<vmem>>, %arg2: memref<8x1xf32, #tpu.memory_space<vmem>>, %arg3: memref<2x256xi32, #tpu.memory_space<vmem>>, %arg4: memref<1x8x256xf32, #tpu.memory_space<vmem>>, %arg5: memref<1x8x256xf32, #tpu.memory_space<vmem>>) attributes {dimension_semantics = [#tpu.dimension_semantics<parallel>], iteration_bounds = array<i64: 2>, scalar_prefetch = 0 : i64, scratch_operands = 0 : i64, tpu.core_type = #tpu.core_type<tc>, window_params = [{pipeline_mode = #tpu.pipeline_mode<synchronous>, transform_indices = @transform_0, window_bounds = array<i64: 4, 8, 8>}, {pipeline_mode = #tpu.pipeline_mode<synchronous>, transform_indices = @transform_1, window_bounds = array<i64: 8, 1>}, {pipeline_mode = #tpu.pipeline_mode<synchronous>, transform_indices = @transform_2, window_bounds = array<i64: 2, 256>}, {transform_indices = @transform_3, window_bounds = array<i64: 1, 8, 256>}, {transform_indices = @transform_4, window_bounds = array<i64: 1, 8, 256>}]} {
    %c0 = arith.constant 0 : index
    %c0_0 = arith.constant 0 : index
    %c0_1 = arith.constant 0 : index
    %0 = vector.load %arg4[%c0, %c0_0, %c0_1] : memref<1x8x256xf32, #tpu.memory_space<vmem>>, vector<1x8x256xf32>
    %1 = vector.shape_cast %0 : vector<1x8x256xf32> to vector<8x256xf32>
    %c0_2 = arith.constant 0 : index
    %c0_3 = arith.constant 0 : index
    %2 = vector.load %arg3[%c0_2, %c0_3] : memref<2x256xi32, #tpu.memory_space<vmem>>, vector<2x256xi32>
    %3 = vector.extract_strided_slice %2 {offsets = [0, 0], sizes = [1, 256], strides = [1, 1]} : vector<2x256xi32> to vector<1x256xi32>
    %4 = vector.shape_cast %3 : vector<1x256xi32> to vector<1x256xi32>
    %5 = vector.broadcast %4 : vector<1x256xi32> to vector<8x256xi32>
    %6 = vector.extract_strided_slice %2 {offsets = [1, 0], sizes = [1, 256], strides = [1, 1]} : vector<2x256xi32> to vector<1x256xi32>
    %7 = vector.shape_cast %6 : vector<1x256xi32> to vector<1x256xi32>
    %8 = vector.broadcast %7 : vector<1x256xi32> to vector<8x256xi32>
    %c0_4 = arith.constant 0 : index
    %c0_5 = arith.constant 0 : index
    %c0_6 = arith.constant 0 : index
    %9 = vector.load %arg1[%c0_4, %c0_5, %c0_6] : memref<4x8x8xf32, #tpu.memory_space<vmem>>, vector<1x8x8xf32>
    %10 = vector.shape_cast %9 : vector<1x8x8xf32> to vector<8x8xf32>
    %cst = arith.constant dense<0.000000e+00> : vector<8x256xf32>
    %11 = tpu.matmul %10, %1, %cst {dimension_numbers = #tpu.dot_dimension_numbers<[1], [0], [0], [1], [0, 0, 1, 1], [], []>} : vector<8x8xf32>, vector<8x256xf32>, vector<8x256xf32> -> vector<8x256xf32>
    %c2_i32 = arith.constant 2 : i32
    %12 = tpu.dynamic_rotate %1 by %c2_i32 dim 1 : vector<8x256xf32>, i32 -> vector<8x256xf32>
    %c2_i32_7 = arith.constant 2 : i32
    %13 = vector.broadcast %c2_i32_7 : i32 to vector<8x256xi32>
    %14 = arith.cmpi sge, %8, %13 : vector<8x256xi32>
    %cst_8 = arith.constant 0xFF800000 : f32
    %15 = vector.broadcast %cst_8 : f32 to vector<8x256xf32>
    %16 = arith.select %14, %12, %15 : vector<8x256xi1>, vector<8x256xf32>
    %17 = arith.maximumf %1, %16 : vector<8x256xf32>
    %c1_i32 = arith.constant 1 : i32
    %18 = tpu.dynamic_rotate %1 by %c1_i32 dim 1 : vector<8x256xf32>, i32 -> vector<8x256xf32>
    %c1_i32_9 = arith.constant 1 : i32
    %19 = vector.broadcast %c1_i32_9 : i32 to vector<8x256xi32>
    %20 = arith.cmpi sge, %8, %19 : vector<8x256xi32>
    %cst_10 = arith.constant 0xFF800000 : f32
    %21 = vector.broadcast %cst_10 : f32 to vector<8x256xf32>
    %22 = arith.select %20, %18, %21 : vector<8x256xi1>, vector<8x256xf32>
    %23 = arith.maximumf %17, %22 : vector<8x256xf32>
    %c255_i32 = arith.constant 255 : i32
    %24 = tpu.dynamic_rotate %1 by %c255_i32 dim 1 : vector<8x256xf32>, i32 -> vector<8x256xf32>
    %c15_i32 = arith.constant 15 : i32
    %25 = vector.broadcast %c15_i32 : i32 to vector<8x256xi32>
    %26 = arith.cmpi slt, %8, %25 : vector<8x256xi32>
    %cst_11 = arith.constant 0xFF800000 : f32
    %27 = vector.broadcast %cst_11 : f32 to vector<8x256xf32>
    %28 = arith.select %26, %24, %27 : vector<8x256xi1>, vector<8x256xf32>
    %29 = arith.maximumf %23, %28 : vector<8x256xf32>
    %c254_i32 = arith.constant 254 : i32
    %30 = tpu.dynamic_rotate %1 by %c254_i32 dim 1 : vector<8x256xf32>, i32 -> vector<8x256xf32>
    %c14_i32 = arith.constant 14 : i32
    %31 = vector.broadcast %c14_i32 : i32 to vector<8x256xi32>
    %32 = arith.cmpi slt, %8, %31 : vector<8x256xi32>
    %cst_12 = arith.constant 0xFF800000 : f32
    %33 = vector.broadcast %cst_12 : f32 to vector<8x256xf32>
    %34 = arith.select %32, %30, %33 : vector<8x256xi1>, vector<8x256xf32>
    %35 = arith.maximumf %29, %34 : vector<8x256xf32>
    %c32_i32 = arith.constant 32 : i32
    %36 = tpu.dynamic_rotate %35 by %c32_i32 dim 1 : vector<8x256xf32>, i32 -> vector<8x256xf32>
    %c2_i32_13 = arith.constant 2 : i32
    %37 = vector.broadcast %c2_i32_13 : i32 to vector<8x256xi32>
    %38 = arith.cmpi sge, %5, %37 : vector<8x256xi32>
    %cst_14 = arith.constant 0xFF800000 : f32
    %39 = vector.broadcast %cst_14 : f32 to vector<8x256xf32>
    %40 = arith.select %38, %36, %39 : vector<8x256xi1>, vector<8x256xf32>
    %41 = arith.maximumf %35, %40 : vector<8x256xf32>
    %c16_i32 = arith.constant 16 : i32
    %42 = tpu.dynamic_rotate %35 by %c16_i32 dim 1 : vector<8x256xf32>, i32 -> vector<8x256xf32>
    %c1_i32_15 = arith.constant 1 : i32
    %43 = vector.broadcast %c1_i32_15 : i32 to vector<8x256xi32>
    %44 = arith.cmpi sge, %5, %43 : vector<8x256xi32>
    %cst_16 = arith.constant 0xFF800000 : f32
    %45 = vector.broadcast %cst_16 : f32 to vector<8x256xf32>
    %46 = arith.select %44, %42, %45 : vector<8x256xi1>, vector<8x256xf32>
    %47 = arith.maximumf %41, %46 : vector<8x256xf32>
    %c240_i32 = arith.constant 240 : i32
    %48 = tpu.dynamic_rotate %35 by %c240_i32 dim 1 : vector<8x256xf32>, i32 -> vector<8x256xf32>
    %c15_i32_17 = arith.constant 15 : i32
    %49 = vector.broadcast %c15_i32_17 : i32 to vector<8x256xi32>
    %50 = arith.cmpi slt, %5, %49 : vector<8x256xi32>
    %cst_18 = arith.constant 0xFF800000 : f32
    %51 = vector.broadcast %cst_18 : f32 to vector<8x256xf32>
    %52 = arith.select %50, %48, %51 : vector<8x256xi1>, vector<8x256xf32>
    %53 = arith.maximumf %47, %52 : vector<8x256xf32>
    %c224_i32 = arith.constant 224 : i32
    %54 = tpu.dynamic_rotate %35 by %c224_i32 dim 1 : vector<8x256xf32>, i32 -> vector<8x256xf32>
    %c14_i32_19 = arith.constant 14 : i32
    %55 = vector.broadcast %c14_i32_19 : i32 to vector<8x256xi32>
    %56 = arith.cmpi slt, %5, %55 : vector<8x256xi32>
    %cst_20 = arith.constant 0xFF800000 : f32
    %57 = vector.broadcast %cst_20 : f32 to vector<8x256xf32>
    %58 = arith.select %56, %54, %57 : vector<8x256xi1>, vector<8x256xf32>
    %59 = arith.maximumf %53, %58 : vector<8x256xf32>
    %c1 = arith.constant 1 : index
    %c0_21 = arith.constant 0 : index
    %c0_22 = arith.constant 0 : index
    %60 = vector.load %arg1[%c1, %c0_21, %c0_22] : memref<4x8x8xf32, #tpu.memory_space<vmem>>, vector<1x8x8xf32>
    %61 = vector.shape_cast %60 : vector<1x8x8xf32> to vector<8x8xf32>
    %cst_23 = arith.constant dense<0.000000e+00> : vector<8x256xf32>
    %62 = tpu.matmul %61, %59, %cst_23 {dimension_numbers = #tpu.dot_dimension_numbers<[1], [0], [0], [1], [0, 0, 1, 1], [], []>} : vector<8x8xf32>, vector<8x256xf32>, vector<8x256xf32> -> vector<8x256xf32>
    %63 = arith.addf %11, %62 : vector<8x256xf32>
    %c2_i32_24 = arith.constant 2 : i32
    %64 = tpu.dynamic_rotate %59 by %c2_i32_24 dim 1 : vector<8x256xf32>, i32 -> vector<8x256xf32>
    %c2_i32_25 = arith.constant 2 : i32
    %65 = vector.broadcast %c2_i32_25 : i32 to vector<8x256xi32>
    %66 = arith.cmpi sge, %8, %65 : vector<8x256xi32>
    %cst_26 = arith.constant 0xFF800000 : f32
    %67 = vector.broadcast %cst_26 : f32 to vector<8x256xf32>
    %68 = arith.select %66, %64, %67 : vector<8x256xi1>, vector<8x256xf32>
    %69 = arith.maximumf %59, %68 : vector<8x256xf32>
    %c1_i32_27 = arith.constant 1 : i32
    %70 = tpu.dynamic_rotate %59 by %c1_i32_27 dim 1 : vector<8x256xf32>, i32 -> vector<8x256xf32>
    %c1_i32_28 = arith.constant 1 : i32
    %71 = vector.broadcast %c1_i32_28 : i32 to vector<8x256xi32>
    %72 = arith.cmpi sge, %8, %71 : vector<8x256xi32>
    %cst_29 = arith.constant 0xFF800000 : f32
    %73 = vector.broadcast %cst_29 : f32 to vector<8x256xf32>
    %74 = arith.select %72, %70, %73 : vector<8x256xi1>, vector<8x256xf32>
    %75 = arith.maximumf %69, %74 : vector<8x256xf32>
    %c255_i32_30 = arith.constant 255 : i32
    %76 = tpu.dynamic_rotate %59 by %c255_i32_30 dim 1 : vector<8x256xf32>, i32 -> vector<8x256xf32>
    %c15_i32_31 = arith.constant 15 : i32
    %77 = vector.broadcast %c15_i32_31 : i32 to vector<8x256xi32>
    %78 = arith.cmpi slt, %8, %77 : vector<8x256xi32>
    %cst_32 = arith.constant 0xFF800000 : f32
    %79 = vector.broadcast %cst_32 : f32 to vector<8x256xf32>
    %80 = arith.select %78, %76, %79 : vector<8x256xi1>, vector<8x256xf32>
    %81 = arith.maximumf %75, %80 : vector<8x256xf32>
    %c254_i32_33 = arith.constant 254 : i32
    %82 = tpu.dynamic_rotate %59 by %c254_i32_33 dim 1 : vector<8x256xf32>, i32 -> vector<8x256xf32>
    %c14_i32_34 = arith.constant 14 : i32
    %83 = vector.broadcast %c14_i32_34 : i32 to vector<8x256xi32>
    %84 = arith.cmpi slt, %8, %83 : vector<8x256xi32>
    %cst_35 = arith.constant 0xFF800000 : f32
    %85 = vector.broadcast %cst_35 : f32 to vector<8x256xf32>
    %86 = arith.select %84, %82, %85 : vector<8x256xi1>, vector<8x256xf32>
    %87 = arith.maximumf %81, %86 : vector<8x256xf32>
    %c32_i32_36 = arith.constant 32 : i32
    %88 = tpu.dynamic_rotate %87 by %c32_i32_36 dim 1 : vector<8x256xf32>, i32 -> vector<8x256xf32>
    %c2_i32_37 = arith.constant 2 : i32
    %89 = vector.broadcast %c2_i32_37 : i32 to vector<8x256xi32>
    %90 = arith.cmpi sge, %5, %89 : vector<8x256xi32>
    %cst_38 = arith.constant 0xFF800000 : f32
    %91 = vector.broadcast %cst_38 : f32 to vector<8x256xf32>
    %92 = arith.select %90, %88, %91 : vector<8x256xi1>, vector<8x256xf32>
    %93 = arith.maximumf %87, %92 : vector<8x256xf32>
    %c16_i32_39 = arith.constant 16 : i32
    %94 = tpu.dynamic_rotate %87 by %c16_i32_39 dim 1 : vector<8x256xf32>, i32 -> vector<8x256xf32>
    %c1_i32_40 = arith.constant 1 : i32
    %95 = vector.broadcast %c1_i32_40 : i32 to vector<8x256xi32>
    %96 = arith.cmpi sge, %5, %95 : vector<8x256xi32>
    %cst_41 = arith.constant 0xFF800000 : f32
    %97 = vector.broadcast %cst_41 : f32 to vector<8x256xf32>
    %98 = arith.select %96, %94, %97 : vector<8x256xi1>, vector<8x256xf32>
    %99 = arith.maximumf %93, %98 : vector<8x256xf32>
    %c240_i32_42 = arith.constant 240 : i32
    %100 = tpu.dynamic_rotate %87 by %c240_i32_42 dim 1 : vector<8x256xf32>, i32 -> vector<8x256xf32>
    %c15_i32_43 = arith.constant 15 : i32
    %101 = vector.broadcast %c15_i32_43 : i32 to vector<8x256xi32>
    %102 = arith.cmpi slt, %5, %101 : vector<8x256xi32>
    %cst_44 = arith.constant 0xFF800000 : f32
    %103 = vector.broadcast %cst_44 : f32 to vector<8x256xf32>
    %104 = arith.select %102, %100, %103 : vector<8x256xi1>, vector<8x256xf32>
    %105 = arith.maximumf %99, %104 : vector<8x256xf32>
    %c224_i32_45 = arith.constant 224 : i32
    %106 = tpu.dynamic_rotate %87 by %c224_i32_45 dim 1 : vector<8x256xf32>, i32 -> vector<8x256xf32>
    %c14_i32_46 = arith.constant 14 : i32
    %107 = vector.broadcast %c14_i32_46 : i32 to vector<8x256xi32>
    %108 = arith.cmpi slt, %5, %107 : vector<8x256xi32>
    %cst_47 = arith.constant 0xFF800000 : f32
    %109 = vector.broadcast %cst_47 : f32 to vector<8x256xf32>
    %110 = arith.select %108, %106, %109 : vector<8x256xi1>, vector<8x256xf32>
    %111 = arith.maximumf %105, %110 : vector<8x256xf32>
    %c2 = arith.constant 2 : index
    %c0_48 = arith.constant 0 : index
    %c0_49 = arith.constant 0 : index
    %112 = vector.load %arg1[%c2, %c0_48, %c0_49] : memref<4x8x8xf32, #tpu.memory_space<vmem>>, vector<1x8x8xf32>
    %113 = vector.shape_cast %112 : vector<1x8x8xf32> to vector<8x8xf32>
    %cst_50 = arith.constant dense<0.000000e+00> : vector<8x256xf32>
    %114 = tpu.matmul %113, %111, %cst_50 {dimension_numbers = #tpu.dot_dimension_numbers<[1], [0], [0], [1], [0, 0, 1, 1], [], []>} : vector<8x8xf32>, vector<8x256xf32>, vector<8x256xf32> -> vector<8x256xf32>
    %115 = arith.addf %63, %114 : vector<8x256xf32>
    %c2_i32_51 = arith.constant 2 : i32
    %116 = tpu.dynamic_rotate %111 by %c2_i32_51 dim 1 : vector<8x256xf32>, i32 -> vector<8x256xf32>
    %c2_i32_52 = arith.constant 2 : i32
    %117 = vector.broadcast %c2_i32_52 : i32 to vector<8x256xi32>
    %118 = arith.cmpi sge, %8, %117 : vector<8x256xi32>
    %cst_53 = arith.constant 0xFF800000 : f32
    %119 = vector.broadcast %cst_53 : f32 to vector<8x256xf32>
    %120 = arith.select %118, %116, %119 : vector<8x256xi1>, vector<8x256xf32>
    %121 = arith.maximumf %111, %120 : vector<8x256xf32>
    %c1_i32_54 = arith.constant 1 : i32
    %122 = tpu.dynamic_rotate %111 by %c1_i32_54 dim 1 : vector<8x256xf32>, i32 -> vector<8x256xf32>
    %c1_i32_55 = arith.constant 1 : i32
    %123 = vector.broadcast %c1_i32_55 : i32 to vector<8x256xi32>
    %124 = arith.cmpi sge, %8, %123 : vector<8x256xi32>
    %cst_56 = arith.constant 0xFF800000 : f32
    %125 = vector.broadcast %cst_56 : f32 to vector<8x256xf32>
    %126 = arith.select %124, %122, %125 : vector<8x256xi1>, vector<8x256xf32>
    %127 = arith.maximumf %121, %126 : vector<8x256xf32>
    %c255_i32_57 = arith.constant 255 : i32
    %128 = tpu.dynamic_rotate %111 by %c255_i32_57 dim 1 : vector<8x256xf32>, i32 -> vector<8x256xf32>
    %c15_i32_58 = arith.constant 15 : i32
    %129 = vector.broadcast %c15_i32_58 : i32 to vector<8x256xi32>
    %130 = arith.cmpi slt, %8, %129 : vector<8x256xi32>
    %cst_59 = arith.constant 0xFF800000 : f32
    %131 = vector.broadcast %cst_59 : f32 to vector<8x256xf32>
    %132 = arith.select %130, %128, %131 : vector<8x256xi1>, vector<8x256xf32>
    %133 = arith.maximumf %127, %132 : vector<8x256xf32>
    %c254_i32_60 = arith.constant 254 : i32
    %134 = tpu.dynamic_rotate %111 by %c254_i32_60 dim 1 : vector<8x256xf32>, i32 -> vector<8x256xf32>
    %c14_i32_61 = arith.constant 14 : i32
    %135 = vector.broadcast %c14_i32_61 : i32 to vector<8x256xi32>
    %136 = arith.cmpi slt, %8, %135 : vector<8x256xi32>
    %cst_62 = arith.constant 0xFF800000 : f32
    %137 = vector.broadcast %cst_62 : f32 to vector<8x256xf32>
    %138 = arith.select %136, %134, %137 : vector<8x256xi1>, vector<8x256xf32>
    %139 = arith.maximumf %133, %138 : vector<8x256xf32>
    %c32_i32_63 = arith.constant 32 : i32
    %140 = tpu.dynamic_rotate %139 by %c32_i32_63 dim 1 : vector<8x256xf32>, i32 -> vector<8x256xf32>
    %c2_i32_64 = arith.constant 2 : i32
    %141 = vector.broadcast %c2_i32_64 : i32 to vector<8x256xi32>
    %142 = arith.cmpi sge, %5, %141 : vector<8x256xi32>
    %cst_65 = arith.constant 0xFF800000 : f32
    %143 = vector.broadcast %cst_65 : f32 to vector<8x256xf32>
    %144 = arith.select %142, %140, %143 : vector<8x256xi1>, vector<8x256xf32>
    %145 = arith.maximumf %139, %144 : vector<8x256xf32>
    %c16_i32_66 = arith.constant 16 : i32
    %146 = tpu.dynamic_rotate %139 by %c16_i32_66 dim 1 : vector<8x256xf32>, i32 -> vector<8x256xf32>
    %c1_i32_67 = arith.constant 1 : i32
    %147 = vector.broadcast %c1_i32_67 : i32 to vector<8x256xi32>
    %148 = arith.cmpi sge, %5, %147 : vector<8x256xi32>
    %cst_68 = arith.constant 0xFF800000 : f32
    %149 = vector.broadcast %cst_68 : f32 to vector<8x256xf32>
    %150 = arith.select %148, %146, %149 : vector<8x256xi1>, vector<8x256xf32>
    %151 = arith.maximumf %145, %150 : vector<8x256xf32>
    %c240_i32_69 = arith.constant 240 : i32
    %152 = tpu.dynamic_rotate %139 by %c240_i32_69 dim 1 : vector<8x256xf32>, i32 -> vector<8x256xf32>
    %c15_i32_70 = arith.constant 15 : i32
    %153 = vector.broadcast %c15_i32_70 : i32 to vector<8x256xi32>
    %154 = arith.cmpi slt, %5, %153 : vector<8x256xi32>
    %cst_71 = arith.constant 0xFF800000 : f32
    %155 = vector.broadcast %cst_71 : f32 to vector<8x256xf32>
    %156 = arith.select %154, %152, %155 : vector<8x256xi1>, vector<8x256xf32>
    %157 = arith.maximumf %151, %156 : vector<8x256xf32>
    %c224_i32_72 = arith.constant 224 : i32
    %158 = tpu.dynamic_rotate %139 by %c224_i32_72 dim 1 : vector<8x256xf32>, i32 -> vector<8x256xf32>
    %c14_i32_73 = arith.constant 14 : i32
    %159 = vector.broadcast %c14_i32_73 : i32 to vector<8x256xi32>
    %160 = arith.cmpi slt, %5, %159 : vector<8x256xi32>
    %cst_74 = arith.constant 0xFF800000 : f32
    %161 = vector.broadcast %cst_74 : f32 to vector<8x256xf32>
    %162 = arith.select %160, %158, %161 : vector<8x256xi1>, vector<8x256xf32>
    %163 = arith.maximumf %157, %162 : vector<8x256xf32>
    %c3 = arith.constant 3 : index
    %c0_75 = arith.constant 0 : index
    %c0_76 = arith.constant 0 : index
    %164 = vector.load %arg1[%c3, %c0_75, %c0_76] : memref<4x8x8xf32, #tpu.memory_space<vmem>>, vector<1x8x8xf32>
    %165 = vector.shape_cast %164 : vector<1x8x8xf32> to vector<8x8xf32>
    %cst_77 = arith.constant dense<0.000000e+00> : vector<8x256xf32>
    %166 = tpu.matmul %165, %163, %cst_77 {dimension_numbers = #tpu.dot_dimension_numbers<[1], [0], [0], [1], [0, 0, 1, 1], [], []>} : vector<8x8xf32>, vector<8x256xf32>, vector<8x256xf32> -> vector<8x256xf32>
    %167 = arith.addf %115, %166 : vector<8x256xf32>
    %c0_78 = arith.constant 0 : index
    %c0_79 = arith.constant 0 : index
    %168 = vector.load %arg2[%c0_78, %c0_79] : memref<8x1xf32, #tpu.memory_space<vmem>>, vector<8x1xf32>
    %169 = vector.broadcast %168 : vector<8x1xf32> to vector<8x256xf32>
    %170 = arith.addf %167, %169 : vector<8x256xf32>
    %cst_80 = arith.constant 5.000000e-01 : f32
    %171 = vector.broadcast %cst_80 : f32 to vector<8x256xf32>
    %172 = arith.mulf %171, %170 : vector<8x256xf32>
    %173 = math.tanh %172 : vector<8x256xf32>
    %cst_81 = arith.constant 5.000000e-01 : f32
    %174 = vector.broadcast %cst_81 : f32 to vector<8x256xf32>
    %175 = arith.mulf %174, %173 : vector<8x256xf32>
    %cst_82 = arith.constant 5.000000e-01 : f32
    %176 = vector.broadcast %cst_82 : f32 to vector<8x256xf32>
    %177 = arith.addf %175, %176 : vector<8x256xf32>
    %178 = arith.mulf %170, %177 : vector<8x256xf32>
    %c0_83 = arith.constant 0 : index
    %c0_84 = arith.constant 0 : index
    %c0_85 = arith.constant 0 : index
    %179 = vector.load %arg5[%c0_83, %c0_84, %c0_85] : memref<1x8x256xf32, #tpu.memory_space<vmem>>, vector<1x8x256xf32>
    %180 = vector.shape_cast %179 : vector<1x8x256xf32> to vector<8x256xf32>
    %181 = vector.shape_cast %178 : vector<8x256xf32> to vector<1x8x256xf32>
    tpu.vector_store %arg5[%c0_83, %c0_84, %c0_85], %181 {strides = array<i32>} : memref<1x8x256xf32, #tpu.memory_space<vmem>>, vector<1x8x256xf32>,
    return
  }
  func.func @transform_0(%arg0: i32) -> (i32, i32, i32) {
    %c0_i32 = arith.constant 0 : i32
    %c0_i32_0 = arith.constant 0 : i32
    %c0_i32_1 = arith.constant 0 : i32
    %c0_i32_2 = arith.constant 0 : i32
    return %c0_i32, %c0_i32_0, %c0_i32_1 : i32, i32, i32
  }
  func.func @transform_1(%arg0: i32) -> (i32, i32) {
    %c0_i32 = arith.constant 0 : i32
    %c0_i32_0 = arith.constant 0 : i32
    %c0_i32_1 = arith.constant 0 : i32
    return %c0_i32, %c0_i32_0 : i32, i32
  }
  func.func @transform_2(%arg0: i32) -> (i32, i32) {
    %c0_i32 = arith.constant 0 : i32
    %c0_i32_0 = arith.constant 0 : i32
    %c0_i32_1 = arith.constant 0 : i32
    return %c0_i32, %c0_i32_0 : i32, i32
  }
  func.func @transform_3(%arg0: i32) -> (i32, i32, i32) {
    %c0_i32 = arith.constant 0 : i32
    %c0_i32_0 = arith.constant 0 : i32
    %c0_i32_1 = arith.constant 0 : i32
    return %arg0, %c0_i32, %c0_i32_0 : i32, i32, i32
  }
  func.func @transform_4(%arg0: i32) -> (i32, i32, i32) {
    %c0_i32 = arith.constant 0 : i32
    %c0_i32_0 = arith.constant 0 : i32
    %c0_i32_1 = arith.constant 0 : i32
    return %arg0, %c0_i32, %c0_i32_0 : i32, i32, i32
  }
}

module attributes {stable_mosaic.version = 11 : i64} {
  func.func @_conv3x3_cat_pw_kernel(%arg0: i32, %arg1: memref<9x8x8xf32, #tpu.memory_space<vmem>>, %arg2: memref<8x1xf32, #tpu.memory_space<vmem>>, %arg3: memref<8x8xf32, #tpu.memory_space<vmem>>, %arg4: memref<8x8xf32, #tpu.memory_space<vmem>>, %arg5: memref<8x1xf32, #tpu.memory_space<vmem>>, %arg6: memref<2x256xi32, #tpu.memory_space<vmem>>, %arg7: memref<1x8x256xf32, #tpu.memory_space<vmem>>, %arg8: memref<1x8x256xf32, #tpu.memory_space<vmem>>, %arg9: memref<1x8x256xf32, #tpu.memory_space<vmem>>) attributes {dimension_semantics = [#tpu.dimension_semantics<parallel>], iteration_bounds = array<i64: 2>, scalar_prefetch = 0 : i64, scratch_operands = 0 : i64, tpu.core_type = #tpu.core_type<tc>, window_params = [{pipeline_mode = #tpu.pipeline_mode<synchronous>, transform_indices = @transform_0, window_bounds = array<i64: 9, 8, 8>}, {pipeline_mode = #tpu.pipeline_mode<synchronous>, transform_indices = @transform_1, window_bounds = array<i64: 8, 1>}, {pipeline_mode = #tpu.pipeline_mode<synchronous>, transform_indices = @transform_2, window_bounds = array<i64: 8, 8>}, {pipeline_mode = #tpu.pipeline_mode<synchronous>, transform_indices = @transform_3, window_bounds = array<i64: 8, 8>}, {pipeline_mode = #tpu.pipeline_mode<synchronous>, transform_indices = @transform_4, window_bounds = array<i64: 8, 1>}, {pipeline_mode = #tpu.pipeline_mode<synchronous>, transform_indices = @transform_5, window_bounds = array<i64: 2, 256>}, {transform_indices = @transform_6, window_bounds = array<i64: 1, 8, 256>}, {transform_indices = @transform_7, window_bounds = array<i64: 1, 8, 256>}, {transform_indices = @transform_8, window_bounds = array<i64: 1, 8, 256>}]} {
    %c0 = arith.constant 0 : index
    %c0_0 = arith.constant 0 : index
    %c0_1 = arith.constant 0 : index
    %0 = vector.load %arg7[%c0, %c0_0, %c0_1] : memref<1x8x256xf32, #tpu.memory_space<vmem>>, vector<1x8x256xf32>
    %1 = vector.shape_cast %0 : vector<1x8x256xf32> to vector<8x256xf32>
    %c0_2 = arith.constant 0 : index
    %c0_3 = arith.constant 0 : index
    %2 = vector.load %arg6[%c0_2, %c0_3] : memref<2x256xi32, #tpu.memory_space<vmem>>, vector<2x256xi32>
    %3 = vector.extract_strided_slice %2 {offsets = [0, 0], sizes = [1, 256], strides = [1, 1]} : vector<2x256xi32> to vector<1x256xi32>
    %4 = vector.shape_cast %3 : vector<1x256xi32> to vector<1x256xi32>
    %5 = vector.broadcast %4 : vector<1x256xi32> to vector<8x256xi32>
    %6 = vector.extract_strided_slice %2 {offsets = [1, 0], sizes = [1, 256], strides = [1, 1]} : vector<2x256xi32> to vector<1x256xi32>
    %7 = vector.shape_cast %6 : vector<1x256xi32> to vector<1x256xi32>
    %8 = vector.broadcast %7 : vector<1x256xi32> to vector<8x256xi32>
    %cst = arith.constant 0.000000e+00 : f32
    %9 = vector.broadcast %cst : f32 to vector<8x256xf32>
    %c17_i32 = arith.constant 17 : i32
    %10 = tpu.dynamic_rotate %1 by %c17_i32 dim 1 : vector<8x256xf32>, i32 -> vector<8x256xf32>
    %c1_i32 = arith.constant 1 : i32
    %11 = vector.broadcast %c1_i32 : i32 to vector<8x256xi32>
    %12 = arith.cmpi sge, %5, %11 : vector<8x256xi32>
    %c1_i32_4 = arith.constant 1 : i32
    %13 = vector.broadcast %c1_i32_4 : i32 to vector<8x256xi32>
    %14 = arith.cmpi sge, %8, %13 : vector<8x256xi32>
    %15 = arith.andi %12, %14 : vector<8x256xi1>
    %cst_5 = arith.constant 0.000000e+00 : f32
    %16 = vector.broadcast %cst_5 : f32 to vector<8x256xf32>
    %17 = arith.select %15, %10, %16 : vector<8x256xi1>, vector<8x256xf32>
    %c0_6 = arith.constant 0 : index
    %c0_7 = arith.constant 0 : index
    %c0_8 = arith.constant 0 : index
    %18 = vector.load %arg1[%c0_6, %c0_7, %c0_8] : memref<9x8x8xf32, #tpu.memory_space<vmem>>, vector<1x8x8xf32>
    %19 = vector.shape_cast %18 : vector<1x8x8xf32> to vector<8x8xf32>
    %cst_9 = arith.constant dense<0.000000e+00> : vector<8x256xf32>
    %20 = tpu.matmul %19, %17, %cst_9 {dimension_numbers = #tpu.dot_dimension_numbers<[1], [0], [0], [1], [0, 0, 1, 1], [], []>} : vector<8x8xf32>, vector<8x256xf32>, vector<8x256xf32> -> vector<8x256xf32>
    %21 = arith.addf %9, %20 : vector<8x256xf32>
    %c16_i32 = arith.constant 16 : i32
    %22 = tpu.dynamic_rotate %1 by %c16_i32 dim 1 : vector<8x256xf32>, i32 -> vector<8x256xf32>
    %c1_i32_10 = arith.constant 1 : i32
    %23 = vector.broadcast %c1_i32_10 : i32 to vector<8x256xi32>
    %24 = arith.cmpi sge, %5, %23 : vector<8x256xi32>
    %cst_11 = arith.constant 0.000000e+00 : f32
    %25 = vector.broadcast %cst_11 : f32 to vector<8x256xf32>
    %26 = arith.select %24, %22, %25 : vector<8x256xi1>, vector<8x256xf32>
    %c1 = arith.constant 1 : index
    %c0_12 = arith.constant 0 : index
    %c0_13 = arith.constant 0 : index
    %27 = vector.load %arg1[%c1, %c0_12, %c0_13] : memref<9x8x8xf32, #tpu.memory_space<vmem>>, vector<1x8x8xf32>
    %28 = vector.shape_cast %27 : vector<1x8x8xf32> to vector<8x8xf32>
    %cst_14 = arith.constant dense<0.000000e+00> : vector<8x256xf32>
    %29 = tpu.matmul %28, %26, %cst_14 {dimension_numbers = #tpu.dot_dimension_numbers<[1], [0], [0], [1], [0, 0, 1, 1], [], []>} : vector<8x8xf32>, vector<8x256xf32>, vector<8x256xf32> -> vector<8x256xf32>
    %30 = arith.addf %21, %29 : vector<8x256xf32>
    %c15_i32 = arith.constant 15 : i32
    %31 = tpu.dynamic_rotate %1 by %c15_i32 dim 1 : vector<8x256xf32>, i32 -> vector<8x256xf32>
    %c1_i32_15 = arith.constant 1 : i32
    %32 = vector.broadcast %c1_i32_15 : i32 to vector<8x256xi32>
    %33 = arith.cmpi sge, %5, %32 : vector<8x256xi32>
    %c15_i32_16 = arith.constant 15 : i32
    %34 = vector.broadcast %c15_i32_16 : i32 to vector<8x256xi32>
    %35 = arith.cmpi slt, %8, %34 : vector<8x256xi32>
    %36 = arith.andi %33, %35 : vector<8x256xi1>
    %cst_17 = arith.constant 0.000000e+00 : f32
    %37 = vector.broadcast %cst_17 : f32 to vector<8x256xf32>
    %38 = arith.select %36, %31, %37 : vector<8x256xi1>, vector<8x256xf32>
    %c2 = arith.constant 2 : index
    %c0_18 = arith.constant 0 : index
    %c0_19 = arith.constant 0 : index
    %39 = vector.load %arg1[%c2, %c0_18, %c0_19] : memref<9x8x8xf32, #tpu.memory_space<vmem>>, vector<1x8x8xf32>
    %40 = vector.shape_cast %39 : vector<1x8x8xf32> to vector<8x8xf32>
    %cst_20 = arith.constant dense<0.000000e+00> : vector<8x256xf32>
    %41 = tpu.matmul %40, %38, %cst_20 {dimension_numbers = #tpu.dot_dimension_numbers<[1], [0], [0], [1], [0, 0, 1, 1], [], []>} : vector<8x8xf32>, vector<8x256xf32>, vector<8x256xf32> -> vector<8x256xf32>
    %42 = arith.addf %30, %41 : vector<8x256xf32>
    %c1_i32_21 = arith.constant 1 : i32
    %43 = tpu.dynamic_rotate %1 by %c1_i32_21 dim 1 : vector<8x256xf32>, i32 -> vector<8x256xf32>
    %c1_i32_22 = arith.constant 1 : i32
    %44 = vector.broadcast %c1_i32_22 : i32 to vector<8x256xi32>
    %45 = arith.cmpi sge, %8, %44 : vector<8x256xi32>
    %cst_23 = arith.constant 0.000000e+00 : f32
    %46 = vector.broadcast %cst_23 : f32 to vector<8x256xf32>
    %47 = arith.select %45, %43, %46 : vector<8x256xi1>, vector<8x256xf32>
    %c3 = arith.constant 3 : index
    %c0_24 = arith.constant 0 : index
    %c0_25 = arith.constant 0 : index
    %48 = vector.load %arg1[%c3, %c0_24, %c0_25] : memref<9x8x8xf32, #tpu.memory_space<vmem>>, vector<1x8x8xf32>
    %49 = vector.shape_cast %48 : vector<1x8x8xf32> to vector<8x8xf32>
    %cst_26 = arith.constant dense<0.000000e+00> : vector<8x256xf32>
    %50 = tpu.matmul %49, %47, %cst_26 {dimension_numbers = #tpu.dot_dimension_numbers<[1], [0], [0], [1], [0, 0, 1, 1], [], []>} : vector<8x8xf32>, vector<8x256xf32>, vector<8x256xf32> -> vector<8x256xf32>
    %51 = arith.addf %42, %50 : vector<8x256xf32>
    %c4 = arith.constant 4 : index
    %c0_27 = arith.constant 0 : index
    %c0_28 = arith.constant 0 : index
    %52 = vector.load %arg1[%c4, %c0_27, %c0_28] : memref<9x8x8xf32, #tpu.memory_space<vmem>>, vector<1x8x8xf32>
    %53 = vector.shape_cast %52 : vector<1x8x8xf32> to vector<8x8xf32>
    %cst_29 = arith.constant dense<0.000000e+00> : vector<8x256xf32>
    %54 = tpu.matmul %53, %1, %cst_29 {dimension_numbers = #tpu.dot_dimension_numbers<[1], [0], [0], [1], [0, 0, 1, 1], [], []>} : vector<8x8xf32>, vector<8x256xf32>, vector<8x256xf32> -> vector<8x256xf32>
    %55 = arith.addf %51, %54 : vector<8x256xf32>
    %c255_i32 = arith.constant 255 : i32
    %56 = tpu.dynamic_rotate %1 by %c255_i32 dim 1 : vector<8x256xf32>, i32 -> vector<8x256xf32>
    %c15_i32_30 = arith.constant 15 : i32
    %57 = vector.broadcast %c15_i32_30 : i32 to vector<8x256xi32>
    %58 = arith.cmpi slt, %8, %57 : vector<8x256xi32>
    %cst_31 = arith.constant 0.000000e+00 : f32
    %59 = vector.broadcast %cst_31 : f32 to vector<8x256xf32>
    %60 = arith.select %58, %56, %59 : vector<8x256xi1>, vector<8x256xf32>
    %c5 = arith.constant 5 : index
    %c0_32 = arith.constant 0 : index
    %c0_33 = arith.constant 0 : index
    %61 = vector.load %arg1[%c5, %c0_32, %c0_33] : memref<9x8x8xf32, #tpu.memory_space<vmem>>, vector<1x8x8xf32>
    %62 = vector.shape_cast %61 : vector<1x8x8xf32> to vector<8x8xf32>
    %cst_34 = arith.constant dense<0.000000e+00> : vector<8x256xf32>
    %63 = tpu.matmul %62, %60, %cst_34 {dimension_numbers = #tpu.dot_dimension_numbers<[1], [0], [0], [1], [0, 0, 1, 1], [], []>} : vector<8x8xf32>, vector<8x256xf32>, vector<8x256xf32> -> vector<8x256xf32>
    %64 = arith.addf %55, %63 : vector<8x256xf32>
    %c241_i32 = arith.constant 241 : i32
    %65 = tpu.dynamic_rotate %1 by %c241_i32 dim 1 : vector<8x256xf32>, i32 -> vector<8x256xf32>
    %c15_i32_35 = arith.constant 15 : i32
    %66 = vector.broadcast %c15_i32_35 : i32 to vector<8x256xi32>
    %67 = arith.cmpi slt, %5, %66 : vector<8x256xi32>
    %c1_i32_36 = arith.constant 1 : i32
    %68 = vector.broadcast %c1_i32_36 : i32 to vector<8x256xi32>
    %69 = arith.cmpi sge, %8, %68 : vector<8x256xi32>
    %70 = arith.andi %67, %69 : vector<8x256xi1>
    %cst_37 = arith.constant 0.000000e+00 : f32
    %71 = vector.broadcast %cst_37 : f32 to vector<8x256xf32>
    %72 = arith.select %70, %65, %71 : vector<8x256xi1>, vector<8x256xf32>
    %c6 = arith.constant 6 : index
    %c0_38 = arith.constant 0 : index
    %c0_39 = arith.constant 0 : index
    %73 = vector.load %arg1[%c6, %c0_38, %c0_39] : memref<9x8x8xf32, #tpu.memory_space<vmem>>, vector<1x8x8xf32>
    %74 = vector.shape_cast %73 : vector<1x8x8xf32> to vector<8x8xf32>
    %cst_40 = arith.constant dense<0.000000e+00> : vector<8x256xf32>
    %75 = tpu.matmul %74, %72, %cst_40 {dimension_numbers = #tpu.dot_dimension_numbers<[1], [0], [0], [1], [0, 0, 1, 1], [], []>} : vector<8x8xf32>, vector<8x256xf32>, vector<8x256xf32> -> vector<8x256xf32>
    %76 = arith.addf %64, %75 : vector<8x256xf32>
    %c240_i32 = arith.constant 240 : i32
    %77 = tpu.dynamic_rotate %1 by %c240_i32 dim 1 : vector<8x256xf32>, i32 -> vector<8x256xf32>
    %c15_i32_41 = arith.constant 15 : i32
    %78 = vector.broadcast %c15_i32_41 : i32 to vector<8x256xi32>
    %79 = arith.cmpi slt, %5, %78 : vector<8x256xi32>
    %cst_42 = arith.constant 0.000000e+00 : f32
    %80 = vector.broadcast %cst_42 : f32 to vector<8x256xf32>
    %81 = arith.select %79, %77, %80 : vector<8x256xi1>, vector<8x256xf32>
    %c7 = arith.constant 7 : index
    %c0_43 = arith.constant 0 : index
    %c0_44 = arith.constant 0 : index
    %82 = vector.load %arg1[%c7, %c0_43, %c0_44] : memref<9x8x8xf32, #tpu.memory_space<vmem>>, vector<1x8x8xf32>
    %83 = vector.shape_cast %82 : vector<1x8x8xf32> to vector<8x8xf32>
    %cst_45 = arith.constant dense<0.000000e+00> : vector<8x256xf32>
    %84 = tpu.matmul %83, %81, %cst_45 {dimension_numbers = #tpu.dot_dimension_numbers<[1], [0], [0], [1], [0, 0, 1, 1], [], []>} : vector<8x8xf32>, vector<8x256xf32>, vector<8x256xf32> -> vector<8x256xf32>
    %85 = arith.addf %76, %84 : vector<8x256xf32>
    %c239_i32 = arith.constant 239 : i32
    %86 = tpu.dynamic_rotate %1 by %c239_i32 dim 1 : vector<8x256xf32>, i32 -> vector<8x256xf32>
    %c15_i32_46 = arith.constant 15 : i32
    %87 = vector.broadcast %c15_i32_46 : i32 to vector<8x256xi32>
    %88 = arith.cmpi slt, %5, %87 : vector<8x256xi32>
    %c15_i32_47 = arith.constant 15 : i32
    %89 = vector.broadcast %c15_i32_47 : i32 to vector<8x256xi32>
    %90 = arith.cmpi slt, %8, %89 : vector<8x256xi32>
    %91 = arith.andi %88, %90 : vector<8x256xi1>
    %cst_48 = arith.constant 0.000000e+00 : f32
    %92 = vector.broadcast %cst_48 : f32 to vector<8x256xf32>
    %93 = arith.select %91, %86, %92 : vector<8x256xi1>, vector<8x256xf32>
    %c8 = arith.constant 8 : index
    %c0_49 = arith.constant 0 : index
    %c0_50 = arith.constant 0 : index
    %94 = vector.load %arg1[%c8, %c0_49, %c0_50] : memref<9x8x8xf32, #tpu.memory_space<vmem>>, vector<1x8x8xf32>
    %95 = vector.shape_cast %94 : vector<1x8x8xf32> to vector<8x8xf32>
    %cst_51 = arith.constant dense<0.000000e+00> : vector<8x256xf32>
    %96 = tpu.matmul %95, %93, %cst_51 {dimension_numbers = #tpu.dot_dimension_numbers<[1], [0], [0], [1], [0, 0, 1, 1], [], []>} : vector<8x8xf32>, vector<8x256xf32>, vector<8x256xf32> -> vector<8x256xf32>
    %97 = arith.addf %85, %96 : vector<8x256xf32>
    %c0_52 = arith.constant 0 : index
    %c0_53 = arith.constant 0 : index
    %98 = vector.load %arg2[%c0_52, %c0_53] : memref<8x1xf32, #tpu.memory_space<vmem>>, vector<8x1xf32>
    %99 = vector.broadcast %98 : vector<8x1xf32> to vector<8x256xf32>
    %100 = arith.addf %97, %99 : vector<8x256xf32>
    %cst_54 = arith.constant 5.000000e-01 : f32
    %101 = vector.broadcast %cst_54 : f32 to vector<8x256xf32>
    %102 = arith.mulf %101, %100 : vector<8x256xf32>
    %103 = math.tanh %102 : vector<8x256xf32>
    %cst_55 = arith.constant 5.000000e-01 : f32
    %104 = vector.broadcast %cst_55 : f32 to vector<8x256xf32>
    %105 = arith.mulf %104, %103 : vector<8x256xf32>
    %cst_56 = arith.constant 5.000000e-01 : f32
    %106 = vector.broadcast %cst_56 : f32 to vector<8x256xf32>
    %107 = arith.addf %105, %106 : vector<8x256xf32>
    %108 = arith.mulf %100, %107 : vector<8x256xf32>
    %c0_57 = arith.constant 0 : index
    %c0_58 = arith.constant 0 : index
    %109 = vector.load %arg3[%c0_57, %c0_58] : memref<8x8xf32, #tpu.memory_space<vmem>>, vector<8x8xf32>
    %cst_59 = arith.constant dense<0.000000e+00> : vector<8x256xf32>
    %110 = tpu.matmul %109, %108, %cst_59 {dimension_numbers = #tpu.dot_dimension_numbers<[1], [0], [0], [1], [0, 0, 1, 1], [], []>} : vector<8x8xf32>, vector<8x256xf32>, vector<8x256xf32> -> vector<8x256xf32>
    %c0_60 = arith.constant 0 : index
    %c0_61 = arith.constant 0 : index
    %111 = vector.load %arg4[%c0_60, %c0_61] : memref<8x8xf32, #tpu.memory_space<vmem>>, vector<8x8xf32>
    %c0_62 = arith.constant 0 : index
    %c0_63 = arith.constant 0 : index
    %c0_64 = arith.constant 0 : index
    %112 = vector.load %arg8[%c0_62, %c0_63, %c0_64] : memref<1x8x256xf32, #tpu.memory_space<vmem>>, vector<1x8x256xf32>
    %113 = vector.shape_cast %112 : vector<1x8x256xf32> to vector<8x256xf32>
    %cst_65 = arith.constant dense<0.000000e+00> : vector<8x256xf32>
    %114 = tpu.matmul %111, %113, %cst_65 {dimension_numbers = #tpu.dot_dimension_numbers<[1], [0], [0], [1], [0, 0, 1, 1], [], []>} : vector<8x8xf32>, vector<8x256xf32>, vector<8x256xf32> -> vector<8x256xf32>
    %115 = arith.addf %110, %114 : vector<8x256xf32>
    %c0_66 = arith.constant 0 : index
    %c0_67 = arith.constant 0 : index
    %116 = vector.load %arg5[%c0_66, %c0_67] : memref<8x1xf32, #tpu.memory_space<vmem>>, vector<8x1xf32>
    %117 = vector.broadcast %116 : vector<8x1xf32> to vector<8x256xf32>
    %118 = arith.addf %115, %117 : vector<8x256xf32>
    %cst_68 = arith.constant 5.000000e-01 : f32
    %119 = vector.broadcast %cst_68 : f32 to vector<8x256xf32>
    %120 = arith.mulf %119, %118 : vector<8x256xf32>
    %121 = math.tanh %120 : vector<8x256xf32>
    %cst_69 = arith.constant 5.000000e-01 : f32
    %122 = vector.broadcast %cst_69 : f32 to vector<8x256xf32>
    %123 = arith.mulf %122, %121 : vector<8x256xf32>
    %cst_70 = arith.constant 5.000000e-01 : f32
    %124 = vector.broadcast %cst_70 : f32 to vector<8x256xf32>
    %125 = arith.addf %123, %124 : vector<8x256xf32>
    %126 = arith.mulf %118, %125 : vector<8x256xf32>
    %c0_71 = arith.constant 0 : index
    %c0_72 = arith.constant 0 : index
    %c0_73 = arith.constant 0 : index
    %127 = vector.load %arg9[%c0_71, %c0_72, %c0_73] : memref<1x8x256xf32, #tpu.memory_space<vmem>>, vector<1x8x256xf32>
    %128 = vector.shape_cast %127 : vector<1x8x256xf32> to vector<8x256xf32>
    %129 = vector.shape_cast %126 : vector<8x256xf32> to vector<1x8x256xf32>
    tpu.vector_store %arg9[%c0_71, %c0_72, %c0_73], %129 {strides = array<i32>} : memref<1x8x256xf32, #tpu.memory_space<vmem>>, vector<1x8x256xf32>,
    return
  }
  func.func @transform_0(%arg0: i32) -> (i32, i32, i32) {
    %c0_i32 = arith.constant 0 : i32
    %c0_i32_0 = arith.constant 0 : i32
    %c0_i32_1 = arith.constant 0 : i32
    %c0_i32_2 = arith.constant 0 : i32
    return %c0_i32, %c0_i32_0, %c0_i32_1 : i32, i32, i32
  }
  func.func @transform_1(%arg0: i32) -> (i32, i32) {
    %c0_i32 = arith.constant 0 : i32
    %c0_i32_0 = arith.constant 0 : i32
    %c0_i32_1 = arith.constant 0 : i32
    return %c0_i32, %c0_i32_0 : i32, i32
  }
  func.func @transform_2(%arg0: i32) -> (i32, i32) {
    %c0_i32 = arith.constant 0 : i32
    %c0_i32_0 = arith.constant 0 : i32
    %c0_i32_1 = arith.constant 0 : i32
    return %c0_i32, %c0_i32_0 : i32, i32
  }
  func.func @transform_3(%arg0: i32) -> (i32, i32) {
    %c0_i32 = arith.constant 0 : i32
    %c0_i32_0 = arith.constant 0 : i32
    %c0_i32_1 = arith.constant 0 : i32
    return %c0_i32, %c0_i32_0 : i32, i32
  }
  func.func @transform_4(%arg0: i32) -> (i32, i32) {
    %c0_i32 = arith.constant 0 : i32
    %c0_i32_0 = arith.constant 0 : i32
    %c0_i32_1 = arith.constant 0 : i32
    return %c0_i32, %c0_i32_0 : i32, i32
  }
  func.func @transform_5(%arg0: i32) -> (i32, i32) {
    %c0_i32 = arith.constant 0 : i32
    %c0_i32_0 = arith.constant 0 : i32
    %c0_i32_1 = arith.constant 0 : i32
    return %c0_i32, %c0_i32_0 : i32, i32
  }
  func.func @transform_6(%arg0: i32) -> (i32, i32, i32) {
    %c0_i32 = arith.constant 0 : i32
    %c0_i32_0 = arith.constant 0 : i32
    %c0_i32_1 = arith.constant 0 : i32
    return %arg0, %c0_i32, %c0_i32_0 : i32, i32, i32
  }
  func.func @transform_7(%arg0: i32) -> (i32, i32, i32) {
    %c0_i32 = arith.constant 0 : i32
    %c0_i32_0 = arith.constant 0 : i32
    %c0_i32_1 = arith.constant 0 : i32
    return %arg0, %c0_i32, %c0_i32_0 : i32, i32, i32
  }
  func.func @transform_8(%arg0: i32) -> (i32, i32, i32) {
    %c0_i32 = arith.constant 0 : i32
    %c0_i32_0 = arith.constant 0 : i32
    %c0_i32_1 = arith.constant 0 : i32
    return %arg0, %c0_i32, %c0_i32_0 : i32, i32, i32
  }
}

</mosaic_0001>

<llo_original>
// kernel: squeeze.8
$region0: #{squeeze.8}
  %s0 = inlined_call_operand.vmem [shape: f32[8,32], index: 0, kind: input, shape index: {}]
  %s1 = inlined_call_operand.vmem [shape: f32[8,4,8], index: 1, kind: output, shape index: {}]
  $region1: #{squeeze.8} parent=0
    #allocation0 [shape = 'u8[32768]{0}', space=vmem, size = 0x8000, scoped, tag = 'scoped mem for output reshape']
    %v2 = vld [vmem:[%s0] sm:$0xff]
    %vm3 = vcmask 64512
    %4 = vst.msk [vmem:[#allocation0] ss:$8 sm:$0xf] %vm3, %v2
    %5 = vst.msk [vmem:[#allocation0] ss:$8 sm:$0xf0] %vm3, %v2
    %v6 = vld [vmem:[%s0] sm:$0xff]
    %7 = vrot.lane.b32.xlu0 %v6, 120
    %v8 = vpop.permute.xlu0 %7
    %vm9 = vcmask 64512
    %s10 = scalar_lea.vmem [#allocation0], 1
    %11 = vst.msk [vmem:[%s10] ss:$8 sm:$0xf] %vm9, %v8
    %s12 = scalar_lea.vmem [#allocation0], 1
    %13 = vst.msk [vmem:[%s12] ss:$8 sm:$0xf0] %vm9, %v8
    %v14 = vld [vmem:[%s0] sm:$0xff]
    %15 = vrot.lane.b32.xlu0 %v14, 112
    %v16 = vpop.permute.xlu0 %15
    %vm17 = vcmask 64512
    %s18 = scalar_lea.vmem [#allocation0], 2
    %19 = vst.msk [vmem:[%s18] ss:$8 sm:$0xf] %vm17, %v16
    %s20 = scalar_lea.vmem [#allocation0], 2
    %21 = vst.msk [vmem:[%s20] ss:$8 sm:$0xf0] %vm17, %v16
    %v22 = vld [vmem:[%s0] sm:$0xff]
    %23 = vrot.lane.b32.xlu0 %v22, 104
    %v24 = vpop.permute.xlu0 %23
    %vm25 = vcmask 64512
    %s26 = scalar_lea.vmem [#allocation0], 3
    %27 = vst.msk [vmem:[%s26] ss:$8 sm:$0xf] %vm25, %v24
    %s28 = scalar_lea.vmem [#allocation0], 3
    %29 = vst.msk [vmem:[%s28] ss:$8 sm:$0xf0] %vm25, %v24
    %s31 = sshll.u32 1, 4
    %s32 = ssub.s32 %s31, 1
    %v34 = vld [vmem:[#allocation0] sm:%s32]
    %s35 = sshll.u32 1, 4
    %s36 = ssub.s32 %s35, 1
    %37 = vst [vmem:[%s1] sm:%s36] %v34
    %s38 = scalar_lea.vmem [#allocation0], 8
    %v39 = vld [vmem:[%s38] sm:%s32]
    %s40 = sshll.u32 1, 4
    %s41 = ssub.s32 %s40, 1
    %s42 = scalar_lea.vmem %s1, 4
    %43 = vst [vmem:[%s42] sm:%s41] %v39
    %s44 = scalar_lea.vmem [#allocation0], 16
    %v45 = vld [vmem:[%s44] sm:%s32]
    %s46 = sshll.u32 1, 4
    %s47 = ssub.s32 %s46, 1
    %s48 = smul.addr 4, 2
    %s49 = scalar_lea.vmem %s1, %s48
    %50 = vst [vmem:[%s49] sm:%s47] %v45
    %s51 = scalar_lea.vmem [#allocation0], 24
    %v52 = vld [vmem:[%s51] sm:%s32]
    %s53 = sshll.u32 1, 4
    %s54 = ssub.s32 %s53, 1
    %s55 = smul.addr 4, 3
    %s56 = scalar_lea.vmem %s1, %s55
    %57 = vst [vmem:[%s56] sm:%s54] %v52
    %s58 = scalar_lea.vmem [#allocation0], 32
    %v59 = vld [vmem:[%s58] sm:%s32]
    %s60 = sshll.u32 1, 4
    %s61 = ssub.s32 %s60, 1
    %s62 = smul.addr 4, 4
    %s63 = scalar_lea.vmem %s1, %s62
    %64 = vst [vmem:[%s63] sm:%s61] %v59
    %s65 = scalar_lea.vmem [#allocation0], 40
    %v66 = vld [vmem:[%s65] sm:%s32]
    %s67 = sshll.u32 1, 4
    %s68 = ssub.s32 %s67, 1
    %s69 = smul.addr 4, 5
    %s70 = scalar_lea.vmem %s1, %s69
    %71 = vst [vmem:[%s70] sm:%s68] %v66
    %s72 = scalar_lea.vmem [#allocation0], 48
    %v73 = vld [vmem:[%s72] sm:%s32]
    %s74 = sshll.u32 1, 4
    %s75 = ssub.s32 %s74, 1
    %s76 = smul.addr 4, 6
    %s77 = scalar_lea.vmem %s1, %s76
    %78 = vst [vmem:[%s77] sm:%s75] %v73
    %s79 = scalar_lea.vmem [#allocation0], 56
    %v80 = vld [vmem:[%s79] sm:%s32]
    %s81 = sshll.u32 1, 4
    %s82 = ssub.s32 %s81, 1
    %s83 = smul.addr 4, 7
    %s84 = scalar_lea.vmem %s1, %s83
    %85 = vst [vmem:[%s84] sm:%s82] %v80

// kernel: sppcspc_pallas.4
$region0: #{sppcspc_pallas.4}
  #allocation0 [shape = 'u32[]', space=smem, size = 0x4, offset = 0x4, fixed_abs, tag = 'smem constant byte address 0x4 - core index']
  #allocation1 [shape = 'u32[144,128]{1,0:T(1,128)}', space=vmem, size = 0x12000, scoped, tag = 'internal scratch']
  %s0 = inlined_call_operand.vmem [shape: f32[8,8], index: 0, kind: input, shape index: {}]
  %s1 = inlined_call_operand.vmem [shape: f32[8,1], index: 1, kind: input, shape index: {}]
  %s2 = inlined_call_operand.vmem [shape: f32[8,8], index: 2, kind: input, shape index: {}]
  %s3 = inlined_call_operand.vmem [shape: f32[8,1], index: 3, kind: input, shape index: {}]
  %s4 = inlined_call_operand.vmem [shape: f32[2,8,256], index: 4, kind: input, shape index: {}]
  %s5 = inlined_call_operand.vmem [shape: f32[2,8,256], index: 5, kind: output, shape index: {0}]
  %s6 = inlined_call_operand.vmem [shape: f32[2,8,256], index: 6, kind: output, shape index: {1}]
  %7 = xla_tuple %s5, %s6
  %s8 = sld [smem:[#allocation0]]
  $region61: #{sppcspc_pallas.4} parent=0
    _
  %s10 = ssub.s32 1, %s8
  %s11 = scalar_select 0, %s10, %s8
  loop: start=0, step=1, limit=4
  $region2: #{sppcspc_pallas.4} parent=0 // loop_pre_header
    _
  $region3: #{sppcspc_pallas.4} parent=0 // loop_header
    %s13 = sphi 0, %s17
    %p14 = scmp.ge.s32.totalorder %s13, 4
    %s21 = sphi 0, %s21
    %s23 = sphi 0, %s21
    %s24 = sphi 0, %s23
    %s38 = sphi 0, %s24
    %s42 = sphi 0, %s42
    %s44 = sphi 0, %s42
    %s45 = sphi 0, %s44
    %s59 = sphi 0, %s45
    %s63 = sphi 0, %s63
    %s65 = sphi 0, %s63
    %s66 = sphi 0, %s65
    %s80 = sphi 0, %s66
    %s84 = sphi 0, %s84
    %s86 = sphi 0, %s84
    %s87 = sphi 0, %s86
    %s101 = sphi 0, %s87
    %s107 = sphi 0, %s109
    %s110 = sphi 0, %s107
    %s111 = sphi 0, %s110
    %s127 = sphi 0, %s111
    %s133 = sphi 0, %s135
    %s136 = sphi 0, %s133
    %s137 = sphi 0, %s136
    %s153 = sphi 0, %s137
    %s159 = sphi 0, %s161
    %s162 = sphi 0, %s159
    %s163 = sphi 0, %s162
    %s179 = sphi 0, %s163
  $region4: #{sppcspc_pallas.4} parent=0 // loop_header_branch
    %16 = sbr.rel (%p14) target = $region8
  $region5: #{sppcspc_pallas.4} parent=0 // loop_body
    %s18 = ssub.s32 %s13, 1
    %s19 = ssub.s32 %s13, 2
    %s20 = sadd.s32 %s13, 1
    %s22 = sadd.s32 %s21, 1
    %p25 = scmp.eq.s32.totalorder %s13, 1
    %p26 = scmp.ne.s32.totalorder %s21, %s23
    %p27 = scmp.eq.s32.totalorder %s13, 0
    %p28 = por %p26, %p27
    %p29 = scmp.ne.s32.totalorder %s21, %s23
    %p30 = scmp.eq.s32.totalorder %s18, 1
    %p31 = por %p29, %p30
    %p32 = scmp.ne.s32.totalorder %s23, %s24
    %p33 = scmp.eq.s32.totalorder %s18, 0
    %p34 = por %p32, %p33
    %p35 = scmp.ne.s32.totalorder %s23, %s24
    %p36 = scmp.eq.s32.totalorder %s19, 1
    %p37 = por %p35, %p36
    %p39 = scmp.ne.s32.totalorder %s24, %s38
    %p40 = scmp.eq.s32.totalorder %s19, 0
    %p41 = por %p39, %p40
    %s43 = sadd.s32 %s42, 1
    %p46 = scmp.eq.s32.totalorder %s13, 1
    %p47 = scmp.ne.s32.totalorder %s42, %s44
    %p48 = scmp.eq.s32.totalorder %s13, 0
    %p49 = por %p47, %p48
    %p50 = scmp.ne.s32.totalorder %s42, %s44
    %p51 = scmp.eq.s32.totalorder %s18, 1
    %p52 = por %p50, %p51
    %p53 = scmp.ne.s32.totalorder %s44, %s45
    %p54 = scmp.eq.s32.totalorder %s18, 0
    %p55 = por %p53, %p54
    %p56 = scmp.ne.s32.totalorder %s44, %s45
    %p57 = scmp.eq.s32.totalorder %s19, 1
    %p58 = por %p56, %p57
    %p60 = scmp.ne.s32.totalorder %s45, %s59
    %p61 = scmp.eq.s32.totalorder %s19, 0
    %p62 = por %p60, %p61
    %s64 = sadd.s32 %s63, 1
    %p67 = scmp.eq.s32.totalorder %s13, 1
    %p68 = scmp.ne.s32.totalorder %s63, %s65
    %p69 = scmp.eq.s32.totalorder %s13, 0
    %p70 = por %p68, %p69
    %p71 = scmp.ne.s32.totalorder %s63, %s65
    %p72 = scmp.eq.s32.totalorder %s18, 1
    %p73 = por %p71, %p72
    %p74 = scmp.ne.s32.totalorder %s65, %s66
    %p75 = scmp.eq.s32.totalorder %s18, 0
    %p76 = por %p74, %p75
    %p77 = scmp.ne.s32.totalorder %s65, %s66
    %p78 = scmp.eq.s32.totalorder %s19, 1
    %p79 = por %p77, %p78
    %p81 = scmp.ne.s32.totalorder %s66, %s80
    %p82 = scmp.eq.s32.totalorder %s19, 0
    %p83 = por %p81, %p82
    %s85 = sadd.s32 %s84, 1
    %p88 = scmp.eq.s32.totalorder %s13, 1
    %p89 = scmp.ne.s32.totalorder %s84, %s86
    %p90 = scmp.eq.s32.totalorder %s13, 0
    %p91 = por %p89, %p90
    %p92 = scmp.ne.s32.totalorder %s84, %s86
    %p93 = scmp.eq.s32.totalorder %s18, 1
    %p94 = por %p92, %p93
    %p95 = scmp.ne.s32.totalorder %s86, %s87
    %p96 = scmp.eq.s32.totalorder %s18, 0
    %p97 = por %p95, %p96
    %p98 = scmp.ne.s32.totalorder %s86, %s87
    %p99 = scmp.eq.s32.totalorder %s19, 1
    %p100 = por %p98, %p99
    %p102 = scmp.ne.s32.totalorder %s87, %s101
    %p103 = scmp.eq.s32.totalorder %s19, 0
    %p104 = por %p102, %p103
    %s105 = ssub.s32 %s13, %s20
    %p106 = scmp.eq.s32.totalorder %s105, 0
    %s108 = sadd.s32 %s107, 1
    %s109 = scalar_select %p106, %s107, %s108
    %p112 = pneg %p106
    %p113 = scmp.eq.s32.totalorder %s13, 1
    %p114 = por %p112, %p113
    %p115 = scmp.ne.s32.totalorder %s107, %s110
    %p116 = scmp.eq.s32.totalorder %s13, 0
    %p117 = por %p115, %p116
    %p118 = scmp.ne.s32.totalorder %s107, %s110
    %p119 = scmp.eq.s32.totalorder %s18, 1
    %p120 = por %p118, %p119
    %p121 = scmp.ne.s32.totalorder %s110, %s111
    %p122 = scmp.eq.s32.totalorder %s18, 0
    %p123 = por %p121, %p122
    %p124 = scmp.ne.s32.totalorder %s110, %s111
    %p125 = scmp.eq.s32.totalorder %s19, 1
    %p126 = por %p124, %p125
    %p128 = scmp.ne.s32.totalorder %s111, %s127
    %p129 = scmp.eq.s32.totalorder %s19, 0
    %p130 = por %p128, %p129
    %s131 = ssub.s32 %s13, %s20
    %p132 = scmp.eq.s32.totalorder %s131, 0
    %s134 = sadd.s32 %s133, 1
    %s135 = scalar_select %p132, %s133, %s134
    %p138 = pneg %p132
    %p139 = scmp.eq.s32.totalorder %s13, 1
    %p140 = por %p138, %p139
    %p141 = scmp.ne.s32.totalorder %s133, %s136
    %p142 = scmp.eq.s32.totalorder %s13, 0
    %p143 = por %p141, %p142
    %p144 = scmp.ne.s32.totalorder %s133, %s136
    %p145 = scmp.eq.s32.totalorder %s18, 1
    %p146 = por %p144, %p145
    %p147 = scmp.ne.s32.totalorder %s136, %s137
    %p148 = scmp.eq.s32.totalorder %s18, 0
    %p149 = por %p147, %p148
    %p150 = scmp.ne.s32.totalorder %s136, %s137
    %p151 = scmp.eq.s32.totalorder %s19, 1
    %p152 = por %p150, %p151
    %p154 = scmp.ne.s32.totalorder %s137, %s153
    %p155 = scmp.eq.s32.totalorder %s19, 0
    %p156 = por %p154, %p155
    %s157 = ssub.s32 %s13, %s20
    %p158 = scmp.eq.s32.totalorder %s157, 0
    %s160 = sadd.s32 %s159, 1
    %s161 = scalar_select %p158, %s159, %s160
    %p164 = pneg %p158
    %p165 = scmp.eq.s32.totalorder %s13, 1
    %p166 = por %p164, %p165
    %p167 = scmp.ne.s32.totalorder %s159, %s162
    %p168 = scmp.eq.s32.totalorder %s13, 0
    %p169 = por %p167, %p168
    %p170 = scmp.ne.s32.totalorder %s159, %s162
    %p171 = scmp.eq.s32.totalorder %s18, 1
    %p172 = por %p170, %p171
    %p173 = scmp.ne.s32.totalorder %s162, %s163
    %p174 = scmp.eq.s32.totalorder %s18, 0
    %p175 = por %p173, %p174
    %p176 = scmp.ne.s32.totalorder %s162, %s163
    %p177 = scmp.eq.s32.totalorder %s19, 1
    %p178 = por %p176, %p177
    %p180 = scmp.ne.s32.totalorder %s163, %s179
    %p181 = scmp.eq.s32.totalorder %s19, 0
    %p182 = por %p180, %p181
    %p183 = scmp.le.s32.totalorder 1, %s13
    %p184 = scmp.lt.s32.totalorder %s13, 3
    %p185 = pnand %p183, %p184
    %p186 = pneg %p185
    // Predicated region
    $region9: #{sppcspc_pallas.4} parent=5 // pred_check
      _
    $region10: #{sppcspc_pallas.4} parent=5 // pred_check_branch
      %188 = sbr.rel (%p185) target = $region12
    $region11: #{sppcspc_pallas.4} parent=5 // pred_region
      %s189 = ssub.s32 %s13, 1
      // Predicated region
      $region13: #{sppcspc_pallas.4} parent=11 // pred_check
        %p190 = pneg %p34
      $region14: #{sppcspc_pallas.4} parent=11 // pred_check_branch
        %192 = sbr.rel (%p190) target = $region16
      $region15: #{sppcspc_pallas.4} parent=11 // pred_region
        _
      $region16: #{sppcspc_pallas.4} parent=11 // pred_fallthru
        _
      // Predicated region
      $region17: #{sppcspc_pallas.4} parent=11 // pred_check
        %p193 = pneg %p55
      $region18: #{sppcspc_pallas.4} parent=11 // pred_check_branch
        %195 = sbr.rel (%p193) target = $region20
      $region19: #{sppcspc_pallas.4} parent=11 // pred_region
        _
      $region20: #{sppcspc_pallas.4} parent=11 // pred_fallthru
        _
      // Predicated region
      $region21: #{sppcspc_pallas.4} parent=11 // pred_check
        %p196 = pneg %p76
      $region22: #{sppcspc_pallas.4} parent=11 // pred_check_branch
        %198 = sbr.rel (%p196) target = $region24
      $region23: #{sppcspc_pallas.4} parent=11 // pred_region
        _
      $region24: #{sppcspc_pallas.4} parent=11 // pred_fallthru
        _
      // Predicated region
      $region25: #{sppcspc_pallas.4} parent=11 // pred_check
        %p199 = pneg %p97
      $region26: #{sppcspc_pallas.4} parent=11 // pred_check_branch
        %201 = sbr.rel (%p199) target = $region28
      $region27: #{sppcspc_pallas.4} parent=11 // pred_region
        _
      $region28: #{sppcspc_pallas.4} parent=11 // pred_fallthru
        _
    $region12: #{sppcspc_pallas.4} parent=5 // pred_fallthru
      _
    %p202 = scmp.lt.s32.totalorder %s13, 2
    // Predicated region
    $region29: #{sppcspc_pallas.4} parent=5 // pred_check
      %p203 = pneg %p202
    $region30: #{sppcspc_pallas.4} parent=5 // pred_check_branch
      %205 = sbr.rel (%p203) target = $region32
    $region31: #{sppcspc_pallas.4} parent=5 // pred_region
      // Predicated region
      $region33: #{sppcspc_pallas.4} parent=31 // pred_check
        %p206 = pneg %p117
      $region34: #{sppcspc_pallas.4} parent=31 // pred_check_branch
        %208 = sbr.rel (%p206) target = $region36
      $region35: #{sppcspc_pallas.4} parent=31 // pred_region
        %p209 = scmp.lt.s32.totalorder %s13, 1
        %s210 = scalar_select %p209, %s13, 1
        %s211 = smul.addr %s210, 2
        %s212 = smul.addr %s211, 8
        %s213 = scalar_lea.vmem %s4, %s212
      $region36: #{sppcspc_pallas.4} parent=31 // pred_fallthru
        _
    $region32: #{sppcspc_pallas.4} parent=5 // pred_fallthru
      _
    %p214 = scmp.le.s32.totalorder 1, %s13
    %p215 = scmp.lt.s32.totalorder %s13, 3
    %p216 = pnand %p214, %p215
    %p217 = pneg %p216
    // Predicated region
    $region37: #{sppcspc_pallas.4} parent=5 // pred_check
      _
    $region38: #{sppcspc_pallas.4} parent=5 // pred_check_branch
      %219 = sbr.rel (%p216) target = $region40
    $region39: #{sppcspc_pallas.4} parent=5 // pred_region
      %s220 = ssub.s32 %s13, 1
      %p221 = pneg %p34
      %p222 = pneg %p31
      %p223 = pneg %p55
      %p224 = pneg %p52
      %p225 = pneg %p76
      %p226 = pneg %p73
      %p227 = pneg %p97
      %p228 = pneg %p94
      %p229 = scmp.lt.s32.totalorder %s18, 1
      %s230 = scalar_select %p229, %s18, 1
      %s231 = smul.addr %s230, 2
      %s232 = smul.addr %s231, 8
      %s233 = scalar_lea.vmem %s4, %s232
      %p234 = pneg %p123
      %p235 = pneg %p120
      %p236 = pneg %p149
      %p237 = pneg %p146
      %p238 = scmp.lt.s32.totalorder %s18, 1
      %s239 = scalar_select %p238, %s18, 1
      %s240 = smul.addr %s239, 2
      %s241 = smul.addr %s240, 8
      %s242 = scalar_lea.vmem %s5, %s241
      %p243 = pneg %p175
      %p244 = pneg %p172
      %p245 = scmp.lt.s32.totalorder %s18, 1
      %s246 = scalar_select %p245, %s18, 1
      %s247 = smul.addr %s246, 2
      %s248 = smul.addr %s247, 8
      %s249 = scalar_lea.vmem %s6, %s248
      %p250 = scmp.lt.s32.totalorder %s18, 1
      %s251 = scalar_select %p250, %s18, 1
      %s252 = smul.addr %s251, 2
      %s253 = smul.addr %s252, 8
      %s254 = scalar_lea.vmem %s4, %s253
      %p255 = scmp.lt.s32.totalorder %s18, 1
      %s256 = scalar_select %p255, %s18, 1
      %s257 = smul.addr %s256, 2
      %s258 = smul.addr %s257, 8
      %s259 = scalar_lea.vmem %s5, %s258
      %p260 = scmp.lt.s32.totalorder %s18, 1
      %s261 = scalar_select %p260, %s18, 1
      %s262 = smul.addr %s261, 2
      %s263 = smul.addr %s262, 8
      %s264 = scalar_lea.vmem %s6, %s263
      %v265 = vld [vmem:[%s254] sm:$0xff]
      %v266 = vld [vmem:[%s254 + $0x8] sm:$0xff]
      %v267 = vld [vmem:[%s0] sm:$0xff]
      %v268 = vld [vmem:[%s1] sm:$0xff]
      %270 = vset.pattern.permute.xlu0 0
      %271 = vperm.xlu0 %270, %v268
      %v272 = vpop.permute.xlu0 %271
      %vm274 = vcmask 64512
      %v276 = vsel %vm274, %v267, 0
      %278 = vmatprep.subr.mxu0 0.0
      %279 = vmatpush1.msra.mxu0 0.0
      %280 = vmatprep.subr.mxu0 0.0
      %281 = vmatpush1.msra.mxu0 0.0
      %282 = vmatprep.subr.mxu0 0.0
      %283 = vmatpush1.msra.mxu0 0.0
      %284 = vmatprep.subr.mxu0 0.0
      %285 = vmatpush1.msra.mxu0 0.0
      %286 = vmatprep.subr.mxu0 0.0
      %287 = vmatpush1.msra.mxu0 0.0
      %288 = vmatprep.subr.mxu0 0.0
      %289 = vmatpush1.msra.mxu0 0.0
      %290 = vmatprep.subr.mxu0 0.0
      %291 = vmatpush1.msra.mxu0 0.0
      %292 = vmatprep.subr.mxu0 0.0
      %293 = vmatpush1.msra.mxu0 0.0
      %294 = vmatprep.subr.mxu0 0.0
      %295 = vmatpush1.msra.mxu0 0.0
      %296 = vmatprep.subr.mxu0 0.0
      %297 = vmatpush1.msra.mxu0 0.0
      %298 = vmatprep.subr.mxu0 0.0
      %299 = vmatpush1.msra.mxu0 0.0
      %300 = vmatprep.subr.mxu0 0.0
      %301 = vmatpush1.msra.mxu0 0.0
      %302 = vmatprep.subr.mxu0 0.0
      %303 = vmatpush1.msra.mxu0 0.0
      %304 = vmatprep.subr.mxu0 0.0
      %305 = vmatpush1.msra.mxu0 0.0
      %306 = vmatprep.subr.mxu0 0.0
      %307 = vmatpush1.msra.mxu0 0.0
      %308 = vmatprep.subr.mxu0 %v266
      %309 = vmatpush1.msra.mxu0 %v265
      %310 = vmatprep.subr.mxu0 0.0
      %311 = vmatpush2.msra.mxu0 0.0
      %312 = vmatprep.subr.mxu0 0.0
      %313 = vmatpush2.msra.mxu0 0.0
      %314 = vmatprep.subr.mxu0 0.0
      %315 = vmatpush2.msra.mxu0 0.0
      %316 = vmatprep.subr.mxu0 0.0
      %317 = vmatpush2.msra.mxu0 0.0
      %318 = vmatprep.subr.mxu0 0.0
      %319 = vmatpush2.msra.mxu0 0.0
      %320 = vmatprep.subr.mxu0 0.0
      %321 = vmatpush2.msra.mxu0 0.0
      %322 = vmatprep.subr.mxu0 0.0
      %323 = vmatpush2.msra.mxu0 0.0
      %324 = vmatprep.subr.mxu0 0.0
      %325 = vmatpush2.msra.mxu0 0.0
      %326 = vmatprep.subr.mxu0 0.0
      %327 = vmatpush2.msra.mxu0 0.0
      %328 = vmatprep.subr.mxu0 0.0
      %329 = vmatpush2.msra.mxu0 0.0
      %330 = vmatprep.subr.mxu0 0.0
      %331 = vmatpush2.msra.mxu0 0.0
      %332 = vmatprep.subr.mxu0 0.0
      %333 = vmatpush2.msra.mxu0 0.0
      %334 = vmatprep.subr.mxu0 0.0
      %335 = vmatpush2.msra.mxu0 0.0
      %336 = vmatprep.subr.mxu0 0.0
      %337 = vmatpush2.msra.mxu0 0.0
      %338 = vmatprep.subr.mxu0 0.0
      %339 = vmatpush2.msra.mxu0 0.0
      %340 = vmatprep.subr.mxu0 0.0
      %341 = vmatpush2.msra.mxu0 0.0
      %342 = vmatprep.mubr.f32.mxu0 0.0
      %343 = vmatmul.mubr.f32.gmra.mxu0 %v276
      %v344 = vpop.f32.mrf.mxu0
      %v345 = vadd.f32 %v272, %v344
      %v346 = vpop.f32.mrf.mxu0
      %v347 = vadd.f32 %v272, %v346
      %348 = vdwg.mxu0
      %v349 = vmul.f32 %v345, 0.5
      %v350 = vmul.f32 %v347, 0.5
      %v351 = vtanh.pop %v349
      %v352 = vtanh.pop %v350
      %v353 = vmul.f32 %v351, 0.5
      %v354 = vmul.f32 %v352, 0.5
      %v355 = vadd.f32 %v353, 0.5
      %v356 = vadd.f32 %v354, 0.5
      %v357 = vmul.f32 %v345, %v355
      %v358 = vmul.f32 %v347, %v356
      %359 = vst [vmem:[%s259] sm:$0xff] %v357
      %360 = vst [vmem:[%s259 + $0x8] sm:$0xff] %v358
      %v361 = vld [vmem:[%s2] sm:$0xff]
      %v362 = vld [vmem:[%s3] sm:$0xff]
      %364 = vset.pattern.permute.xlu0 0
      %365 = vperm.xlu0 %364, %v362
      %v366 = vpop.permute.xlu0 %365
      %v369 = vsel %vm274, %v361, 0
      %371 = vmatprep.subr.mxu0 0.0
      %372 = vmatpush1.msra.mxu0 0.0
      %373 = vmatprep.subr.mxu0 0.0
      %374 = vmatpush1.msra.mxu0 0.0
      %375 = vmatprep.subr.mxu0 0.0
      %376 = vmatpush1.msra.mxu0 0.0
      %377 = vmatprep.subr.mxu0 0.0
      %378 = vmatpush1.msra.mxu0 0.0
      %379 = vmatprep.subr.mxu0 0.0
      %380 = vmatpush1.msra.mxu0 0.0
      %381 = vmatprep.subr.mxu0 0.0
      %382 = vmatpush1.msra.mxu0 0.0
      %383 = vmatprep.subr.mxu0 0.0
      %384 = vmatpush1.msra.mxu0 0.0
      %385 = vmatprep.subr.mxu0 0.0
      %386 = vmatpush1.msra.mxu0 0.0
      %387 = vmatprep.subr.mxu0 0.0
      %388 = vmatpush1.msra.mxu0 0.0
      %389 = vmatprep.subr.mxu0 0.0
      %390 = vmatpush1.msra.mxu0 0.0
      %391 = vmatprep.subr.mxu0 0.0
      %392 = vmatpush1.msra.mxu0 0.0
      %393 = vmatprep.subr.mxu0 0.0
      %394 = vmatpush1.msra.mxu0 0.0
      %395 = vmatprep.subr.mxu0 0.0
      %396 = vmatpush1.msra.mxu0 0.0
      %397 = vmatprep.subr.mxu0 0.0
      %398 = vmatpush1.msra.mxu0 0.0
      %399 = vmatprep.subr.mxu0 0.0
      %400 = vmatpush1.msra.mxu0 0.0
      %401 = vmatprep.subr.mxu0 %v266
      %402 = vmatpush1.msra.mxu0 %v265
      %403 = vmatprep.subr.mxu0 0.0
      %404 = vmatpush2.msra.mxu0 0.0
      %405 = vmatprep.subr.mxu0 0.0
      %406 = vmatpush2.msra.mxu0 0.0
      %407 = vmatprep.subr.mxu0 0.0
      %408 = vmatpush2.msra.mxu0 0.0
      %409 = vmatprep.subr.mxu0 0.0
      %410 = vmatpush2.msra.mxu0 0.0
      %411 = vmatprep.subr.mxu0 0.0
      %412 = vmatpush2.msra.mxu0 0.0
      %413 = vmatprep.subr.mxu0 0.0
      %414 = vmatpush2.msra.mxu0 0.0
      %415 = vmatprep.subr.mxu0 0.0
      %416 = vmatpush2.msra.mxu0 0.0
      %417 = vmatprep.subr.mxu0 0.0
      %418 = vmatpush2.msra.mxu0 0.0
      %419 = vmatprep.subr.mxu0 0.0
      %420 = vmatpush2.msra.mxu0 0.0
      %421 = vmatprep.subr.mxu0 0.0
      %422 = vmatpush2.msra.mxu0 0.0
      %423 = vmatprep.subr.mxu0 0.0
      %424 = vmatpush2.msra.mxu0 0.0
      %425 = vmatprep.subr.mxu0 0.0
      %426 = vmatpush2.msra.mxu0 0.0
      %427 = vmatprep.subr.mxu0 0.0
      %428 = vmatpush2.msra.mxu0 0.0
      %429 = vmatprep.subr.mxu0 0.0
      %430 = vmatpush2.msra.mxu0 0.0
      %431 = vmatprep.subr.mxu0 0.0
      %432 = vmatpush2.msra.mxu0 0.0
      %433 = vmatprep.subr.mxu0 0.0
      %434 = vmatpush2.msra.mxu0 0.0
      %435 = vmatprep.mubr.f32.mxu0 0.0
      %436 = vmatmul.mubr.f32.gmra.mxu0 %v369
      %v437 = vpop.f32.mrf.mxu0
      %v438 = vadd.f32 %v366, %v437
      %v439 = vpop.f32.mrf.mxu0
      %v440 = vadd.f32 %v366, %v439
      %441 = vdwg.mxu0
      %v442 = vmul.f32 %v438, 0.5
      %v443 = vmul.f32 %v440, 0.5
      %v444 = vtanh.pop %v442
      %v445 = vtanh.pop %v443
      %v446 = vmul.f32 %v444, 0.5
      %v447 = vmul.f32 %v445, 0.5
      %v448 = vadd.f32 %v446, 0.5
      %v449 = vadd.f32 %v447, 0.5
      %v450 = vmul.f32 %v438, %v448
      %v451 = vmul.f32 %v440, %v449
      %452 = vst [vmem:[%s264] sm:$0xff] %v450
      %453 = vst [vmem:[%s264 + $0x8] sm:$0xff] %v451
      %p454 = scmp.lt.s32.totalorder %s18, 1
      %s455 = scalar_select %p454, %s18, 1
      %s456 = smul.addr %s455, 2
      %s457 = smul.addr %s456, 8
      %s458 = scalar_lea.vmem %s5, %s457
      %p459 = scmp.lt.s32.totalorder %s18, 1
      %s460 = scalar_select %p459, %s18, 1
      %s461 = smul.addr %s460, 2
      %s462 = smul.addr %s461, 8
      %s463 = scalar_lea.vmem %s6, %s462
      // Predicated region
      $region41: #{sppcspc_pallas.4} parent=39 // pred_check
        %p464 = pneg %p146
      $region42: #{sppcspc_pallas.4} parent=39 // pred_check_branch
        %466 = sbr.rel (%p464) target = $region44
      $region43: #{sppcspc_pallas.4} parent=39 // pred_region
        _
      $region44: #{sppcspc_pallas.4} parent=39 // pred_fallthru
        _
      // Predicated region
      $region45: #{sppcspc_pallas.4} parent=39 // pred_check
        %p467 = pneg %p172
      $region46: #{sppcspc_pallas.4} parent=39 // pred_check_branch
        %469 = sbr.rel (%p467) target = $region48
      $region47: #{sppcspc_pallas.4} parent=39 // pred_region
        _
      $region48: #{sppcspc_pallas.4} parent=39 // pred_fallthru
        _
    $region40: #{sppcspc_pallas.4} parent=5 // pred_fallthru
      _
    %p470 = scmp.le.s32.totalorder 2, %s13
    // Predicated region
    $region49: #{sppcspc_pallas.4} parent=5 // pred_check
      %p471 = pneg %p470
    $region50: #{sppcspc_pallas.4} parent=5 // pred_check_branch
      %473 = sbr.rel (%p471) target = $region52
    $region51: #{sppcspc_pallas.4} parent=5 // pred_region
      %s474 = ssub.s32 %s13, 2
      // Predicated region
      $region53: #{sppcspc_pallas.4} parent=51 // pred_check
        %p475 = pneg %p152
      $region54: #{sppcspc_pallas.4} parent=51 // pred_check_branch
        %477 = sbr.rel (%p475) target = $region56
      $region55: #{sppcspc_pallas.4} parent=51 // pred_region
        %p478 = scmp.lt.s32.totalorder %s19, 1
        %s479 = scalar_select %p478, %s19, 1
        %s480 = smul.addr %s479, 2
        %s481 = smul.addr %s480, 8
        %s482 = scalar_lea.vmem %s5, %s481
      $region56: #{sppcspc_pallas.4} parent=51 // pred_fallthru
        _
      // Predicated region
      $region57: #{sppcspc_pallas.4} parent=51 // pred_check
        %p483 = pneg %p178
      $region58: #{sppcspc_pallas.4} parent=51 // pred_check_branch
        %485 = sbr.rel (%p483) target = $region60
      $region59: #{sppcspc_pallas.4} parent=51 // pred_region
        %p486 = scmp.lt.s32.totalorder %s19, 1
        %s487 = scalar_select %p486, %s19, 1
        %s488 = smul.addr %s487, 2
        %s489 = smul.addr %s488, 8
        %s490 = scalar_lea.vmem %s6, %s489
      $region60: #{sppcspc_pallas.4} parent=51 // pred_fallthru
        _
    $region52: #{sppcspc_pallas.4} parent=5 // pred_fallthru
      _
  $region6: #{sppcspc_pallas.4} parent=0 // loop_footer
    %s17 = sadd.s32 1, %s13
  $region7: #{sppcspc_pallas.4} parent=0 // loop_footer_branch
    %12 = sbr.rel target = $region3
  $region8: #{sppcspc_pallas.4} parent=0 // loop_exit
    _

// kernel: sppcspc_pallas.5
$region0: #{sppcspc_pallas.5}
  #allocation0 [shape = 'u32[]', space=smem, size = 0x4, offset = 0x4, fixed_abs, tag = 'smem constant byte address 0x4 - core index']
  #allocation1 [shape = 'u32[144,128]{1,0:T(1,128)}', space=vmem, size = 0x12000, scoped, tag = 'internal scratch']
  %s0 = inlined_call_operand.vmem [shape: f32[9,8,8], index: 0, kind: input, shape index: {}]
  %s1 = inlined_call_operand.vmem [shape: f32[8,1], index: 1, kind: input, shape index: {}]
  %s2 = inlined_call_operand.vmem [shape: f32[8,8], index: 2, kind: input, shape index: {}]
  %s3 = inlined_call_operand.vmem [shape: f32[8,1], index: 3, kind: input, shape index: {}]
  %s4 = inlined_call_operand.vmem [shape: s32[2,256], index: 4, kind: input, shape index: {}]
  %s5 = inlined_call_operand.vmem [shape: f32[2,8,256], index: 5, kind: input, shape index: {}]
  %s6 = inlined_call_operand.vmem [shape: f32[2,8,256], index: 6, kind: output, shape index: {}]
  %s7 = sld [smem:[#allocation0]]
  $region57: #{sppcspc_pallas.5} parent=0
    _
  %s9 = ssub.s32 1, %s7
  %s10 = scalar_select 0, %s9, %s7
  loop: start=0, step=1, limit=4
  $region2: #{sppcspc_pallas.5} parent=0 // loop_pre_header
    _
  $region3: #{sppcspc_pallas.5} parent=0 // loop_header
    %s12 = sphi 0, %s16
    %p13 = scmp.ge.s32.totalorder %s12, 4
    %s20 = sphi 0, %s20
    %s22 = sphi 0, %s20
    %s23 = sphi 0, %s22
    %s37 = sphi 0, %s23
    %s41 = sphi 0, %s41
    %s43 = sphi 0, %s41
    %s44 = sphi 0, %s43
    %s58 = sphi 0, %s44
    %s62 = sphi 0, %s62
    %s64 = sphi 0, %s62
    %s65 = sphi 0, %s64
    %s79 = sphi 0, %s65
    %s83 = sphi 0, %s83
    %s85 = sphi 0, %s83
    %s86 = sphi 0, %s85
    %s100 = sphi 0, %s86
    %s104 = sphi 0, %s104
    %s106 = sphi 0, %s104
    %s107 = sphi 0, %s106
    %s121 = sphi 0, %s107
    %s127 = sphi 0, %s129
    %s130 = sphi 0, %s127
    %s131 = sphi 0, %s130
    %s147 = sphi 0, %s131
    %s153 = sphi 0, %s155
    %s156 = sphi 0, %s153
    %s157 = sphi 0, %s156
    %s173 = sphi 0, %s157
  $region4: #{sppcspc_pallas.5} parent=0 // loop_header_branch
    %15 = sbr.rel (%p13) target = $region8
  $region5: #{sppcspc_pallas.5} parent=0 // loop_body
    %s17 = ssub.s32 %s12, 1
    %s18 = ssub.s32 %s12, 2
    %s19 = sadd.s32 %s12, 1
    %s21 = sadd.s32 %s20, 1
    %p24 = scmp.eq.s32.totalorder %s12, 1
    %p25 = scmp.ne.s32.totalorder %s20, %s22
    %p26 = scmp.eq.s32.totalorder %s12, 0
    %p27 = por %p25, %p26
    %p28 = scmp.ne.s32.totalorder %s20, %s22
    %p29 = scmp.eq.s32.totalorder %s17, 1
    %p30 = por %p28, %p29
    %p31 = scmp.ne.s32.totalorder %s22, %s23
    %p32 = scmp.eq.s32.totalorder %s17, 0
    %p33 = por %p31, %p32
    %p34 = scmp.ne.s32.totalorder %s22, %s23
    %p35 = scmp.eq.s32.totalorder %s18, 1
    %p36 = por %p34, %p35
    %p38 = scmp.ne.s32.totalorder %s23, %s37
    %p39 = scmp.eq.s32.totalorder %s18, 0
    %p40 = por %p38, %p39
    %s42 = sadd.s32 %s41, 1
    %p45 = scmp.eq.s32.totalorder %s12, 1
    %p46 = scmp.ne.s32.totalorder %s41, %s43
    %p47 = scmp.eq.s32.totalorder %s12, 0
    %p48 = por %p46, %p47
    %p49 = scmp.ne.s32.totalorder %s41, %s43
    %p50 = scmp.eq.s32.totalorder %s17, 1
    %p51 = por %p49, %p50
    %p52 = scmp.ne.s32.totalorder %s43, %s44
    %p53 = scmp.eq.s32.totalorder %s17, 0
    %p54 = por %p52, %p53
    %p55 = scmp.ne.s32.totalorder %s43, %s44
    %p56 = scmp.eq.s32.totalorder %s18, 1
    %p57 = por %p55, %p56
    %p59 = scmp.ne.s32.totalorder %s44, %s58
    %p60 = scmp.eq.s32.totalorder %s18, 0
    %p61 = por %p59, %p60
    %s63 = sadd.s32 %s62, 1
    %p66 = scmp.eq.s32.totalorder %s12, 1
    %p67 = scmp.ne.s32.totalorder %s62, %s64
    %p68 = scmp.eq.s32.totalorder %s12, 0
    %p69 = por %p67, %p68
    %p70 = scmp.ne.s32.totalorder %s62, %s64
    %p71 = scmp.eq.s32.totalorder %s17, 1
    %p72 = por %p70, %p71
    %p73 = scmp.ne.s32.totalorder %s64, %s65
    %p74 = scmp.eq.s32.totalorder %s17, 0
    %p75 = por %p73, %p74
    %p76 = scmp.ne.s32.totalorder %s64, %s65
    %p77 = scmp.eq.s32.totalorder %s18, 1
    %p78 = por %p76, %p77
    %p80 = scmp.ne.s32.totalorder %s65, %s79
    %p81 = scmp.eq.s32.totalorder %s18, 0
    %p82 = por %p80, %p81
    %s84 = sadd.s32 %s83, 1
    %p87 = scmp.eq.s32.totalorder %s12, 1
    %p88 = scmp.ne.s32.totalorder %s83, %s85
    %p89 = scmp.eq.s32.totalorder %s12, 0
    %p90 = por %p88, %p89
    %p91 = scmp.ne.s32.totalorder %s83, %s85
    %p92 = scmp.eq.s32.totalorder %s17, 1
    %p93 = por %p91, %p92
    %p94 = scmp.ne.s32.totalorder %s85, %s86
    %p95 = scmp.eq.s32.totalorder %s17, 0
    %p96 = por %p94, %p95
    %p97 = scmp.ne.s32.totalorder %s85, %s86
    %p98 = scmp.eq.s32.totalorder %s18, 1
    %p99 = por %p97, %p98
    %p101 = scmp.ne.s32.totalorder %s86, %s100
    %p102 = scmp.eq.s32.totalorder %s18, 0
    %p103 = por %p101, %p102
    %s105 = sadd.s32 %s104, 1
    %p108 = scmp.eq.s32.totalorder %s12, 1
    %p109 = scmp.ne.s32.totalorder %s104, %s106
    %p110 = scmp.eq.s32.totalorder %s12, 0
    %p111 = por %p109, %p110
    %p112 = scmp.ne.s32.totalorder %s104, %s106
    %p113 = scmp.eq.s32.totalorder %s17, 1
    %p114 = por %p112, %p113
    %p115 = scmp.ne.s32.totalorder %s106, %s107
    %p116 = scmp.eq.s32.totalorder %s17, 0
    %p117 = por %p115, %p116
    %p118 = scmp.ne.s32.totalorder %s106, %s107
    %p119 = scmp.eq.s32.totalorder %s18, 1
    %p120 = por %p118, %p119
    %p122 = scmp.ne.s32.totalorder %s107, %s121
    %p123 = scmp.eq.s32.totalorder %s18, 0
    %p124 = por %p122, %p123
    %s125 = ssub.s32 %s12, %s19
    %p126 = scmp.eq.s32.totalorder %s125, 0
    %s128 = sadd.s32 %s127, 1
    %s129 = scalar_select %p126, %s127, %s128
    %p132 = pneg %p126
    %p133 = scmp.eq.s32.totalorder %s12, 1
    %p134 = por %p132, %p133
    %p135 = scmp.ne.s32.totalorder %s127, %s130
    %p136 = scmp.eq.s32.totalorder %s12, 0
    %p137 = por %p135, %p136
    %p138 = scmp.ne.s32.totalorder %s127, %s130
    %p139 = scmp.eq.s32.totalorder %s17, 1
    %p140 = por %p138, %p139
    %p141 = scmp.ne.s32.totalorder %s130, %s131
    %p142 = scmp.eq.s32.totalorder %s17, 0
    %p143 = por %p141, %p142
    %p144 = scmp.ne.s32.totalorder %s130, %s131
    %p145 = scmp.eq.s32.totalorder %s18, 1
    %p146 = por %p144, %p145
    %p148 = scmp.ne.s32.totalorder %s131, %s147
    %p149 = scmp.eq.s32.totalorder %s18, 0
    %p150 = por %p148, %p149
    %s151 = ssub.s32 %s12, %s19
    %p152 = scmp.eq.s32.totalorder %s151, 0
    %s154 = sadd.s32 %s153, 1
    %s155 = scalar_select %p152, %s153, %s154
    %p158 = pneg %p152
    %p159 = scmp.eq.s32.totalorder %s12, 1
    %p160 = por %p158, %p159
    %p161 = scmp.ne.s32.totalorder %s153, %s156
    %p162 = scmp.eq.s32.totalorder %s12, 0
    %p163 = por %p161, %p162
    %p164 = scmp.ne.s32.totalorder %s153, %s156
    %p165 = scmp.eq.s32.totalorder %s17, 1
    %p166 = por %p164, %p165
    %p167 = scmp.ne.s32.totalorder %s156, %s157
    %p168 = scmp.eq.s32.totalorder %s17, 0
    %p169 = por %p167, %p168
    %p170 = scmp.ne.s32.totalorder %s156, %s157
    %p171 = scmp.eq.s32.totalorder %s18, 1
    %p172 = por %p170, %p171
    %p174 = scmp.ne.s32.totalorder %s157, %s173
    %p175 = scmp.eq.s32.totalorder %s18, 0
    %p176 = por %p174, %p175
    %p177 = scmp.le.s32.totalorder 1, %s12
    %p178 = scmp.lt.s32.totalorder %s12, 3
    %p179 = pnand %p177, %p178
    %p180 = pneg %p179
    // Predicated region
    $region9: #{sppcspc_pallas.5} parent=5 // pred_check
      _
    $region10: #{sppcspc_pallas.5} parent=5 // pred_check_branch
      %182 = sbr.rel (%p179) target = $region12
    $region11: #{sppcspc_pallas.5} parent=5 // pred_region
      %s183 = ssub.s32 %s12, 1
      // Predicated region
      $region13: #{sppcspc_pallas.5} parent=11 // pred_check
        %p184 = pneg %p33
      $region14: #{sppcspc_pallas.5} parent=11 // pred_check_branch
        %186 = sbr.rel (%p184) target = $region16
      $region15: #{sppcspc_pallas.5} parent=11 // pred_region
        _
      $region16: #{sppcspc_pallas.5} parent=11 // pred_fallthru
        _
      // Predicated region
      $region17: #{sppcspc_pallas.5} parent=11 // pred_check
        %p187 = pneg %p54
      $region18: #{sppcspc_pallas.5} parent=11 // pred_check_branch
        %189 = sbr.rel (%p187) target = $region20
      $region19: #{sppcspc_pallas.5} parent=11 // pred_region
        _
      $region20: #{sppcspc_pallas.5} parent=11 // pred_fallthru
        _
      // Predicated region
      $region21: #{sppcspc_pallas.5} parent=11 // pred_check
        %p190 = pneg %p75
      $region22: #{sppcspc_pallas.5} parent=11 // pred_check_branch
        %192 = sbr.rel (%p190) target = $region24
      $region23: #{sppcspc_pallas.5} parent=11 // pred_region
        _
      $region24: #{sppcspc_pallas.5} parent=11 // pred_fallthru
        _
      // Predicated region
      $region25: #{sppcspc_pallas.5} parent=11 // pred_check
        %p193 = pneg %p96
      $region26: #{sppcspc_pallas.5} parent=11 // pred_check_branch
        %195 = sbr.rel (%p193) target = $region28
      $region27: #{sppcspc_pallas.5} parent=11 // pred_region
        _
      $region28: #{sppcspc_pallas.5} parent=11 // pred_fallthru
        _
      // Predicated region
      $region29: #{sppcspc_pallas.5} parent=11 // pred_check
        %p196 = pneg %p117
      $region30: #{sppcspc_pallas.5} parent=11 // pred_check_branch
        %198 = sbr.rel (%p196) target = $region32
      $region31: #{sppcspc_pallas.5} parent=11 // pred_region
        _
      $region32: #{sppcspc_pallas.5} parent=11 // pred_fallthru
        _
    $region12: #{sppcspc_pallas.5} parent=5 // pred_fallthru
      _
    %p199 = scmp.lt.s32.totalorder %s12, 2
    // Predicated region
    $region33: #{sppcspc_pallas.5} parent=5 // pred_check
      %p200 = pneg %p199
    $region34: #{sppcspc_pallas.5} parent=5 // pred_check_branch
      %202 = sbr.rel (%p200) target = $region36
    $region35: #{sppcspc_pallas.5} parent=5 // pred_region
      // Predicated region
      $region37: #{sppcspc_pallas.5} parent=35 // pred_check
        %p203 = pneg %p137
      $region38: #{sppcspc_pallas.5} parent=35 // pred_check_branch
        %205 = sbr.rel (%p203) target = $region40
      $region39: #{sppcspc_pallas.5} parent=35 // pred_region
        %p206 = scmp.lt.s32.totalorder %s12, 1
        %s207 = scalar_select %p206, %s12, 1
        %s208 = smul.addr %s207, 2
        %s209 = smul.addr %s208, 8
        %s210 = scalar_lea.vmem %s5, %s209
      $region40: #{sppcspc_pallas.5} parent=35 // pred_fallthru
        _
    $region36: #{sppcspc_pallas.5} parent=5 // pred_fallthru
      _
    %p211 = scmp.le.s32.totalorder 1, %s12
    %p212 = scmp.lt.s32.totalorder %s12, 3
    %p213 = pnand %p211, %p212
    %p214 = pneg %p213
    // Predicated region
    $region41: #{sppcspc_pallas.5} parent=5 // pred_check
      _
    $region42: #{sppcspc_pallas.5} parent=5 // pred_check_branch
      %216 = sbr.rel (%p213) target = $region44
    $region43: #{sppcspc_pallas.5} parent=5 // pred_region
      %s217 = ssub.s32 %s12, 1
      %p218 = pneg %p33
      %p219 = pneg %p30
      %p220 = pneg %p54
      %p221 = pneg %p51
      %p222 = pneg %p75
      %p223 = pneg %p72
      %p224 = pneg %p96
      %p225 = pneg %p93
      %p226 = pneg %p117
      %p227 = pneg %p114
      %p228 = scmp.lt.s32.totalorder %s17, 1
      %s229 = scalar_select %p228, %s17, 1
      %s230 = smul.addr %s229, 2
      %s231 = smul.addr %s230, 8
      %s232 = scalar_lea.vmem %s5, %s231
      %p233 = pneg %p143
      %p234 = pneg %p140
      %p235 = pneg %p169
      %p236 = pneg %p166
      %p237 = scmp.lt.s32.totalorder %s17, 1
      %s238 = scalar_select %p237, %s17, 1
      %s239 = smul.addr %s238, 2
      %s240 = smul.addr %s239, 8
      %s241 = scalar_lea.vmem %s6, %s240
      %p242 = scmp.lt.s32.totalorder %s17, 1
      %s243 = scalar_select %p242, %s17, 1
      %s244 = smul.addr %s243, 2
      %s245 = smul.addr %s244, 8
      %s246 = scalar_lea.vmem %s5, %s245
      %p247 = scmp.lt.s32.totalorder %s17, 1
      %s248 = scalar_select %p247, %s17, 1
      %s249 = smul.addr %s248, 2
      %s250 = smul.addr %s249, 8
      %s251 = scalar_lea.vmem %s6, %s250
      %v252 = vld [vmem:[%s246] sm:$0xff]
      %v253 = vld [vmem:[%s246 + $0x8] sm:$0xff]
      %v254 = vld [vmem:[%s4] sm:$0xf]
      %v255 = vlaneseq
      %v256 = vshrl.u32 %v255, 7
      %v257 = vsub.s32 0, %v256
      %v258 = vrot.slane %v254, %v257
      %v259 = vlaneseq
      %v260 = vshrl.u32 %v259, 7
      %v261 = vsub.s32 2, %v260
      %v262 = vrot.slane %v254, %v261
      %v263 = vlaneseq
      %v264 = vshrl.u32 %v263, 7
      %v265 = vsub.s32 0, %v264
      %v266 = vrot.slane %v258, %v265
      %v267 = vlaneseq
      %v268 = vshrl.u32 %v267, 7
      %v269 = vsub.s32 0, %v268
      %v270 = vrot.slane %v262, %v269
      %v271 = vlaneseq
      %v272 = vshrl.u32 %v271, 7
      %v273 = vsub.s32 1, %v272
      %v274 = vrot.slane %v254, %v273
      %v275 = vlaneseq
      %v276 = vshrl.u32 %v275, 7
      %v277 = vsub.s32 3, %v276
      %v278 = vrot.slane %v254, %v277
      %v279 = vlaneseq
      %v280 = vshrl.u32 %v279, 7
      %v281 = vsub.s32 1, %v280
      %v282 = vrot.slane %v274, %v281
      %v283 = vlaneseq
      %v284 = vshrl.u32 %v283, 7
      %v285 = vsub.s32 1, %v284
      %v286 = vrot.slane %v278, %v285
      %287 = vrot.lane.b32.xlu0 %v252, 17
      %v288 = vpop.permute.xlu0 %287
      %289 = vrot.lane.b32.xlu0 %v253, 17
      %v290 = vpop.permute.xlu0 %289
      %v291 = vlaneseq
      %v292 = vand.u32 %v291, 127
      %vm293 = vcmp.lt.s32.totalorder %v292, 17
      %v294 = vsel %vm293, %v288, %v290
      %v295 = vsel %vm293, %v290, %v288
      %vm296 = vcmp.ge.s32.totalorder %v266, 1
      %vm297 = vcmp.ge.s32.totalorder %v270, 1
      %vm298 = vcmp.ge.s32.totalorder %v282, 1
      %vm299 = vcmp.ge.s32.totalorder %v286, 1
      %vm300 = vmand %vm296, %vm298
      %vm301 = vmand %vm297, %vm299
      %v302 = vsel %vm300, %v295, 0.0
      %v303 = vsel %vm301, %v294, 0.0
      %v304 = vld [vmem:[%s0] sm:$0xff]
      %305 = vrot.lane.b32.xlu0 %v252, 16
      %v306 = vpop.permute.xlu0 %305
      %307 = vrot.lane.b32.xlu0 %v253, 16
      %v308 = vpop.permute.xlu0 %307
      %vm309 = vcmp.lt.s32.totalorder %v292, 16
      %v310 = vsel %vm309, %v306, %v308
      %v311 = vsel %vm309, %v308, %v306
      %v312 = vsel %vm296, %v311, 0.0
      %v313 = vsel %vm297, %v310, 0.0
      %s314 = scalar_lea.vmem %s0, 8
      %v315 = vld [vmem:[%s314] sm:$0xff]
      %vm316 = vcmask 64512
      %v318 = vsel %vm316, %v315, 0
      %320 = vmatprep.subr.mxu0 0.0
      %321 = vmatpush1.msra.mxu0 0.0
      %322 = vmatprep.subr.mxu0 0.0
      %323 = vmatpush1.msra.mxu0 0.0
      %324 = vmatprep.subr.mxu0 0.0
      %325 = vmatpush1.msra.mxu0 0.0
      %326 = vmatprep.subr.mxu0 0.0
      %327 = vmatpush1.msra.mxu0 0.0
      %328 = vmatprep.subr.mxu0 0.0
      %329 = vmatpush1.msra.mxu0 0.0
      %330 = vmatprep.subr.mxu0 0.0
      %331 = vmatpush1.msra.mxu0 0.0
      %332 = vmatprep.subr.mxu0 0.0
      %333 = vmatpush1.msra.mxu0 0.0
      %334 = vmatprep.subr.mxu0 0.0
      %335 = vmatpush1.msra.mxu0 0.0
      %336 = vmatprep.subr.mxu0 0.0
      %337 = vmatpush1.msra.mxu0 0.0
      %338 = vmatprep.subr.mxu0 0.0
      %339 = vmatpush1.msra.mxu0 0.0
      %340 = vmatprep.subr.mxu0 0.0
      %341 = vmatpush1.msra.mxu0 0.0
      %342 = vmatprep.subr.mxu0 0.0
      %343 = vmatpush1.msra.mxu0 0.0
      %344 = vmatprep.subr.mxu0 0.0
      %345 = vmatpush1.msra.mxu0 0.0
      %346 = vmatprep.subr.mxu0 0.0
      %347 = vmatpush1.msra.mxu0 0.0
      %348 = vmatprep.subr.mxu0 0.0
      %349 = vmatpush1.msra.mxu0 0.0
      %350 = vmatprep.subr.mxu0 %v313
      %351 = vmatpush1.msra.mxu0 %v312
      %352 = vmatprep.subr.mxu0 0.0
      %353 = vmatpush2.msra.mxu0 0.0
      %354 = vmatprep.subr.mxu0 0.0
      %355 = vmatpush2.msra.mxu0 0.0
      %356 = vmatprep.subr.mxu0 0.0
      %357 = vmatpush2.msra.mxu0 0.0
      %358 = vmatprep.subr.mxu0 0.0
      %359 = vmatpush2.msra.mxu0 0.0
      %360 = vmatprep.subr.mxu0 0.0
      %361 = vmatpush2.msra.mxu0 0.0
      %362 = vmatprep.subr.mxu0 0.0
      %363 = vmatpush2.msra.mxu0 0.0
      %364 = vmatprep.subr.mxu0 0.0
      %365 = vmatpush2.msra.mxu0 0.0
      %366 = vmatprep.subr.mxu0 0.0
      %367 = vmatpush2.msra.mxu0 0.0
      %368 = vmatprep.subr.mxu0 0.0
      %369 = vmatpush2.msra.mxu0 0.0
      %370 = vmatprep.subr.mxu0 0.0
      %371 = vmatpush2.msra.mxu0 0.0
      %372 = vmatprep.subr.mxu0 0.0
      %373 = vmatpush2.msra.mxu0 0.0
      %374 = vmatprep.subr.mxu0 0.0
      %375 = vmatpush2.msra.mxu0 0.0
      %376 = vmatprep.subr.mxu0 0.0
      %377 = vmatpush2.msra.mxu0 0.0
      %378 = vmatprep.subr.mxu0 0.0
      %379 = vmatpush2.msra.mxu0 0.0
      %380 = vmatprep.subr.mxu0 0.0
      %381 = vmatpush2.msra.mxu0 0.0
      %382 = vmatprep.subr.mxu0 0.0
      %383 = vmatpush2.msra.mxu0 0.0
      %384 = vmatprep.mubr.f32.mxu0 0.0
      %385 = vmatmul.mubr.f32.gmra.mxu0 %v318
      %v386 = vpop.f32.mrf.mxu0
      %v387 = vadd.f32 0.0, %v386
      %v388 = vpop.f32.mrf.mxu0
      %v389 = vadd.f32 0.0, %v388
      %390 = vdwg.mxu0
      %v392 = vsel %vm316, %v304, 0
      %394 = vmatprep.subr.mxu0 0.0
      %395 = vmatpush1.msra.mxu0 0.0
      %396 = vmatprep.subr.mxu0 0.0
      %397 = vmatpush1.msra.mxu0 0.0
      %398 = vmatprep.subr.mxu0 0.0
      %399 = vmatpush1.msra.mxu0 0.0
      %400 = vmatprep.subr.mxu0 0.0
      %401 = vmatpush1.msra.mxu0 0.0
      %402 = vmatprep.subr.mxu0 0.0
      %403 = vmatpush1.msra.mxu0 0.0
      %404 = vmatprep.subr.mxu0 0.0
      %405 = vmatpush1.msra.mxu0 0.0
      %406 = vmatprep.subr.mxu0 0.0
      %407 = vmatpush1.msra.mxu0 0.0
      %408 = vmatprep.subr.mxu0 0.0
      %409 = vmatpush1.msra.mxu0 0.0
      %410 = vmatprep.subr.mxu0 0.0
      %411 = vmatpush1.msra.mxu0 0.0
      %412 = vmatprep.subr.mxu0 0.0
      %413 = vmatpush1.msra.mxu0 0.0
      %414 = vmatprep.subr.mxu0 0.0
      %415 = vmatpush1.msra.mxu0 0.0
      %416 = vmatprep.subr.mxu0 0.0
      %417 = vmatpush1.msra.mxu0 0.0
      %418 = vmatprep.subr.mxu0 0.0
      %419 = vmatpush1.msra.mxu0 0.0
      %420 = vmatprep.subr.mxu0 0.0
      %421 = vmatpush1.msra.mxu0 0.0
      %422 = vmatprep.subr.mxu0 0.0
      %423 = vmatpush1.msra.mxu0 0.0
      %424 = vmatprep.subr.mxu0 %v303
      %425 = vmatpush1.msra.mxu0 %v302
      %426 = vmatprep.subr.mxu0 0.0
      %427 = vmatpush2.msra.mxu0 0.0
      %428 = vmatprep.subr.mxu0 0.0
      %429 = vmatpush2.msra.mxu0 0.0
      %430 = vmatprep.subr.mxu0 0.0
      %431 = vmatpush2.msra.mxu0 0.0
      %432 = vmatprep.subr.mxu0 0.0
      %433 = vmatpush2.msra.mxu0 0.0
      %434 = vmatprep.subr.mxu0 0.0
      %435 = vmatpush2.msra.mxu0 0.0
      %436 = vmatprep.subr.mxu0 0.0
      %437 = vmatpush2.msra.mxu0 0.0
      %438 = vmatprep.subr.mxu0 0.0
      %439 = vmatpush2.msra.mxu0 0.0
      %440 = vmatprep.subr.mxu0 0.0
      %441 = vmatpush2.msra.mxu0 0.0
      %442 = vmatprep.subr.mxu0 0.0
      %443 = vmatpush2.msra.mxu0 0.0
      %444 = vmatprep.subr.mxu0 0.0
      %445 = vmatpush2.msra.mxu0 0.0
      %446 = vmatprep.subr.mxu0 0.0
      %447 = vmatpush2.msra.mxu0 0.0
      %448 = vmatprep.subr.mxu0 0.0
      %449 = vmatpush2.msra.mxu0 0.0
      %450 = vmatprep.subr.mxu0 0.0
      %451 = vmatpush2.msra.mxu0 0.0
      %452 = vmatprep.subr.mxu0 0.0
      %453 = vmatpush2.msra.mxu0 0.0
      %454 = vmatprep.subr.mxu0 0.0
      %455 = vmatpush2.msra.mxu0 0.0
      %456 = vmatprep.subr.mxu0 0.0
      %457 = vmatpush2.msra.mxu0 0.0
      %458 = vmatprep.mubr.f32.mxu0 0.0
      %459 = vmatmul.mubr.f32.gmra.mxu0 %v392
      %v460 = vpop.f32.mrf.mxu0
      %v461 = vadd.f32 %v387, %v460
      %v462 = vpop.f32.mrf.mxu0
      %v463 = vadd.f32 %v389, %v462
      %464 = vdwg.mxu0
      %465 = vrot.lane.b32.xlu0 %v252, 15
      %v466 = vpop.permute.xlu0 %465
      %467 = vrot.lane.b32.xlu0 %v253, 15
      %v468 = vpop.permute.xlu0 %467
      %vm469 = vcmp.lt.s32.totalorder %v292, 15
      %v470 = vsel %vm469, %v466, %v468
      %v471 = vsel %vm469, %v468, %v466
      %vm472 = vcmp.lt.s32.totalorder %v282, 15
      %vm473 = vcmp.lt.s32.totalorder %v286, 15
      %vm474 = vmand %vm296, %vm472
      %vm475 = vmand %vm297, %vm473
      %v476 = vsel %vm474, %v471, 0.0
      %v477 = vsel %vm475, %v470, 0.0
      %s478 = scalar_lea.vmem %s0, 16
      %v479 = vld [vmem:[%s478] sm:$0xff]
      %v481 = vsel %vm316, %v479, 0
      %483 = vmatprep.subr.mxu0 0.0
      %484 = vmatpush1.msra.mxu0 0.0
      %485 = vmatprep.subr.mxu0 0.0
      %486 = vmatpush1.msra.mxu0 0.0
      %487 = vmatprep.subr.mxu0 0.0
      %488 = vmatpush1.msra.mxu0 0.0
      %489 = vmatprep.subr.mxu0 0.0
      %490 = vmatpush1.msra.mxu0 0.0
      %491 = vmatprep.subr.mxu0 0.0
      %492 = vmatpush1.msra.mxu0 0.0
      %493 = vmatprep.subr.mxu0 0.0
      %494 = vmatpush1.msra.mxu0 0.0
      %495 = vmatprep.subr.mxu0 0.0
      %496 = vmatpush1.msra.mxu0 0.0
      %497 = vmatprep.subr.mxu0 0.0
      %498 = vmatpush1.msra.mxu0 0.0
      %499 = vmatprep.subr.mxu0 0.0
      %500 = vmatpush1.msra.mxu0 0.0
      %501 = vmatprep.subr.mxu0 0.0
      %502 = vmatpush1.msra.mxu0 0.0
      %503 = vmatprep.subr.mxu0 0.0
      %504 = vmatpush1.msra.mxu0 0.0
      %505 = vmatprep.subr.mxu0 0.0
      %506 = vmatpush1.msra.mxu0 0.0
      %507 = vmatprep.subr.mxu0 0.0
      %508 = vmatpush1.msra.mxu0 0.0
      %509 = vmatprep.subr.mxu0 0.0
      %510 = vmatpush1.msra.mxu0 0.0
      %511 = vmatprep.subr.mxu0 0.0
      %512 = vmatpush1.msra.mxu0 0.0
      %513 = vmatprep.subr.mxu0 %v477
      %514 = vmatpush1.msra.mxu0 %v476
      %515 = vmatprep.subr.mxu0 0.0
      %516 = vmatpush2.msra.mxu0 0.0
      %517 = vmatprep.subr.mxu0 0.0
      %518 = vmatpush2.msra.mxu0 0.0
      %519 = vmatprep.subr.mxu0 0.0
      %520 = vmatpush2.msra.mxu0 0.0
      %521 = vmatprep.subr.mxu0 0.0
      %522 = vmatpush2.msra.mxu0 0.0
      %523 = vmatprep.subr.mxu0 0.0
      %524 = vmatpush2.msra.mxu0 0.0
      %525 = vmatprep.subr.mxu0 0.0
      %526 = vmatpush2.msra.mxu0 0.0
      %527 = vmatprep.subr.mxu0 0.0
      %528 = vmatpush2.msra.mxu0 0.0
      %529 = vmatprep.subr.mxu0 0.0
      %530 = vmatpush2.msra.mxu0 0.0
      %531 = vmatprep.subr.mxu0 0.0
      %532 = vmatpush2.msra.mxu0 0.0
      %533 = vmatprep.subr.mxu0 0.0
      %534 = vmatpush2.msra.mxu0 0.0
      %535 = vmatprep.subr.mxu0 0.0
      %536 = vmatpush2.msra.mxu0 0.0
      %537 = vmatprep.subr.mxu0 0.0
      %538 = vmatpush2.msra.mxu0 0.0
      %539 = vmatprep.subr.mxu0 0.0
      %540 = vmatpush2.msra.mxu0 0.0
      %541 = vmatprep.subr.mxu0 0.0
      %542 = vmatpush2.msra.mxu0 0.0
      %543 = vmatprep.subr.mxu0 0.0
      %544 = vmatpush2.msra.mxu0 0.0
      %545 = vmatprep.subr.mxu0 0.0
      %546 = vmatpush2.msra.mxu0 0.0
      %547 = vmatprep.mubr.f32.mxu0 0.0
      %548 = vmatmul.mubr.f32.gmra.mxu0 %v481
      %v549 = vpop.f32.mrf.mxu0
      %v550 = vadd.f32 0.0, %v549
      %v551 = vpop.f32.mrf.mxu0
      %v552 = vadd.f32 0.0, %v551
      %553 = vdwg.mxu0
      %v554 = vadd.f32 %v461, %v550
      %v555 = vadd.f32 %v463, %v552
      %556 = vrot.lane.b32.xlu0 %v252, 1
      %v557 = vpop.permute.xlu0 %556
      %558 = vrot.lane.b32.xlu0 %v253, 1
      %v559 = vpop.permute.xlu0 %558
      %vm560 = vcmp.lt.s32.totalorder %v292, 1
      %v561 = vsel %vm560, %v557, %v559
      %v562 = vsel %vm560, %v559, %v557
      %v563 = vsel %vm298, %v562, 0.0
      %v564 = vsel %vm299, %v561, 0.0
      %s565 = scalar_lea.vmem %s0, 24
      %v566 = vld [vmem:[%s565] sm:$0xff]
      %v568 = vsel %vm316, %v566, 0
      %570 = vmatprep.subr.mxu0 0.0
      %571 = vmatpush1.msra.mxu0 0.0
      %572 = vmatprep.subr.mxu0 0.0
      %573 = vmatpush1.msra.mxu0 0.0
      %574 = vmatprep.subr.mxu0 0.0
      %575 = vmatpush1.msra.mxu0 0.0
      %576 = vmatprep.subr.mxu0 0.0
      %577 = vmatpush1.msra.mxu0 0.0
      %578 = vmatprep.subr.mxu0 0.0
      %579 = vmatpush1.msra.mxu0 0.0
      %580 = vmatprep.subr.mxu0 0.0
      %581 = vmatpush1.msra.mxu0 0.0
      %582 = vmatprep.subr.mxu0 0.0
      %583 = vmatpush1.msra.mxu0 0.0
      %584 = vmatprep.subr.mxu0 0.0
      %585 = vmatpush1.msra.mxu0 0.0
      %586 = vmatprep.subr.mxu0 0.0
      %587 = vmatpush1.msra.mxu0 0.0
      %588 = vmatprep.subr.mxu0 0.0
      %589 = vmatpush1.msra.mxu0 0.0
      %590 = vmatprep.subr.mxu0 0.0
      %591 = vmatpush1.msra.mxu0 0.0
      %592 = vmatprep.subr.mxu0 0.0
      %593 = vmatpush1.msra.mxu0 0.0
      %594 = vmatprep.subr.mxu0 0.0
      %595 = vmatpush1.msra.mxu0 0.0
      %596 = vmatprep.subr.mxu0 0.0
      %597 = vmatpush1.msra.mxu0 0.0
      %598 = vmatprep.subr.mxu0 0.0
      %599 = vmatpush1.msra.mxu0 0.0
      %600 = vmatprep.subr.mxu0 %v564
      %601 = vmatpush1.msra.mxu0 %v563
      %602 = vmatprep.subr.mxu0 0.0
      %603 = vmatpush2.msra.mxu0 0.0
      %604 = vmatprep.subr.mxu0 0.0
      %605 = vmatpush2.msra.mxu0 0.0
      %606 = vmatprep.subr.mxu0 0.0
      %607 = vmatpush2.msra.mxu0 0.0
      %608 = vmatprep.subr.mxu0 0.0
      %609 = vmatpush2.msra.mxu0 0.0
      %610 = vmatprep.subr.mxu0 0.0
      %611 = vmatpush2.msra.mxu0 0.0
      %612 = vmatprep.subr.mxu0 0.0
      %613 = vmatpush2.msra.mxu0 0.0
      %614 = vmatprep.subr.mxu0 0.0
      %615 = vmatpush2.msra.mxu0 0.0
      %616 = vmatprep.subr.mxu0 0.0
      %617 = vmatpush2.msra.mxu0 0.0
      %618 = vmatprep.subr.mxu0 0.0
      %619 = vmatpush2.msra.mxu0 0.0
      %620 = vmatprep.subr.mxu0 0.0
      %621 = vmatpush2.msra.mxu0 0.0
      %622 = vmatprep.subr.mxu0 0.0
      %623 = vmatpush2.msra.mxu0 0.0
      %624 = vmatprep.subr.mxu0 0.0
      %625 = vmatpush2.msra.mxu0 0.0
      %626 = vmatprep.subr.mxu0 0.0
      %627 = vmatpush2.msra.mxu0 0.0
      %628 = vmatprep.subr.mxu0 0.0
      %629 = vmatpush2.msra.mxu0 0.0
      %630 = vmatprep.subr.mxu0 0.0
      %631 = vmatpush2.msra.mxu0 0.0
      %632 = vmatprep.subr.mxu0 0.0
      %633 = vmatpush2.msra.mxu0 0.0
      %634 = vmatprep.mubr.f32.mxu0 0.0
      %635 = vmatmul.mubr.f32.gmra.mxu0 %v568
      %v636 = vpop.f32.mrf.mxu0
      %v637 = vadd.f32 0.0, %v636
      %v638 = vpop.f32.mrf.mxu0
      %v639 = vadd.f32 0.0, %v638
      %640 = vdwg.mxu0
      %v641 = vadd.f32 %v554, %v637
      %v642 = vadd.f32 %v555, %v639
      %s643 = scalar_lea.vmem %s0, 32
      %v644 = vld [vmem:[%s643] sm:$0xff]
      %v646 = vsel %vm316, %v644, 0
      %648 = vmatprep.subr.mxu0 0.0
      %649 = vmatpush1.msra.mxu0 0.0
      %650 = vmatprep.subr.mxu0 0.0
      %651 = vmatpush1.msra.mxu0 0.0
      %652 = vmatprep.subr.mxu0 0.0
      %653 = vmatpush1.msra.mxu0 0.0
      %654 = vmatprep.subr.mxu0 0.0
      %655 = vmatpush1.msra.mxu0 0.0
      %656 = vmatprep.subr.mxu0 0.0
      %657 = vmatpush1.msra.mxu0 0.0
      %658 = vmatprep.subr.mxu0 0.0
      %659 = vmatpush1.msra.mxu0 0.0
      %660 = vmatprep.subr.mxu0 0.0
      %661 = vmatpush1.msra.mxu0 0.0
      %662 = vmatprep.subr.mxu0 0.0
      %663 = vmatpush1.msra.mxu0 0.0
      %664 = vmatprep.subr.mxu0 0.0
      %665 = vmatpush1.msra.mxu0 0.0
      %666 = vmatprep.subr.mxu0 0.0
      %667 = vmatpush1.msra.mxu0 0.0
      %668 = vmatprep.subr.mxu0 0.0
      %669 = vmatpush1.msra.mxu0 0.0
      %670 = vmatprep.subr.mxu0 0.0
      %671 = vmatpush1.msra.mxu0 0.0
      %672 = vmatprep.subr.mxu0 0.0
      %673 = vmatpush1.msra.mxu0 0.0
      %674 = vmatprep.subr.mxu0 0.0
      %675 = vmatpush1.msra.mxu0 0.0
      %676 = vmatprep.subr.mxu0 0.0
      %677 = vmatpush1.msra.mxu0 0.0
      %678 = vmatprep.subr.mxu0 %v253
      %679 = vmatpush1.msra.mxu0 %v252
      %680 = vmatprep.subr.mxu0 0.0
      %681 = vmatpush2.msra.mxu0 0.0
      %682 = vmatprep.subr.mxu0 0.0
      %683 = vmatpush2.msra.mxu0 0.0
      %684 = vmatprep.subr.mxu0 0.0
      %685 = vmatpush2.msra.mxu0 0.0
      %686 = vmatprep.subr.mxu0 0.0
      %687 = vmatpush2.msra.mxu0 0.0
      %688 = vmatprep.subr.mxu0 0.0
      %689 = vmatpush2.msra.mxu0 0.0
      %690 = vmatprep.subr.mxu0 0.0
      %691 = vmatpush2.msra.mxu0 0.0
      %692 = vmatprep.subr.mxu0 0.0
      %693 = vmatpush2.msra.mxu0 0.0
      %694 = vmatprep.subr.mxu0 0.0
      %695 = vmatpush2.msra.mxu0 0.0
      %696 = vmatprep.subr.mxu0 0.0
      %697 = vmatpush2.msra.mxu0 0.0
      %698 = vmatprep.subr.mxu0 0.0
      %699 = vmatpush2.msra.mxu0 0.0
      %700 = vmatprep.subr.mxu0 0.0
      %701 = vmatpush2.msra.mxu0 0.0
      %702 = vmatprep.subr.mxu0 0.0
      %703 = vmatpush2.msra.mxu0 0.0
      %704 = vmatprep.subr.mxu0 0.0
      %705 = vmatpush2.msra.mxu0 0.0
      %706 = vmatprep.subr.mxu0 0.0
      %707 = vmatpush2.msra.mxu0 0.0
      %708 = vmatprep.subr.mxu0 0.0
      %709 = vmatpush2.msra.mxu0 0.0
      %710 = vmatprep.subr.mxu0 0.0
      %711 = vmatpush2.msra.mxu0 0.0
      %712 = vmatprep.mubr.f32.mxu0 0.0
      %713 = vmatmul.mubr.f32.gmra.mxu0 %v646
      %v714 = vpop.f32.mrf.mxu0
      %v715 = vadd.f32 0.0, %v714
      %v716 = vpop.f32.mrf.mxu0
      %v717 = vadd.f32 0.0, %v716
      %718 = vdwg.mxu0
      %v719 = vadd.f32 %v641, %v715
      %v720 = vadd.f32 %v642, %v717
      %721 = vrot.lane.b32.xlu0 %v252, 127
      %v722 = vpop.permute.xlu0 %721
      %723 = vrot.lane.b32.xlu0 %v253, 127
      %v724 = vpop.permute.xlu0 %723
      %vm725 = vcmp.lt.s32.totalorder %v292, 127
      %v726 = vsel %vm725, %v722, %v724
      %v727 = vsel %vm725, %v724, %v722
      %v728 = vsel %vm472, %v726, 0.0
      %v729 = vsel %vm473, %v727, 0.0
      %s730 = scalar_lea.vmem %s0, 40
      %v731 = vld [vmem:[%s730] sm:$0xff]
      %v733 = vsel %vm316, %v731, 0
      %735 = vmatprep.subr.mxu0 0.0
      %736 = vmatpush1.msra.mxu0 0.0
      %737 = vmatprep.subr.mxu0 0.0
      %738 = vmatpush1.msra.mxu0 0.0
      %739 = vmatprep.subr.mxu0 0.0
      %740 = vmatpush1.msra.mxu0 0.0
      %741 = vmatprep.subr.mxu0 0.0
      %742 = vmatpush1.msra.mxu0 0.0
      %743 = vmatprep.subr.mxu0 0.0
      %744 = vmatpush1.msra.mxu0 0.0
      %745 = vmatprep.subr.mxu0 0.0
      %746 = vmatpush1.msra.mxu0 0.0
      %747 = vmatprep.subr.mxu0 0.0
      %748 = vmatpush1.msra.mxu0 0.0
      %749 = vmatprep.subr.mxu0 0.0
      %750 = vmatpush1.msra.mxu0 0.0
      %751 = vmatprep.subr.mxu0 0.0
      %752 = vmatpush1.msra.mxu0 0.0
      %753 = vmatprep.subr.mxu0 0.0
      %754 = vmatpush1.msra.mxu0 0.0
      %755 = vmatprep.subr.mxu0 0.0
      %756 = vmatpush1.msra.mxu0 0.0
      %757 = vmatprep.subr.mxu0 0.0
      %758 = vmatpush1.msra.mxu0 0.0
      %759 = vmatprep.subr.mxu0 0.0
      %760 = vmatpush1.msra.mxu0 0.0
      %761 = vmatprep.subr.mxu0 0.0
      %762 = vmatpush1.msra.mxu0 0.0
      %763 = vmatprep.subr.mxu0 0.0
      %764 = vmatpush1.msra.mxu0 0.0
      %765 = vmatprep.subr.mxu0 %v729
      %766 = vmatpush1.msra.mxu0 %v728
      %767 = vmatprep.subr.mxu0 0.0
      %768 = vmatpush2.msra.mxu0 0.0
      %769 = vmatprep.subr.mxu0 0.0
      %770 = vmatpush2.msra.mxu0 0.0
      %771 = vmatprep.subr.mxu0 0.0
      %772 = vmatpush2.msra.mxu0 0.0
      %773 = vmatprep.subr.mxu0 0.0
      %774 = vmatpush2.msra.mxu0 0.0
      %775 = vmatprep.subr.mxu0 0.0
      %776 = vmatpush2.msra.mxu0 0.0
      %777 = vmatprep.subr.mxu0 0.0
      %778 = vmatpush2.msra.mxu0 0.0
      %779 = vmatprep.subr.mxu0 0.0
      %780 = vmatpush2.msra.mxu0 0.0
      %781 = vmatprep.subr.mxu0 0.0
      %782 = vmatpush2.msra.mxu0 0.0
      %783 = vmatprep.subr.mxu0 0.0
      %784 = vmatpush2.msra.mxu0 0.0
      %785 = vmatprep.subr.mxu0 0.0
      %786 = vmatpush2.msra.mxu0 0.0
      %787 = vmatprep.subr.mxu0 0.0
      %788 = vmatpush2.msra.mxu0 0.0
      %789 = vmatprep.subr.mxu0 0.0
      %790 = vmatpush2.msra.mxu0 0.0
      %791 = vmatprep.subr.mxu0 0.0
      %792 = vmatpush2.msra.mxu0 0.0
      %793 = vmatprep.subr.mxu0 0.0
      %794 = vmatpush2.msra.mxu0 0.0
      %795 = vmatprep.subr.mxu0 0.0
      %796 = vmatpush2.msra.mxu0 0.0
      %797 = vmatprep.subr.mxu0 0.0
      %798 = vmatpush2.msra.mxu0 0.0
      %799 = vmatprep.mubr.f32.mxu0 0.0
      %800 = vmatmul.mubr.f32.gmra.mxu0 %v733
      %v801 = vpop.f32.mrf.mxu0
      %v802 = vadd.f32 0.0, %v801
      %v803 = vpop.f32.mrf.mxu0
      %v804 = vadd.f32 0.0, %v803
      %805 = vdwg.mxu0
      %v806 = vadd.f32 %v719, %v802
      %v807 = vadd.f32 %v720, %v804
      %808 = vrot.lane.b32.xlu0 %v252, 113
      %v809 = vpop.permute.xlu0 %808
      %810 = vrot.lane.b32.xlu0 %v253, 113
      %v811 = vpop.permute.xlu0 %810
      %vm812 = vcmp.lt.s32.totalorder %v292, 113
      %v813 = vsel %vm812, %v809, %v811
      %v814 = vsel %vm812, %v811, %v809
      %vm815 = vcmp.lt.s32.totalorder %v266, 15
      %vm816 = vcmp.lt.s32.totalorder %v270, 15
      %vm817 = vmand %vm815, %vm298
      %vm818 = vmand %vm816, %vm299
      %v819 = vsel %vm817, %v813, 0.0
      %v820 = vsel %vm818, %v814, 0.0
      %s821 = scalar_lea.vmem %s0, 48
      %v822 = vld [vmem:[%s821] sm:$0xff]
      %v824 = vsel %vm316, %v822, 0
      %826 = vmatprep.subr.mxu0 0.0
      %827 = vmatpush1.msra.mxu0 0.0
      %828 = vmatprep.subr.mxu0 0.0
      %829 = vmatpush1.msra.mxu0 0.0
      %830 = vmatprep.subr.mxu0 0.0
      %831 = vmatpush1.msra.mxu0 0.0
      %832 = vmatprep.subr.mxu0 0.0
      %833 = vmatpush1.msra.mxu0 0.0
      %834 = vmatprep.subr.mxu0 0.0
      %835 = vmatpush1.msra.mxu0 0.0
      %836 = vmatprep.subr.mxu0 0.0
      %837 = vmatpush1.msra.mxu0 0.0
      %838 = vmatprep.subr.mxu0 0.0
      %839 = vmatpush1.msra.mxu0 0.0
      %840 = vmatprep.subr.mxu0 0.0
      %841 = vmatpush1.msra.mxu0 0.0
      %842 = vmatprep.subr.mxu0 0.0
      %843 = vmatpush1.msra.mxu0 0.0
      %844 = vmatprep.subr.mxu0 0.0
      %845 = vmatpush1.msra.mxu0 0.0
      %846 = vmatprep.subr.mxu0 0.0
      %847 = vmatpush1.msra.mxu0 0.0
      %848 = vmatprep.subr.mxu0 0.0
      %849 = vmatpush1.msra.mxu0 0.0
      %850 = vmatprep.subr.mxu0 0.0
      %851 = vmatpush1.msra.mxu0 0.0
      %852 = vmatprep.subr.mxu0 0.0
      %853 = vmatpush1.msra.mxu0 0.0
      %854 = vmatprep.subr.mxu0 0.0
      %855 = vmatpush1.msra.mxu0 0.0
      %856 = vmatprep.subr.mxu0 %v820
      %857 = vmatpush1.msra.mxu0 %v819
      %858 = vmatprep.subr.mxu0 0.0
      %859 = vmatpush2.msra.mxu0 0.0
      %860 = vmatprep.subr.mxu0 0.0
      %861 = vmatpush2.msra.mxu0 0.0
      %862 = vmatprep.subr.mxu0 0.0
      %863 = vmatpush2.msra.mxu0 0.0
      %864 = vmatprep.subr.mxu0 0.0
      %865 = vmatpush2.msra.mxu0 0.0
      %866 = vmatprep.subr.mxu0 0.0
      %867 = vmatpush2.msra.mxu0 0.0
      %868 = vmatprep.subr.mxu0 0.0
      %869 = vmatpush2.msra.mxu0 0.0
      %870 = vmatprep.subr.mxu0 0.0
      %871 = vmatpush2.msra.mxu0 0.0
      %872 = vmatprep.subr.mxu0 0.0
      %873 = vmatpush2.msra.mxu0 0.0
      %874 = vmatprep.subr.mxu0 0.0
      %875 = vmatpush2.msra.mxu0 0.0
      %876 = vmatprep.subr.mxu0 0.0
      %877 = vmatpush2.msra.mxu0 0.0
      %878 = vmatprep.subr.mxu0 0.0
      %879 = vmatpush2.msra.mxu0 0.0
      %880 = vmatprep.subr.mxu0 0.0
      %881 = vmatpush2.msra.mxu0 0.0
      %882 = vmatprep.subr.mxu0 0.0
      %883 = vmatpush2.msra.mxu0 0.0
      %884 = vmatprep.subr.mxu0 0.0
      %885 = vmatpush2.msra.mxu0 0.0
      %886 = vmatprep.subr.mxu0 0.0
      %887 = vmatpush2.msra.mxu0 0.0
      %888 = vmatprep.subr.mxu0 0.0
      %889 = vmatpush2.msra.mxu0 0.0
      %890 = vmatprep.mubr.f32.mxu0 0.0
      %891 = vmatmul.mubr.f32.gmra.mxu0 %v824
      %v892 = vpop.f32.mrf.mxu0
      %v893 = vadd.f32 0.0, %v892
      %v894 = vpop.f32.mrf.mxu0
      %v895 = vadd.f32 0.0, %v894
      %896 = vdwg.mxu0
      %v897 = vadd.f32 %v806, %v893
      %v898 = vadd.f32 %v807, %v895
      %899 = vrot.lane.b32.xlu0 %v252, 112
      %v900 = vpop.permute.xlu0 %899
      %901 = vrot.lane.b32.xlu0 %v253, 112
      %v902 = vpop.permute.xlu0 %901
      %vm903 = vcmp.lt.s32.totalorder %v292, 112
      %v904 = vsel %vm903, %v900, %v902
      %v905 = vsel %vm903, %v902, %v900
      %v906 = vsel %vm815, %v904, 0.0
      %v907 = vsel %vm816, %v905, 0.0
      %s908 = scalar_lea.vmem %s0, 56
      %v909 = vld [vmem:[%s908] sm:$0xff]
      %v911 = vsel %vm316, %v909, 0
      %913 = vmatprep.subr.mxu0 0.0
      %914 = vmatpush1.msra.mxu0 0.0
      %915 = vmatprep.subr.mxu0 0.0
      %916 = vmatpush1.msra.mxu0 0.0
      %917 = vmatprep.subr.mxu0 0.0
      %918 = vmatpush1.msra.mxu0 0.0
      %919 = vmatprep.subr.mxu0 0.0
      %920 = vmatpush1.msra.mxu0 0.0
      %921 = vmatprep.subr.mxu0 0.0
      %922 = vmatpush1.msra.mxu0 0.0
      %923 = vmatprep.subr.mxu0 0.0
      %924 = vmatpush1.msra.mxu0 0.0
      %925 = vmatprep.subr.mxu0 0.0
      %926 = vmatpush1.msra.mxu0 0.0
      %927 = vmatprep.subr.mxu0 0.0
      %928 = vmatpush1.msra.mxu0 0.0
      %929 = vmatprep.subr.mxu0 0.0
      %930 = vmatpush1.msra.mxu0 0.0
      %931 = vmatprep.subr.mxu0 0.0
      %932 = vmatpush1.msra.mxu0 0.0
      %933 = vmatprep.subr.mxu0 0.0
      %934 = vmatpush1.msra.mxu0 0.0
      %935 = vmatprep.subr.mxu0 0.0
      %936 = vmatpush1.msra.mxu0 0.0
      %937 = vmatprep.subr.mxu0 0.0
      %938 = vmatpush1.msra.mxu0 0.0
      %939 = vmatprep.subr.mxu0 0.0
      %940 = vmatpush1.msra.mxu0 0.0
      %941 = vmatprep.subr.mxu0 0.0
      %942 = vmatpush1.msra.mxu0 0.0
      %943 = vmatprep.subr.mxu0 %v907
      %944 = vmatpush1.msra.mxu0 %v906
      %945 = vmatprep.subr.mxu0 0.0
      %946 = vmatpush2.msra.mxu0 0.0
      %947 = vmatprep.subr.mxu0 0.0
      %948 = vmatpush2.msra.mxu0 0.0
      %949 = vmatprep.subr.mxu0 0.0
      %950 = vmatpush2.msra.mxu0 0.0
      %951 = vmatprep.subr.mxu0 0.0
      %952 = vmatpush2.msra.mxu0 0.0
      %953 = vmatprep.subr.mxu0 0.0
      %954 = vmatpush2.msra.mxu0 0.0
      %955 = vmatprep.subr.mxu0 0.0
      %956 = vmatpush2.msra.mxu0 0.0
      %957 = vmatprep.subr.mxu0 0.0
      %958 = vmatpush2.msra.mxu0 0.0
      %959 = vmatprep.subr.mxu0 0.0
      %960 = vmatpush2.msra.mxu0 0.0
      %961 = vmatprep.subr.mxu0 0.0
      %962 = vmatpush2.msra.mxu0 0.0
      %963 = vmatprep.subr.mxu0 0.0
      %964 = vmatpush2.msra.mxu0 0.0
      %965 = vmatprep.subr.mxu0 0.0
      %966 = vmatpush2.msra.mxu0 0.0
      %967 = vmatprep.subr.mxu0 0.0
      %968 = vmatpush2.msra.mxu0 0.0
      %969 = vmatprep.subr.mxu0 0.0
      %970 = vmatpush2.msra.mxu0 0.0
      %971 = vmatprep.subr.mxu0 0.0
      %972 = vmatpush2.msra.mxu0 0.0
      %973 = vmatprep.subr.mxu0 0.0
      %974 = vmatpush2.msra.mxu0 0.0
      %975 = vmatprep.subr.mxu0 0.0
      %976 = vmatpush2.msra.mxu0 0.0
      %977 = vmatprep.mubr.f32.mxu0 0.0
      %978 = vmatmul.mubr.f32.gmra.mxu0 %v911
      %v979 = vpop.f32.mrf.mxu0
      %v980 = vadd.f32 0.0, %v979
      %v981 = vpop.f32.mrf.mxu0
      %v982 = vadd.f32 0.0, %v981
      %983 = vdwg.mxu0
      %v984 = vadd.f32 %v897, %v980
      %v985 = vadd.f32 %v898, %v982
      %986 = vrot.lane.b32.xlu0 %v252, 111
      %v987 = vpop.permute.xlu0 %986
      %988 = vrot.lane.b32.xlu0 %v253, 111
      %v989 = vpop.permute.xlu0 %988
      %vm990 = vcmp.lt.s32.totalorder %v292, 111
      %v991 = vsel %vm990, %v987, %v989
      %v992 = vsel %vm990, %v989, %v987
      %vm993 = vmand %vm815, %vm472
      %vm994 = vmand %vm816, %vm473
      %v995 = vsel %vm993, %v991, 0.0
      %v996 = vsel %vm994, %v992, 0.0
      %s997 = scalar_lea.vmem %s0, 64
      %v998 = vld [vmem:[%s997] sm:$0xff]
      %v1000 = vsel %vm316, %v998, 0
      %1002 = vmatprep.subr.mxu0 0.0
      %1003 = vmatpush1.msra.mxu0 0.0
      %1004 = vmatprep.subr.mxu0 0.0
      %1005 = vmatpush1.msra.mxu0 0.0
      %1006 = vmatprep.subr.mxu0 0.0
      %1007 = vmatpush1.msra.mxu0 0.0
      %1008 = vmatprep.subr.mxu0 0.0
      %1009 = vmatpush1.msra.mxu0 0.0
      %1010 = vmatprep.subr.mxu0 0.0
      %1011 = vmatpush1.msra.mxu0 0.0
      %1012 = vmatprep.subr.mxu0 0.0
      %1013 = vmatpush1.msra.mxu0 0.0
      %1014 = vmatprep.subr.mxu0 0.0
      %1015 = vmatpush1.msra.mxu0 0.0
      %1016 = vmatprep.subr.mxu0 0.0
      %1017 = vmatpush1.msra.mxu0 0.0
      %1018 = vmatprep.subr.mxu0 0.0
      %1019 = vmatpush1.msra.mxu0 0.0
      %1020 = vmatprep.subr.mxu0 0.0
      %1021 = vmatpush1.msra.mxu0 0.0
      %1022 = vmatprep.subr.mxu0 0.0
      %1023 = vmatpush1.msra.mxu0 0.0
      %1024 = vmatprep.subr.mxu0 0.0
      %1025 = vmatpush1.msra.mxu0 0.0
      %1026 = vmatprep.subr.mxu0 0.0
      %1027 = vmatpush1.msra.mxu0 0.0
      %1028 = vmatprep.subr.mxu0 0.0
      %1029 = vmatpush1.msra.mxu0 0.0
      %1030 = vmatprep.subr.mxu0 0.0
      %1031 = vmatpush1.msra.mxu0 0.0
      %1032 = vmatprep.subr.mxu0 %v996
      %1033 = vmatpush1.msra.mxu0 %v995
      %1034 = vmatprep.subr.mxu0 0.0
      %1035 = vmatpush2.msra.mxu0 0.0
      %1036 = vmatprep.subr.mxu0 0.0
      %1037 = vmatpush2.msra.mxu0 0.0
      %1038 = vmatprep.subr.mxu0 0.0
      %1039 = vmatpush2.msra.mxu0 0.0
      %1040 = vmatprep.subr.mxu0 0.0
      %1041 = vmatpush2.msra.mxu0 0.0
      %1042 = vmatprep.subr.mxu0 0.0
      %1043 = vmatpush2.msra.mxu0 0.0
      %1044 = vmatprep.subr.mxu0 0.0
      %1045 = vmatpush2.msra.mxu0 0.0
      %1046 = vmatprep.subr.mxu0 0.0
      %1047 = vmatpush2.msra.mxu0 0.0
      %1048 = vmatprep.subr.mxu0 0.0
      %1049 = vmatpush2.msra.mxu0 0.0
      %1050 = vmatprep.subr.mxu0 0.0
      %1051 = vmatpush2.msra.mxu0 0.0
      %1052 = vmatprep.subr.mxu0 0.0
      %1053 = vmatpush2.msra.mxu0 0.0
      %1054 = vmatprep.subr.mxu0 0.0
      %1055 = vmatpush2.msra.mxu0 0.0
      %1056 = vmatprep.subr.mxu0 0.0
      %1057 = vmatpush2.msra.mxu0 0.0
      %1058 = vmatprep.subr.mxu0 0.0
      %1059 = vmatpush2.msra.mxu0 0.0
      %1060 = vmatprep.subr.mxu0 0.0
      %1061 = vmatpush2.msra.mxu0 0.0
      %1062 = vmatprep.subr.mxu0 0.0
      %1063 = vmatpush2.msra.mxu0 0.0
      %1064 = vmatprep.subr.mxu0 0.0
      %1065 = vmatpush2.msra.mxu0 0.0
      %1066 = vmatprep.mubr.f32.mxu0 0.0
      %1067 = vmatmul.mubr.f32.gmra.mxu0 %v1000
      %v1068 = vpop.f32.mrf.mxu0
      %v1069 = vadd.f32 0.0, %v1068
      %v1070 = vpop.f32.mrf.mxu0
      %v1071 = vadd.f32 0.0, %v1070
      %1072 = vdwg.mxu0
      %v1073 = vadd.f32 %v984, %v1069
      %v1074 = vadd.f32 %v985, %v1071
      %v1075 = vld [vmem:[%s1] sm:$0xff]
      %1077 = vset.pattern.permute.xlu0 0
      %1078 = vperm.xlu0 %1077, %v1075
      %v1079 = vpop.permute.xlu0 %1078
      %v1081 = vadd.f32 %v1073, %v1079
      %v1082 = vadd.f32 %v1074, %v1079
      %v1083 = vmul.f32 %v1081, 0.5
      %v1084 = vmul.f32 %v1082, 0.5
      %v1085 = vtanh.pop %v1083
      %v1086 = vtanh.pop %v1084
      %v1087 = vmul.f32 %v1085, 0.5
      %v1088 = vmul.f32 %v1086, 0.5
      %v1089 = vadd.f32 %v1087, 0.5
      %v1090 = vadd.f32 %v1088, 0.5
      %v1091 = vmul.f32 %v1081, %v1089
      %v1092 = vmul.f32 %v1082, %v1090
      %v1093 = vld [vmem:[%s2] sm:$0xff]
      %v1094 = vld [vmem:[%s3] sm:$0xff]
      %1096 = vset.pattern.permute.xlu0 0
      %1097 = vperm.xlu0 %1096, %v1094
      %v1098 = vpop.permute.xlu0 %1097
      %v1101 = vsel %vm316, %v1093, 0
      %1103 = vmatprep.subr.mxu0 0.0
      %1104 = vmatpush1.msra.mxu0 0.0
      %1105 = vmatprep.subr.mxu0 0.0
      %1106 = vmatpush1.msra.mxu0 0.0
      %1107 = vmatprep.subr.mxu0 0.0
      %1108 = vmatpush1.msra.mxu0 0.0
      %1109 = vmatprep.subr.mxu0 0.0
      %1110 = vmatpush1.msra.mxu0 0.0
      %1111 = vmatprep.subr.mxu0 0.0
      %1112 = vmatpush1.msra.mxu0 0.0
      %1113 = vmatprep.subr.mxu0 0.0
      %1114 = vmatpush1.msra.mxu0 0.0
      %1115 = vmatprep.subr.mxu0 0.0
      %1116 = vmatpush1.msra.mxu0 0.0
      %1117 = vmatprep.subr.mxu0 0.0
      %1118 = vmatpush1.msra.mxu0 0.0
      %1119 = vmatprep.subr.mxu0 0.0
      %1120 = vmatpush1.msra.mxu0 0.0
      %1121 = vmatprep.subr.mxu0 0.0
      %1122 = vmatpush1.msra.mxu0 0.0
      %1123 = vmatprep.subr.mxu0 0.0
      %1124 = vmatpush1.msra.mxu0 0.0
      %1125 = vmatprep.subr.mxu0 0.0
      %1126 = vmatpush1.msra.mxu0 0.0
      %1127 = vmatprep.subr.mxu0 0.0
      %1128 = vmatpush1.msra.mxu0 0.0
      %1129 = vmatprep.subr.mxu0 0.0
      %1130 = vmatpush1.msra.mxu0 0.0
      %1131 = vmatprep.subr.mxu0 0.0
      %1132 = vmatpush1.msra.mxu0 0.0
      %1133 = vmatprep.subr.mxu0 %v1092
      %1134 = vmatpush1.msra.mxu0 %v1091
      %1135 = vmatprep.subr.mxu0 0.0
      %1136 = vmatpush2.msra.mxu0 0.0
      %1137 = vmatprep.subr.mxu0 0.0
      %1138 = vmatpush2.msra.mxu0 0.0
      %1139 = vmatprep.subr.mxu0 0.0
      %1140 = vmatpush2.msra.mxu0 0.0
      %1141 = vmatprep.subr.mxu0 0.0
      %1142 = vmatpush2.msra.mxu0 0.0
      %1143 = vmatprep.subr.mxu0 0.0
      %1144 = vmatpush2.msra.mxu0 0.0
      %1145 = vmatprep.subr.mxu0 0.0
      %1146 = vmatpush2.msra.mxu0 0.0
      %1147 = vmatprep.subr.mxu0 0.0
      %1148 = vmatpush2.msra.mxu0 0.0
      %1149 = vmatprep.subr.mxu0 0.0
      %1150 = vmatpush2.msra.mxu0 0.0
      %1151 = vmatprep.subr.mxu0 0.0
      %1152 = vmatpush2.msra.mxu0 0.0
      %1153 = vmatprep.subr.mxu0 0.0
      %1154 = vmatpush2.msra.mxu0 0.0
      %1155 = vmatprep.subr.mxu0 0.0
      %1156 = vmatpush2.msra.mxu0 0.0
      %1157 = vmatprep.subr.mxu0 0.0
      %1158 = vmatpush2.msra.mxu0 0.0
      %1159 = vmatprep.subr.mxu0 0.0
      %1160 = vmatpush2.msra.mxu0 0.0
      %1161 = vmatprep.subr.mxu0 0.0
      %1162 = vmatpush2.msra.mxu0 0.0
      %1163 = vmatprep.subr.mxu0 0.0
      %1164 = vmatpush2.msra.mxu0 0.0
      %1165 = vmatprep.subr.mxu0 0.0
      %1166 = vmatpush2.msra.mxu0 0.0
      %1167 = vmatprep.mubr.f32.mxu0 0.0
      %1168 = vmatmul.mubr.f32.gmra.mxu0 %v1101
      %v1169 = vpop.f32.mrf.mxu0
      %v1170 = vadd.f32 %v1098, %v1169
      %v1171 = vpop.f32.mrf.mxu0
      %v1172 = vadd.f32 %v1098, %v1171
      %1173 = vdwg.mxu0
      %v1174 = vmul.f32 %v1170, 0.5
      %v1175 = vmul.f32 %v1172, 0.5
      %v1176 = vtanh.pop %v1174
      %v1177 = vtanh.pop %v1175
      %v1178 = vmul.f32 %v1176, 0.5
      %v1179 = vmul.f32 %v1177, 0.5
      %v1180 = vadd.f32 %v1178, 0.5
      %v1181 = vadd.f32 %v1179, 0.5
      %v1182 = vmul.f32 %v1170, %v1180
      %v1183 = vmul.f32 %v1172, %v1181
      %1184 = vst [vmem:[%s251] sm:$0xff] %v1182
      %1185 = vst [vmem:[%s251 + $0x8] sm:$0xff] %v1183
      %p1186 = scmp.lt.s32.totalorder %s17, 1
      %s1187 = scalar_select %p1186, %s17, 1
      %s1188 = smul.addr %s1187, 2
      %s1189 = smul.addr %s1188, 8
      %s1190 = scalar_lea.vmem %s6, %s1189
      // Predicated region
      $region45: #{sppcspc_pallas.5} parent=43 // pred_check
        %p1191 = pneg %p166
      $region46: #{sppcspc_pallas.5} parent=43 // pred_check_branch
        %1193 = sbr.rel (%p1191) target = $region48
      $region47: #{sppcspc_pallas.5} parent=43 // pred_region
        _
      $region48: #{sppcspc_pallas.5} parent=43 // pred_fallthru
        _
    $region44: #{sppcspc_pallas.5} parent=5 // pred_fallthru
      _
    %p1194 = scmp.le.s32.totalorder 2, %s12
    // Predicated region
    $region49: #{sppcspc_pallas.5} parent=5 // pred_check
      %p1195 = pneg %p1194
    $region50: #{sppcspc_pallas.5} parent=5 // pred_check_branch
      %1197 = sbr.rel (%p1195) target = $region52
    $region51: #{sppcspc_pallas.5} parent=5 // pred_region
      %s1198 = ssub.s32 %s12, 2
      // Predicated region
      $region53: #{sppcspc_pallas.5} parent=51 // pred_check
        %p1199 = pneg %p172
      $region54: #{sppcspc_pallas.5} parent=51 // pred_check_branch
        %1201 = sbr.rel (%p1199) target = $region56
      $region55: #{sppcspc_pallas.5} parent=51 // pred_region
        %p1202 = scmp.lt.s32.totalorder %s18, 1
        %s1203 = scalar_select %p1202, %s18, 1
        %s1204 = smul.addr %s1203, 2
        %s1205 = smul.addr %s1204, 8
        %s1206 = scalar_lea.vmem %s6, %s1205
      $region56: #{sppcspc_pallas.5} parent=51 // pred_fallthru
        _
    $region52: #{sppcspc_pallas.5} parent=5 // pred_fallthru
      _
  $region6: #{sppcspc_pallas.5} parent=0 // loop_footer
    %s16 = sadd.s32 1, %s12
  $region7: #{sppcspc_pallas.5} parent=0 // loop_footer_branch
    %11 = sbr.rel target = $region3
  $region8: #{sppcspc_pallas.5} parent=0 // loop_exit
    _

// kernel: sppcspc_pallas.6
$region0: #{sppcspc_pallas.6}
  #allocation0 [shape = 'u32[]', space=smem, size = 0x4, offset = 0x4, fixed_abs, tag = 'smem constant byte address 0x4 - core index']
  #allocation1 [shape = 'u32[144,128]{1,0:T(1,128)}', space=vmem, size = 0x12000, scoped, tag = 'internal scratch']
  %s0 = inlined_call_operand.vmem [shape: f32[4,8,8], index: 0, kind: input, shape index: {}]
  %s1 = inlined_call_operand.vmem [shape: f32[8,1], index: 1, kind: input, shape index: {}]
  %s2 = inlined_call_operand.vmem [shape: s32[2,256], index: 2, kind: input, shape index: {}]
  %s3 = inlined_call_operand.vmem [shape: f32[2,8,256], index: 3, kind: input, shape index: {}]
  %s4 = inlined_call_operand.vmem [shape: f32[2,8,256], index: 4, kind: output, shape index: {}]
  %s5 = sld [smem:[#allocation0]]
  $region49: #{sppcspc_pallas.6} parent=0
    _
  %s7 = ssub.s32 1, %s5
  %s8 = scalar_select 0, %s7, %s5
  loop: start=0, step=1, limit=4
  $region2: #{sppcspc_pallas.6} parent=0 // loop_pre_header
    _
  $region3: #{sppcspc_pallas.6} parent=0 // loop_header
    %s10 = sphi 0, %s14
    %p11 = scmp.ge.s32.totalorder %s10, 4
    %s18 = sphi 0, %s18
    %s20 = sphi 0, %s18
    %s21 = sphi 0, %s20
    %s35 = sphi 0, %s21
    %s39 = sphi 0, %s39
    %s41 = sphi 0, %s39
    %s42 = sphi 0, %s41
    %s56 = sphi 0, %s42
    %s60 = sphi 0, %s60
    %s62 = sphi 0, %s60
    %s63 = sphi 0, %s62
    %s77 = sphi 0, %s63
    %s83 = sphi 0, %s85
    %s86 = sphi 0, %s83
    %s87 = sphi 0, %s86
    %s103 = sphi 0, %s87
    %s109 = sphi 0, %s111
    %s112 = sphi 0, %s109
    %s113 = sphi 0, %s112
    %s129 = sphi 0, %s113
  $region4: #{sppcspc_pallas.6} parent=0 // loop_header_branch
    %13 = sbr.rel (%p11) target = $region8
  $region5: #{sppcspc_pallas.6} parent=0 // loop_body
    %s15 = ssub.s32 %s10, 1
    %s16 = ssub.s32 %s10, 2
    %s17 = sadd.s32 %s10, 1
    %s19 = sadd.s32 %s18, 1
    %p22 = scmp.eq.s32.totalorder %s10, 1
    %p23 = scmp.ne.s32.totalorder %s18, %s20
    %p24 = scmp.eq.s32.totalorder %s10, 0
    %p25 = por %p23, %p24
    %p26 = scmp.ne.s32.totalorder %s18, %s20
    %p27 = scmp.eq.s32.totalorder %s15, 1
    %p28 = por %p26, %p27
    %p29 = scmp.ne.s32.totalorder %s20, %s21
    %p30 = scmp.eq.s32.totalorder %s15, 0
    %p31 = por %p29, %p30
    %p32 = scmp.ne.s32.totalorder %s20, %s21
    %p33 = scmp.eq.s32.totalorder %s16, 1
    %p34 = por %p32, %p33
    %p36 = scmp.ne.s32.totalorder %s21, %s35
    %p37 = scmp.eq.s32.totalorder %s16, 0
    %p38 = por %p36, %p37
    %s40 = sadd.s32 %s39, 1
    %p43 = scmp.eq.s32.totalorder %s10, 1
    %p44 = scmp.ne.s32.totalorder %s39, %s41
    %p45 = scmp.eq.s32.totalorder %s10, 0
    %p46 = por %p44, %p45
    %p47 = scmp.ne.s32.totalorder %s39, %s41
    %p48 = scmp.eq.s32.totalorder %s15, 1
    %p49 = por %p47, %p48
    %p50 = scmp.ne.s32.totalorder %s41, %s42
    %p51 = scmp.eq.s32.totalorder %s15, 0
    %p52 = por %p50, %p51
    %p53 = scmp.ne.s32.totalorder %s41, %s42
    %p54 = scmp.eq.s32.totalorder %s16, 1
    %p55 = por %p53, %p54
    %p57 = scmp.ne.s32.totalorder %s42, %s56
    %p58 = scmp.eq.s32.totalorder %s16, 0
    %p59 = por %p57, %p58
    %s61 = sadd.s32 %s60, 1
    %p64 = scmp.eq.s32.totalorder %s10, 1
    %p65 = scmp.ne.s32.totalorder %s60, %s62
    %p66 = scmp.eq.s32.totalorder %s10, 0
    %p67 = por %p65, %p66
    %p68 = scmp.ne.s32.totalorder %s60, %s62
    %p69 = scmp.eq.s32.totalorder %s15, 1
    %p70 = por %p68, %p69
    %p71 = scmp.ne.s32.totalorder %s62, %s63
    %p72 = scmp.eq.s32.totalorder %s15, 0
    %p73 = por %p71, %p72
    %p74 = scmp.ne.s32.totalorder %s62, %s63
    %p75 = scmp.eq.s32.totalorder %s16, 1
    %p76 = por %p74, %p75
    %p78 = scmp.ne.s32.totalorder %s63, %s77
    %p79 = scmp.eq.s32.totalorder %s16, 0
    %p80 = por %p78, %p79
    %s81 = ssub.s32 %s10, %s17
    %p82 = scmp.eq.s32.totalorder %s81, 0
    %s84 = sadd.s32 %s83, 1
    %s85 = scalar_select %p82, %s83, %s84
    %p88 = pneg %p82
    %p89 = scmp.eq.s32.totalorder %s10, 1
    %p90 = por %p88, %p89
    %p91 = scmp.ne.s32.totalorder %s83, %s86
    %p92 = scmp.eq.s32.totalorder %s10, 0
    %p93 = por %p91, %p92
    %p94 = scmp.ne.s32.totalorder %s83, %s86
    %p95 = scmp.eq.s32.totalorder %s15, 1
    %p96 = por %p94, %p95
    %p97 = scmp.ne.s32.totalorder %s86, %s87
    %p98 = scmp.eq.s32.totalorder %s15, 0
    %p99 = por %p97, %p98
    %p100 = scmp.ne.s32.totalorder %s86, %s87
    %p101 = scmp.eq.s32.totalorder %s16, 1
    %p102 = por %p100, %p101
    %p104 = scmp.ne.s32.totalorder %s87, %s103
    %p105 = scmp.eq.s32.totalorder %s16, 0
    %p106 = por %p104, %p105
    %s107 = ssub.s32 %s10, %s17
    %p108 = scmp.eq.s32.totalorder %s107, 0
    %s110 = sadd.s32 %s109, 1
    %s111 = scalar_select %p108, %s109, %s110
    %p114 = pneg %p108
    %p115 = scmp.eq.s32.totalorder %s10, 1
    %p116 = por %p114, %p115
    %p117 = scmp.ne.s32.totalorder %s109, %s112
    %p118 = scmp.eq.s32.totalorder %s10, 0
    %p119 = por %p117, %p118
    %p120 = scmp.ne.s32.totalorder %s109, %s112
    %p121 = scmp.eq.s32.totalorder %s15, 1
    %p122 = por %p120, %p121
    %p123 = scmp.ne.s32.totalorder %s112, %s113
    %p124 = scmp.eq.s32.totalorder %s15, 0
    %p125 = por %p123, %p124
    %p126 = scmp.ne.s32.totalorder %s112, %s113
    %p127 = scmp.eq.s32.totalorder %s16, 1
    %p128 = por %p126, %p127
    %p130 = scmp.ne.s32.totalorder %s113, %s129
    %p131 = scmp.eq.s32.totalorder %s16, 0
    %p132 = por %p130, %p131
    %p133 = scmp.le.s32.totalorder 1, %s10
    %p134 = scmp.lt.s32.totalorder %s10, 3
    %p135 = pnand %p133, %p134
    %p136 = pneg %p135
    // Predicated region
    $region9: #{sppcspc_pallas.6} parent=5 // pred_check
      _
    $region10: #{sppcspc_pallas.6} parent=5 // pred_check_branch
      %138 = sbr.rel (%p135) target = $region12
    $region11: #{sppcspc_pallas.6} parent=5 // pred_region
      %s139 = ssub.s32 %s10, 1
      // Predicated region
      $region13: #{sppcspc_pallas.6} parent=11 // pred_check
        %p140 = pneg %p31
      $region14: #{sppcspc_pallas.6} parent=11 // pred_check_branch
        %142 = sbr.rel (%p140) target = $region16
      $region15: #{sppcspc_pallas.6} parent=11 // pred_region
        _
      $region16: #{sppcspc_pallas.6} parent=11 // pred_fallthru
        _
      // Predicated region
      $region17: #{sppcspc_pallas.6} parent=11 // pred_check
        %p143 = pneg %p52
      $region18: #{sppcspc_pallas.6} parent=11 // pred_check_branch
        %145 = sbr.rel (%p143) target = $region20
      $region19: #{sppcspc_pallas.6} parent=11 // pred_region
        _
      $region20: #{sppcspc_pallas.6} parent=11 // pred_fallthru
        _
      // Predicated region
      $region21: #{sppcspc_pallas.6} parent=11 // pred_check
        %p146 = pneg %p73
      $region22: #{sppcspc_pallas.6} parent=11 // pred_check_branch
        %148 = sbr.rel (%p146) target = $region24
      $region23: #{sppcspc_pallas.6} parent=11 // pred_region
        _
      $region24: #{sppcspc_pallas.6} parent=11 // pred_fallthru
        _
    $region12: #{sppcspc_pallas.6} parent=5 // pred_fallthru
      _
    %p149 = scmp.lt.s32.totalorder %s10, 2
    // Predicated region
    $region25: #{sppcspc_pallas.6} parent=5 // pred_check
      %p150 = pneg %p149
    $region26: #{sppcspc_pallas.6} parent=5 // pred_check_branch
      %152 = sbr.rel (%p150) target = $region28
    $region27: #{sppcspc_pallas.6} parent=5 // pred_region
      // Predicated region
      $region29: #{sppcspc_pallas.6} parent=27 // pred_check
        %p153 = pneg %p93
      $region30: #{sppcspc_pallas.6} parent=27 // pred_check_branch
        %155 = sbr.rel (%p153) target = $region32
      $region31: #{sppcspc_pallas.6} parent=27 // pred_region
        %p156 = scmp.lt.s32.totalorder %s10, 1
        %s157 = scalar_select %p156, %s10, 1
        %s158 = smul.addr %s157, 2
        %s159 = smul.addr %s158, 8
        %s160 = scalar_lea.vmem %s3, %s159
      $region32: #{sppcspc_pallas.6} parent=27 // pred_fallthru
        _
    $region28: #{sppcspc_pallas.6} parent=5 // pred_fallthru
      _
    %p161 = scmp.le.s32.totalorder 1, %s10
    %p162 = scmp.lt.s32.totalorder %s10, 3
    %p163 = pnand %p161, %p162
    %p164 = pneg %p163
    // Predicated region
    $region33: #{sppcspc_pallas.6} parent=5 // pred_check
      _
    $region34: #{sppcspc_pallas.6} parent=5 // pred_check_branch
      %166 = sbr.rel (%p163) target = $region36
    $region35: #{sppcspc_pallas.6} parent=5 // pred_region
      %s167 = ssub.s32 %s10, 1
      %p168 = pneg %p31
      %p169 = pneg %p28
      %p170 = pneg %p52
      %p171 = pneg %p49
      %p172 = pneg %p73
      %p173 = pneg %p70
      %p174 = scmp.lt.s32.totalorder %s15, 1
      %s175 = scalar_select %p174, %s15, 1
      %s176 = smul.addr %s175, 2
      %s177 = smul.addr %s176, 8
      %s178 = scalar_lea.vmem %s3, %s177
      %p179 = pneg %p99
      %p180 = pneg %p96
      %p181 = pneg %p125
      %p182 = pneg %p122
      %p183 = scmp.lt.s32.totalorder %s15, 1
      %s184 = scalar_select %p183, %s15, 1
      %s185 = smul.addr %s184, 2
      %s186 = smul.addr %s185, 8
      %s187 = scalar_lea.vmem %s4, %s186
      %p188 = scmp.lt.s32.totalorder %s15, 1
      %s189 = scalar_select %p188, %s15, 1
      %s190 = smul.addr %s189, 2
      %s191 = smul.addr %s190, 8
      %s192 = scalar_lea.vmem %s3, %s191
      %p193 = scmp.lt.s32.totalorder %s15, 1
      %s194 = scalar_select %p193, %s15, 1
      %s195 = smul.addr %s194, 2
      %s196 = smul.addr %s195, 8
      %s197 = scalar_lea.vmem %s4, %s196
      %v198 = vld [vmem:[%s192] sm:$0xff]
      %v199 = vld [vmem:[%s192 + $0x8] sm:$0xff]
      %v200 = vld [vmem:[%s2] sm:$0xf]
      %v201 = vlaneseq
      %v202 = vshrl.u32 %v201, 7
      %v203 = vsub.s32 0, %v202
      %v204 = vrot.slane %v200, %v203
      %v205 = vlaneseq
      %v206 = vshrl.u32 %v205, 7
      %v207 = vsub.s32 2, %v206
      %v208 = vrot.slane %v200, %v207
      %v209 = vlaneseq
      %v210 = vshrl.u32 %v209, 7
      %v211 = vsub.s32 0, %v210
      %v212 = vrot.slane %v204, %v211
      %v213 = vlaneseq
      %v214 = vshrl.u32 %v213, 7
      %v215 = vsub.s32 0, %v214
      %v216 = vrot.slane %v208, %v215
      %v217 = vlaneseq
      %v218 = vshrl.u32 %v217, 7
      %v219 = vsub.s32 1, %v218
      %v220 = vrot.slane %v200, %v219
      %v221 = vlaneseq
      %v222 = vshrl.u32 %v221, 7
      %v223 = vsub.s32 3, %v222
      %v224 = vrot.slane %v200, %v223
      %v225 = vlaneseq
      %v226 = vshrl.u32 %v225, 7
      %v227 = vsub.s32 1, %v226
      %v228 = vrot.slane %v220, %v227
      %v229 = vlaneseq
      %v230 = vshrl.u32 %v229, 7
      %v231 = vsub.s32 1, %v230
      %v232 = vrot.slane %v224, %v231
      %v233 = vld [vmem:[%s0] sm:$0xff]
      %234 = vrot.lane.b32.xlu0 %v198, 2
      %v235 = vpop.permute.xlu0 %234
      %236 = vrot.lane.b32.xlu0 %v199, 2
      %v237 = vpop.permute.xlu0 %236
      %v238 = vlaneseq
      %v239 = vand.u32 %v238, 127
      %vm240 = vcmp.lt.s32.totalorder %v239, 2
      %v241 = vsel %vm240, %v235, %v237
      %v242 = vsel %vm240, %v237, %v235
      %vm243 = vcmp.ge.s32.totalorder %v228, 2
      %vm244 = vcmp.ge.s32.totalorder %v232, 2
      %v245 = vsel %vm243, %v242, -inf
      %v246 = vsel %vm244, %v241, -inf
      %v247 = vmax.f32 %v198, %v245
      %v248 = vmax.f32 %v199, %v246
      %249 = vrot.lane.b32.xlu0 %v198, 1
      %v250 = vpop.permute.xlu0 %249
      %251 = vrot.lane.b32.xlu0 %v199, 1
      %v252 = vpop.permute.xlu0 %251
      %vm253 = vcmp.lt.s32.totalorder %v239, 1
      %v254 = vsel %vm253, %v250, %v252
      %v255 = vsel %vm253, %v252, %v250
      %vm256 = vcmp.ge.s32.totalorder %v228, 1
      %vm257 = vcmp.ge.s32.totalorder %v232, 1
      %v258 = vsel %vm256, %v255, -inf
      %v259 = vsel %vm257, %v254, -inf
      %v260 = vmax.f32 %v247, %v258
      %v261 = vmax.f32 %v248, %v259
      %262 = vrot.lane.b32.xlu0 %v198, 127
      %v263 = vpop.permute.xlu0 %262
      %264 = vrot.lane.b32.xlu0 %v199, 127
      %v265 = vpop.permute.xlu0 %264
      %vm266 = vcmp.lt.s32.totalorder %v239, 127
      %v267 = vsel %vm266, %v263, %v265
      %v268 = vsel %vm266, %v265, %v263
      %vm269 = vcmp.lt.s32.totalorder %v228, 15
      %vm270 = vcmp.lt.s32.totalorder %v232, 15
      %v271 = vsel %vm269, %v267, -inf
      %v272 = vsel %vm270, %v268, -inf
      %v273 = vmax.f32 %v260, %v271
      %v274 = vmax.f32 %v261, %v272
      %275 = vrot.lane.b32.xlu0 %v198, 126
      %v276 = vpop.permute.xlu0 %275
      %277 = vrot.lane.b32.xlu0 %v199, 126
      %v278 = vpop.permute.xlu0 %277
      %vm279 = vcmp.lt.s32.totalorder %v239, 126
      %v280 = vsel %vm279, %v276, %v278
      %v281 = vsel %vm279, %v278, %v276
      %vm282 = vcmp.lt.s32.totalorder %v228, 14
      %vm283 = vcmp.lt.s32.totalorder %v232, 14
      %v284 = vsel %vm282, %v280, -inf
      %v285 = vsel %vm283, %v281, -inf
      %v286 = vmax.f32 %v273, %v284
      %v287 = vmax.f32 %v274, %v285
      %288 = vrot.lane.b32.xlu0 %v286, 32
      %v289 = vpop.permute.xlu0 %288
      %290 = vrot.lane.b32.xlu0 %v287, 32
      %v291 = vpop.permute.xlu0 %290
      %vm292 = vcmp.lt.s32.totalorder %v239, 32
      %v293 = vsel %vm292, %v289, %v291
      %v294 = vsel %vm292, %v291, %v289
      %vm295 = vcmp.ge.s32.totalorder %v212, 2
      %vm296 = vcmp.ge.s32.totalorder %v216, 2
      %v297 = vsel %vm295, %v294, -inf
      %v298 = vsel %vm296, %v293, -inf
      %v299 = vmax.f32 %v286, %v297
      %v300 = vmax.f32 %v287, %v298
      %301 = vrot.lane.b32.xlu0 %v286, 16
      %v302 = vpop.permute.xlu0 %301
      %303 = vrot.lane.b32.xlu0 %v287, 16
      %v304 = vpop.permute.xlu0 %303
      %vm305 = vcmp.lt.s32.totalorder %v239, 16
      %v306 = vsel %vm305, %v302, %v304
      %v307 = vsel %vm305, %v304, %v302
      %vm308 = vcmp.ge.s32.totalorder %v212, 1
      %vm309 = vcmp.ge.s32.totalorder %v216, 1
      %v310 = vsel %vm308, %v307, -inf
      %v311 = vsel %vm309, %v306, -inf
      %v312 = vmax.f32 %v299, %v310
      %v313 = vmax.f32 %v300, %v311
      %314 = vrot.lane.b32.xlu0 %v286, 112
      %v315 = vpop.permute.xlu0 %314
      %316 = vrot.lane.b32.xlu0 %v287, 112
      %v317 = vpop.permute.xlu0 %316
      %vm318 = vcmp.lt.s32.totalorder %v239, 112
      %v319 = vsel %vm318, %v315, %v317
      %v320 = vsel %vm318, %v317, %v315
      %vm321 = vcmp.lt.s32.totalorder %v212, 15
      %vm322 = vcmp.lt.s32.totalorder %v216, 15
      %v323 = vsel %vm321, %v319, -inf
      %v324 = vsel %vm322, %v320, -inf
      %v325 = vmax.f32 %v312, %v323
      %v326 = vmax.f32 %v313, %v324
      %327 = vrot.lane.b32.xlu0 %v286, 96
      %v328 = vpop.permute.xlu0 %327
      %329 = vrot.lane.b32.xlu0 %v287, 96
      %v330 = vpop.permute.xlu0 %329
      %vm331 = vcmp.lt.s32.totalorder %v239, 96
      %v332 = vsel %vm331, %v328, %v330
      %v333 = vsel %vm331, %v330, %v328
      %vm334 = vcmp.lt.s32.totalorder %v212, 14
      %vm335 = vcmp.lt.s32.totalorder %v216, 14
      %v336 = vsel %vm334, %v332, -inf
      %v337 = vsel %vm335, %v333, -inf
      %v338 = vmax.f32 %v325, %v336
      %v339 = vmax.f32 %v326, %v337
      %s340 = scalar_lea.vmem %s0, 8
      %v341 = vld [vmem:[%s340] sm:$0xff]
      %vm342 = vcmask 64512
      %v344 = vsel %vm342, %v341, 0
      %346 = vmatprep.subr.mxu0 0.0
      %347 = vmatpush1.msra.mxu0 0.0
      %348 = vmatprep.subr.mxu0 0.0
      %349 = vmatpush1.msra.mxu0 0.0
      %350 = vmatprep.subr.mxu0 0.0
      %351 = vmatpush1.msra.mxu0 0.0
      %352 = vmatprep.subr.mxu0 0.0
      %353 = vmatpush1.msra.mxu0 0.0
      %354 = vmatprep.subr.mxu0 0.0
      %355 = vmatpush1.msra.mxu0 0.0
      %356 = vmatprep.subr.mxu0 0.0
      %357 = vmatpush1.msra.mxu0 0.0
      %358 = vmatprep.subr.mxu0 0.0
      %359 = vmatpush1.msra.mxu0 0.0
      %360 = vmatprep.subr.mxu0 0.0
      %361 = vmatpush1.msra.mxu0 0.0
      %362 = vmatprep.subr.mxu0 0.0
      %363 = vmatpush1.msra.mxu0 0.0
      %364 = vmatprep.subr.mxu0 0.0
      %365 = vmatpush1.msra.mxu0 0.0
      %366 = vmatprep.subr.mxu0 0.0
      %367 = vmatpush1.msra.mxu0 0.0
      %368 = vmatprep.subr.mxu0 0.0
      %369 = vmatpush1.msra.mxu0 0.0
      %370 = vmatprep.subr.mxu0 0.0
      %371 = vmatpush1.msra.mxu0 0.0
      %372 = vmatprep.subr.mxu0 0.0
      %373 = vmatpush1.msra.mxu0 0.0
      %374 = vmatprep.subr.mxu0 0.0
      %375 = vmatpush1.msra.mxu0 0.0
      %376 = vmatprep.subr.mxu0 %v339
      %377 = vmatpush1.msra.mxu0 %v338
      %378 = vmatprep.subr.mxu0 0.0
      %379 = vmatpush2.msra.mxu0 0.0
      %380 = vmatprep.subr.mxu0 0.0
      %381 = vmatpush2.msra.mxu0 0.0
      %382 = vmatprep.subr.mxu0 0.0
      %383 = vmatpush2.msra.mxu0 0.0
      %384 = vmatprep.subr.mxu0 0.0
      %385 = vmatpush2.msra.mxu0 0.0
      %386 = vmatprep.subr.mxu0 0.0
      %387 = vmatpush2.msra.mxu0 0.0
      %388 = vmatprep.subr.mxu0 0.0
      %389 = vmatpush2.msra.mxu0 0.0
      %390 = vmatprep.subr.mxu0 0.0
      %391 = vmatpush2.msra.mxu0 0.0
      %392 = vmatprep.subr.mxu0 0.0
      %393 = vmatpush2.msra.mxu0 0.0
      %394 = vmatprep.subr.mxu0 0.0
      %395 = vmatpush2.msra.mxu0 0.0
      %396 = vmatprep.subr.mxu0 0.0
      %397 = vmatpush2.msra.mxu0 0.0
      %398 = vmatprep.subr.mxu0 0.0
      %399 = vmatpush2.msra.mxu0 0.0
      %400 = vmatprep.subr.mxu0 0.0
      %401 = vmatpush2.msra.mxu0 0.0
      %402 = vmatprep.subr.mxu0 0.0
      %403 = vmatpush2.msra.mxu0 0.0
      %404 = vmatprep.subr.mxu0 0.0
      %405 = vmatpush2.msra.mxu0 0.0
      %406 = vmatprep.subr.mxu0 0.0
      %407 = vmatpush2.msra.mxu0 0.0
      %408 = vmatprep.subr.mxu0 0.0
      %409 = vmatpush2.msra.mxu0 0.0
      %410 = vmatprep.mubr.f32.mxu0 0.0
      %411 = vmatmul.mubr.f32.gmra.mxu0 %v344
      %v412 = vpop.f32.mrf.mxu0
      %v413 = vadd.f32 0.0, %v412
      %v414 = vpop.f32.mrf.mxu0
      %v415 = vadd.f32 0.0, %v414
      %416 = vdwg.mxu0
      %v418 = vsel %vm342, %v233, 0
      %420 = vmatprep.subr.mxu0 0.0
      %421 = vmatpush1.msra.mxu0 0.0
      %422 = vmatprep.subr.mxu0 0.0
      %423 = vmatpush1.msra.mxu0 0.0
      %424 = vmatprep.subr.mxu0 0.0
      %425 = vmatpush1.msra.mxu0 0.0
      %426 = vmatprep.subr.mxu0 0.0
      %427 = vmatpush1.msra.mxu0 0.0
      %428 = vmatprep.subr.mxu0 0.0
      %429 = vmatpush1.msra.mxu0 0.0
      %430 = vmatprep.subr.mxu0 0.0
      %431 = vmatpush1.msra.mxu0 0.0
      %432 = vmatprep.subr.mxu0 0.0
      %433 = vmatpush1.msra.mxu0 0.0
      %434 = vmatprep.subr.mxu0 0.0
      %435 = vmatpush1.msra.mxu0 0.0
      %436 = vmatprep.subr.mxu0 0.0
      %437 = vmatpush1.msra.mxu0 0.0
      %438 = vmatprep.subr.mxu0 0.0
      %439 = vmatpush1.msra.mxu0 0.0
      %440 = vmatprep.subr.mxu0 0.0
      %441 = vmatpush1.msra.mxu0 0.0
      %442 = vmatprep.subr.mxu0 0.0
      %443 = vmatpush1.msra.mxu0 0.0
      %444 = vmatprep.subr.mxu0 0.0
      %445 = vmatpush1.msra.mxu0 0.0
      %446 = vmatprep.subr.mxu0 0.0
      %447 = vmatpush1.msra.mxu0 0.0
      %448 = vmatprep.subr.mxu0 0.0
      %449 = vmatpush1.msra.mxu0 0.0
      %450 = vmatprep.subr.mxu0 %v199
      %451 = vmatpush1.msra.mxu0 %v198
      %452 = vmatprep.subr.mxu0 0.0
      %453 = vmatpush2.msra.mxu0 0.0
      %454 = vmatprep.subr.mxu0 0.0
      %455 = vmatpush2.msra.mxu0 0.0
      %456 = vmatprep.subr.mxu0 0.0
      %457 = vmatpush2.msra.mxu0 0.0
      %458 = vmatprep.subr.mxu0 0.0
      %459 = vmatpush2.msra.mxu0 0.0
      %460 = vmatprep.subr.mxu0 0.0
      %461 = vmatpush2.msra.mxu0 0.0
      %462 = vmatprep.subr.mxu0 0.0
      %463 = vmatpush2.msra.mxu0 0.0
      %464 = vmatprep.subr.mxu0 0.0
      %465 = vmatpush2.msra.mxu0 0.0
      %466 = vmatprep.subr.mxu0 0.0
      %467 = vmatpush2.msra.mxu0 0.0
      %468 = vmatprep.subr.mxu0 0.0
      %469 = vmatpush2.msra.mxu0 0.0
      %470 = vmatprep.subr.mxu0 0.0
      %471 = vmatpush2.msra.mxu0 0.0
      %472 = vmatprep.subr.mxu0 0.0
      %473 = vmatpush2.msra.mxu0 0.0
      %474 = vmatprep.subr.mxu0 0.0
      %475 = vmatpush2.msra.mxu0 0.0
      %476 = vmatprep.subr.mxu0 0.0
      %477 = vmatpush2.msra.mxu0 0.0
      %478 = vmatprep.subr.mxu0 0.0
      %479 = vmatpush2.msra.mxu0 0.0
      %480 = vmatprep.subr.mxu0 0.0
      %481 = vmatpush2.msra.mxu0 0.0
      %482 = vmatprep.subr.mxu0 0.0
      %483 = vmatpush2.msra.mxu0 0.0
      %484 = vmatprep.mubr.f32.mxu0 0.0
      %485 = vmatmul.mubr.f32.gmra.mxu0 %v418
      %v486 = vpop.f32.mrf.mxu0
      %v487 = vadd.f32 %v413, %v486
      %v488 = vpop.f32.mrf.mxu0
      %v489 = vadd.f32 %v415, %v488
      %490 = vdwg.mxu0
      %491 = vrot.lane.b32.xlu0 %v338, 2
      %v492 = vpop.permute.xlu0 %491
      %493 = vrot.lane.b32.xlu0 %v339, 2
      %v494 = vpop.permute.xlu0 %493
      %v495 = vsel %vm240, %v492, %v494
      %v496 = vsel %vm240, %v494, %v492
      %v497 = vsel %vm243, %v496, -inf
      %v498 = vsel %vm244, %v495, -inf
      %v499 = vmax.f32 %v338, %v497
      %v500 = vmax.f32 %v339, %v498
      %501 = vrot.lane.b32.xlu0 %v338, 1
      %v502 = vpop.permute.xlu0 %501
      %503 = vrot.lane.b32.xlu0 %v339, 1
      %v504 = vpop.permute.xlu0 %503
      %v505 = vsel %vm253, %v502, %v504
      %v506 = vsel %vm253, %v504, %v502
      %v507 = vsel %vm256, %v506, -inf
      %v508 = vsel %vm257, %v505, -inf
      %v509 = vmax.f32 %v499, %v507
      %v510 = vmax.f32 %v500, %v508
      %511 = vrot.lane.b32.xlu0 %v338, 127
      %v512 = vpop.permute.xlu0 %511
      %513 = vrot.lane.b32.xlu0 %v339, 127
      %v514 = vpop.permute.xlu0 %513
      %v515 = vsel %vm266, %v512, %v514
      %v516 = vsel %vm266, %v514, %v512
      %v517 = vsel %vm269, %v515, -inf
      %v518 = vsel %vm270, %v516, -inf
      %v519 = vmax.f32 %v509, %v517
      %v520 = vmax.f32 %v510, %v518
      %521 = vrot.lane.b32.xlu0 %v338, 126
      %v522 = vpop.permute.xlu0 %521
      %523 = vrot.lane.b32.xlu0 %v339, 126
      %v524 = vpop.permute.xlu0 %523
      %v525 = vsel %vm279, %v522, %v524
      %v526 = vsel %vm279, %v524, %v522
      %v527 = vsel %vm282, %v525, -inf
      %v528 = vsel %vm283, %v526, -inf
      %v529 = vmax.f32 %v519, %v527
      %v530 = vmax.f32 %v520, %v528
      %531 = vrot.lane.b32.xlu0 %v529, 32
      %v532 = vpop.permute.xlu0 %531
      %533 = vrot.lane.b32.xlu0 %v530, 32
      %v534 = vpop.permute.xlu0 %533
      %v535 = vsel %vm292, %v532, %v534
      %v536 = vsel %vm292, %v534, %v532
      %v537 = vsel %vm295, %v536, -inf
      %v538 = vsel %vm296, %v535, -inf
      %v539 = vmax.f32 %v529, %v537
      %v540 = vmax.f32 %v530, %v538
      %541 = vrot.lane.b32.xlu0 %v529, 16
      %v542 = vpop.permute.xlu0 %541
      %543 = vrot.lane.b32.xlu0 %v530, 16
      %v544 = vpop.permute.xlu0 %543
      %v545 = vsel %vm305, %v542, %v544
      %v546 = vsel %vm305, %v544, %v542
      %v547 = vsel %vm308, %v546, -inf
      %v548 = vsel %vm309, %v545, -inf
      %v549 = vmax.f32 %v539, %v547
      %v550 = vmax.f32 %v540, %v548
      %551 = vrot.lane.b32.xlu0 %v529, 112
      %v552 = vpop.permute.xlu0 %551
      %553 = vrot.lane.b32.xlu0 %v530, 112
      %v554 = vpop.permute.xlu0 %553
      %v555 = vsel %vm318, %v552, %v554
      %v556 = vsel %vm318, %v554, %v552
      %v557 = vsel %vm321, %v555, -inf
      %v558 = vsel %vm322, %v556, -inf
      %v559 = vmax.f32 %v549, %v557
      %v560 = vmax.f32 %v550, %v558
      %561 = vrot.lane.b32.xlu0 %v529, 96
      %v562 = vpop.permute.xlu0 %561
      %563 = vrot.lane.b32.xlu0 %v530, 96
      %v564 = vpop.permute.xlu0 %563
      %v565 = vsel %vm331, %v562, %v564
      %v566 = vsel %vm331, %v564, %v562
      %v567 = vsel %vm334, %v565, -inf
      %v568 = vsel %vm335, %v566, -inf
      %v569 = vmax.f32 %v559, %v567
      %v570 = vmax.f32 %v560, %v568
      %s571 = scalar_lea.vmem %s0, 16
      %v572 = vld [vmem:[%s571] sm:$0xff]
      %v574 = vsel %vm342, %v572, 0
      %576 = vmatprep.subr.mxu0 0.0
      %577 = vmatpush1.msra.mxu0 0.0
      %578 = vmatprep.subr.mxu0 0.0
      %579 = vmatpush1.msra.mxu0 0.0
      %580 = vmatprep.subr.mxu0 0.0
      %581 = vmatpush1.msra.mxu0 0.0
      %582 = vmatprep.subr.mxu0 0.0
      %583 = vmatpush1.msra.mxu0 0.0
      %584 = vmatprep.subr.mxu0 0.0
      %585 = vmatpush1.msra.mxu0 0.0
      %586 = vmatprep.subr.mxu0 0.0
      %587 = vmatpush1.msra.mxu0 0.0
      %588 = vmatprep.subr.mxu0 0.0
      %589 = vmatpush1.msra.mxu0 0.0
      %590 = vmatprep.subr.mxu0 0.0
      %591 = vmatpush1.msra.mxu0 0.0
      %592 = vmatprep.subr.mxu0 0.0
      %593 = vmatpush1.msra.mxu0 0.0
      %594 = vmatprep.subr.mxu0 0.0
      %595 = vmatpush1.msra.mxu0 0.0
      %596 = vmatprep.subr.mxu0 0.0
      %597 = vmatpush1.msra.mxu0 0.0
      %598 = vmatprep.subr.mxu0 0.0
      %599 = vmatpush1.msra.mxu0 0.0
      %600 = vmatprep.subr.mxu0 0.0
      %601 = vmatpush1.msra.mxu0 0.0
      %602 = vmatprep.subr.mxu0 0.0
      %603 = vmatpush1.msra.mxu0 0.0
      %604 = vmatprep.subr.mxu0 0.0
      %605 = vmatpush1.msra.mxu0 0.0
      %606 = vmatprep.subr.mxu0 %v570
      %607 = vmatpush1.msra.mxu0 %v569
      %608 = vmatprep.subr.mxu0 0.0
      %609 = vmatpush2.msra.mxu0 0.0
      %610 = vmatprep.subr.mxu0 0.0
      %611 = vmatpush2.msra.mxu0 0.0
      %612 = vmatprep.subr.mxu0 0.0
      %613 = vmatpush2.msra.mxu0 0.0
      %614 = vmatprep.subr.mxu0 0.0
      %615 = vmatpush2.msra.mxu0 0.0
      %616 = vmatprep.subr.mxu0 0.0
      %617 = vmatpush2.msra.mxu0 0.0
      %618 = vmatprep.subr.mxu0 0.0
      %619 = vmatpush2.msra.mxu0 0.0
      %620 = vmatprep.subr.mxu0 0.0
      %621 = vmatpush2.msra.mxu0 0.0
      %622 = vmatprep.subr.mxu0 0.0
      %623 = vmatpush2.msra.mxu0 0.0
      %624 = vmatprep.subr.mxu0 0.0
      %625 = vmatpush2.msra.mxu0 0.0
      %626 = vmatprep.subr.mxu0 0.0
      %627 = vmatpush2.msra.mxu0 0.0
      %628 = vmatprep.subr.mxu0 0.0
      %629 = vmatpush2.msra.mxu0 0.0
      %630 = vmatprep.subr.mxu0 0.0
      %631 = vmatpush2.msra.mxu0 0.0
      %632 = vmatprep.subr.mxu0 0.0
      %633 = vmatpush2.msra.mxu0 0.0
      %634 = vmatprep.subr.mxu0 0.0
      %635 = vmatpush2.msra.mxu0 0.0
      %636 = vmatprep.subr.mxu0 0.0
      %637 = vmatpush2.msra.mxu0 0.0
      %638 = vmatprep.subr.mxu0 0.0
      %639 = vmatpush2.msra.mxu0 0.0
      %640 = vmatprep.mubr.f32.mxu0 0.0
      %641 = vmatmul.mubr.f32.gmra.mxu0 %v574
      %v642 = vpop.f32.mrf.mxu0
      %v643 = vadd.f32 0.0, %v642
      %v644 = vpop.f32.mrf.mxu0
      %v645 = vadd.f32 0.0, %v644
      %646 = vdwg.mxu0
      %v647 = vadd.f32 %v487, %v643
      %v648 = vadd.f32 %v489, %v645
      %649 = vrot.lane.b32.xlu0 %v569, 2
      %v650 = vpop.permute.xlu0 %649
      %651 = vrot.lane.b32.xlu0 %v570, 2
      %v652 = vpop.permute.xlu0 %651
      %v653 = vsel %vm240, %v650, %v652
      %v654 = vsel %vm240, %v652, %v650
      %v655 = vsel %vm243, %v654, -inf
      %v656 = vsel %vm244, %v653, -inf
      %v657 = vmax.f32 %v569, %v655
      %v658 = vmax.f32 %v570, %v656
      %659 = vrot.lane.b32.xlu0 %v569, 1
      %v660 = vpop.permute.xlu0 %659
      %661 = vrot.lane.b32.xlu0 %v570, 1
      %v662 = vpop.permute.xlu0 %661
      %v663 = vsel %vm253, %v660, %v662
      %v664 = vsel %vm253, %v662, %v660
      %v665 = vsel %vm256, %v664, -inf
      %v666 = vsel %vm257, %v663, -inf
      %v667 = vmax.f32 %v657, %v665
      %v668 = vmax.f32 %v658, %v666
      %669 = vrot.lane.b32.xlu0 %v569, 127
      %v670 = vpop.permute.xlu0 %669
      %671 = vrot.lane.b32.xlu0 %v570, 127
      %v672 = vpop.permute.xlu0 %671
      %v673 = vsel %vm266, %v670, %v672
      %v674 = vsel %vm266, %v672, %v670
      %v675 = vsel %vm269, %v673, -inf
      %v676 = vsel %vm270, %v674, -inf
      %v677 = vmax.f32 %v667, %v675
      %v678 = vmax.f32 %v668, %v676
      %679 = vrot.lane.b32.xlu0 %v569, 126
      %v680 = vpop.permute.xlu0 %679
      %681 = vrot.lane.b32.xlu0 %v570, 126
      %v682 = vpop.permute.xlu0 %681
      %v683 = vsel %vm279, %v680, %v682
      %v684 = vsel %vm279, %v682, %v680
      %v685 = vsel %vm282, %v683, -inf
      %v686 = vsel %vm283, %v684, -inf
      %v687 = vmax.f32 %v677, %v685
      %v688 = vmax.f32 %v678, %v686
      %689 = vrot.lane.b32.xlu0 %v687, 32
      %v690 = vpop.permute.xlu0 %689
      %691 = vrot.lane.b32.xlu0 %v688, 32
      %v692 = vpop.permute.xlu0 %691
      %v693 = vsel %vm292, %v690, %v692
      %v694 = vsel %vm292, %v692, %v690
      %v695 = vsel %vm295, %v694, -inf
      %v696 = vsel %vm296, %v693, -inf
      %v697 = vmax.f32 %v687, %v695
      %v698 = vmax.f32 %v688, %v696
      %699 = vrot.lane.b32.xlu0 %v687, 16
      %v700 = vpop.permute.xlu0 %699
      %701 = vrot.lane.b32.xlu0 %v688, 16
      %v702 = vpop.permute.xlu0 %701
      %v703 = vsel %vm305, %v700, %v702
      %v704 = vsel %vm305, %v702, %v700
      %v705 = vsel %vm308, %v704, -inf
      %v706 = vsel %vm309, %v703, -inf
      %v707 = vmax.f32 %v697, %v705
      %v708 = vmax.f32 %v698, %v706
      %709 = vrot.lane.b32.xlu0 %v687, 112
      %v710 = vpop.permute.xlu0 %709
      %711 = vrot.lane.b32.xlu0 %v688, 112
      %v712 = vpop.permute.xlu0 %711
      %v713 = vsel %vm318, %v710, %v712
      %v714 = vsel %vm318, %v712, %v710
      %v715 = vsel %vm321, %v713, -inf
      %v716 = vsel %vm322, %v714, -inf
      %v717 = vmax.f32 %v707, %v715
      %v718 = vmax.f32 %v708, %v716
      %719 = vrot.lane.b32.xlu0 %v687, 96
      %v720 = vpop.permute.xlu0 %719
      %721 = vrot.lane.b32.xlu0 %v688, 96
      %v722 = vpop.permute.xlu0 %721
      %v723 = vsel %vm331, %v720, %v722
      %v724 = vsel %vm331, %v722, %v720
      %v725 = vsel %vm334, %v723, -inf
      %v726 = vsel %vm335, %v724, -inf
      %v727 = vmax.f32 %v717, %v725
      %v728 = vmax.f32 %v718, %v726
      %s729 = scalar_lea.vmem %s0, 24
      %v730 = vld [vmem:[%s729] sm:$0xff]
      %v732 = vsel %vm342, %v730, 0
      %734 = vmatprep.subr.mxu0 0.0
      %735 = vmatpush1.msra.mxu0 0.0
      %736 = vmatprep.subr.mxu0 0.0
      %737 = vmatpush1.msra.mxu0 0.0
      %738 = vmatprep.subr.mxu0 0.0
      %739 = vmatpush1.msra.mxu0 0.0
      %740 = vmatprep.subr.mxu0 0.0
      %741 = vmatpush1.msra.mxu0 0.0
      %742 = vmatprep.subr.mxu0 0.0
      %743 = vmatpush1.msra.mxu0 0.0
      %744 = vmatprep.subr.mxu0 0.0
      %745 = vmatpush1.msra.mxu0 0.0
      %746 = vmatprep.subr.mxu0 0.0
      %747 = vmatpush1.msra.mxu0 0.0
      %748 = vmatprep.subr.mxu0 0.0
      %749 = vmatpush1.msra.mxu0 0.0
      %750 = vmatprep.subr.mxu0 0.0
      %751 = vmatpush1.msra.mxu0 0.0
      %752 = vmatprep.subr.mxu0 0.0
      %753 = vmatpush1.msra.mxu0 0.0
      %754 = vmatprep.subr.mxu0 0.0
      %755 = vmatpush1.msra.mxu0 0.0
      %756 = vmatprep.subr.mxu0 0.0
      %757 = vmatpush1.msra.mxu0 0.0
      %758 = vmatprep.subr.mxu0 0.0
      %759 = vmatpush1.msra.mxu0 0.0
      %760 = vmatprep.subr.mxu0 0.0
      %761 = vmatpush1.msra.mxu0 0.0
      %762 = vmatprep.subr.mxu0 0.0
      %763 = vmatpush1.msra.mxu0 0.0
      %764 = vmatprep.subr.mxu0 %v728
      %765 = vmatpush1.msra.mxu0 %v727
      %766 = vmatprep.subr.mxu0 0.0
      %767 = vmatpush2.msra.mxu0 0.0
      %768 = vmatprep.subr.mxu0 0.0
      %769 = vmatpush2.msra.mxu0 0.0
      %770 = vmatprep.subr.mxu0 0.0
      %771 = vmatpush2.msra.mxu0 0.0
      %772 = vmatprep.subr.mxu0 0.0
      %773 = vmatpush2.msra.mxu0 0.0
      %774 = vmatprep.subr.mxu0 0.0
      %775 = vmatpush2.msra.mxu0 0.0
      %776 = vmatprep.subr.mxu0 0.0
      %777 = vmatpush2.msra.mxu0 0.0
      %778 = vmatprep.subr.mxu0 0.0
      %779 = vmatpush2.msra.mxu0 0.0
      %780 = vmatprep.subr.mxu0 0.0
      %781 = vmatpush2.msra.mxu0 0.0
      %782 = vmatprep.subr.mxu0 0.0
      %783 = vmatpush2.msra.mxu0 0.0
      %784 = vmatprep.subr.mxu0 0.0
      %785 = vmatpush2.msra.mxu0 0.0
      %786 = vmatprep.subr.mxu0 0.0
      %787 = vmatpush2.msra.mxu0 0.0
      %788 = vmatprep.subr.mxu0 0.0
      %789 = vmatpush2.msra.mxu0 0.0
      %790 = vmatprep.subr.mxu0 0.0
      %791 = vmatpush2.msra.mxu0 0.0
      %792 = vmatprep.subr.mxu0 0.0
      %793 = vmatpush2.msra.mxu0 0.0
      %794 = vmatprep.subr.mxu0 0.0
      %795 = vmatpush2.msra.mxu0 0.0
      %796 = vmatprep.subr.mxu0 0.0
      %797 = vmatpush2.msra.mxu0 0.0
      %798 = vmatprep.mubr.f32.mxu0 0.0
      %799 = vmatmul.mubr.f32.gmra.mxu0 %v732
      %v800 = vpop.f32.mrf.mxu0
      %v801 = vadd.f32 0.0, %v800
      %v802 = vpop.f32.mrf.mxu0
      %v803 = vadd.f32 0.0, %v802
      %804 = vdwg.mxu0
      %v805 = vadd.f32 %v647, %v801
      %v806 = vadd.f32 %v648, %v803
      %v807 = vld [vmem:[%s1] sm:$0xff]
      %809 = vset.pattern.permute.xlu0 0
      %810 = vperm.xlu0 %809, %v807
      %v811 = vpop.permute.xlu0 %810
      %v813 = vadd.f32 %v805, %v811
      %v814 = vadd.f32 %v806, %v811
      %v815 = vmul.f32 %v813, 0.5
      %v816 = vmul.f32 %v814, 0.5
      %v817 = vtanh.pop %v815
      %v818 = vtanh.pop %v816
      %v819 = vmul.f32 %v817, 0.5
      %v820 = vmul.f32 %v818, 0.5
      %v821 = vadd.f32 %v819, 0.5
      %v822 = vadd.f32 %v820, 0.5
      %v823 = vmul.f32 %v813, %v821
      %v824 = vmul.f32 %v814, %v822
      %825 = vst [vmem:[%s197] sm:$0xff] %v823
      %826 = vst [vmem:[%s197 + $0x8] sm:$0xff] %v824
      %p827 = scmp.lt.s32.totalorder %s15, 1
      %s828 = scalar_select %p827, %s15, 1
      %s829 = smul.addr %s828, 2
      %s830 = smul.addr %s829, 8
      %s831 = scalar_lea.vmem %s4, %s830
      // Predicated region
      $region37: #{sppcspc_pallas.6} parent=35 // pred_check
        %p832 = pneg %p122
      $region38: #{sppcspc_pallas.6} parent=35 // pred_check_branch
        %834 = sbr.rel (%p832) target = $region40
      $region39: #{sppcspc_pallas.6} parent=35 // pred_region
        _
      $region40: #{sppcspc_pallas.6} parent=35 // pred_fallthru
        _
    $region36: #{sppcspc_pallas.6} parent=5 // pred_fallthru
      _
    %p835 = scmp.le.s32.totalorder 2, %s10
    // Predicated region
    $region41: #{sppcspc_pallas.6} parent=5 // pred_check
      %p836 = pneg %p835
    $region42: #{sppcspc_pallas.6} parent=5 // pred_check_branch
      %838 = sbr.rel (%p836) target = $region44
    $region43: #{sppcspc_pallas.6} parent=5 // pred_region
      %s839 = ssub.s32 %s10, 2
      // Predicated region
      $region45: #{sppcspc_pallas.6} parent=43 // pred_check
        %p840 = pneg %p128
      $region46: #{sppcspc_pallas.6} parent=43 // pred_check_branch
        %842 = sbr.rel (%p840) target = $region48
      $region47: #{sppcspc_pallas.6} parent=43 // pred_region
        %p843 = scmp.lt.s32.totalorder %s16, 1
        %s844 = scalar_select %p843, %s16, 1
        %s845 = smul.addr %s844, 2
        %s846 = smul.addr %s845, 8
        %s847 = scalar_lea.vmem %s4, %s846
      $region48: #{sppcspc_pallas.6} parent=43 // pred_fallthru
        _
    $region44: #{sppcspc_pallas.6} parent=5 // pred_fallthru
      _
  $region6: #{sppcspc_pallas.6} parent=0 // loop_footer
    %s14 = sadd.s32 1, %s10
  $region7: #{sppcspc_pallas.6} parent=0 // loop_footer_branch
    %9 = sbr.rel target = $region3
  $region8: #{sppcspc_pallas.6} parent=0 // loop_exit
    _

// kernel: sppcspc_pallas.7
$region0: #{sppcspc_pallas.7}
  #allocation0 [shape = 'u32[]', space=smem, size = 0x4, offset = 0x4, fixed_abs, tag = 'smem constant byte address 0x4 - core index']
  #allocation1 [shape = 'u32[144,128]{1,0:T(1,128)}', space=vmem, size = 0x12000, scoped, tag = 'internal scratch']
  %s0 = inlined_call_operand.vmem [shape: f32[9,8,8], index: 0, kind: input, shape index: {}]
  %s1 = inlined_call_operand.vmem [shape: f32[8,1], index: 1, kind: input, shape index: {}]
  %s2 = inlined_call_operand.vmem [shape: f32[8,8], index: 2, kind: input, shape index: {}]
  %s3 = inlined_call_operand.vmem [shape: f32[8,8], index: 3, kind: input, shape index: {}]
  %s4 = inlined_call_operand.vmem [shape: f32[8,1], index: 4, kind: input, shape index: {}]
  %s5 = inlined_call_operand.vmem [shape: s32[2,256], index: 5, kind: input, shape index: {}]
  %s6 = inlined_call_operand.vmem [shape: f32[2,8,256], index: 6, kind: input, shape index: {}]
  %s7 = inlined_call_operand.vmem [shape: f32[2,8,256], index: 7, kind: input, shape index: {}]
  %s8 = inlined_call_operand.vmem [shape: f32[2,8,256], index: 8, kind: output, shape index: {}]
  %s9 = sld [smem:[#allocation0]]
  $region65: #{sppcspc_pallas.7} parent=0
    _
  %s11 = ssub.s32 1, %s9
  %s12 = scalar_select 0, %s11, %s9
  loop: start=0, step=1, limit=4
  $region2: #{sppcspc_pallas.7} parent=0 // loop_pre_header
    _
  $region3: #{sppcspc_pallas.7} parent=0 // loop_header
    %s14 = sphi 0, %s18
    %p15 = scmp.ge.s32.totalorder %s14, 4
    %s22 = sphi 0, %s22
    %s24 = sphi 0, %s22
    %s25 = sphi 0, %s24
    %s39 = sphi 0, %s25
    %s43 = sphi 0, %s43
    %s45 = sphi 0, %s43
    %s46 = sphi 0, %s45
    %s60 = sphi 0, %s46
    %s64 = sphi 0, %s64
    %s66 = sphi 0, %s64
    %s67 = sphi 0, %s66
    %s81 = sphi 0, %s67
    %s85 = sphi 0, %s85
    %s87 = sphi 0, %s85
    %s88 = sphi 0, %s87
    %s102 = sphi 0, %s88
    %s106 = sphi 0, %s106
    %s108 = sphi 0, %s106
    %s109 = sphi 0, %s108
    %s123 = sphi 0, %s109
    %s127 = sphi 0, %s127
    %s129 = sphi 0, %s127
    %s130 = sphi 0, %s129
    %s144 = sphi 0, %s130
    %s150 = sphi 0, %s152
    %s153 = sphi 0, %s150
    %s154 = sphi 0, %s153
    %s170 = sphi 0, %s154
    %s176 = sphi 0, %s178
    %s179 = sphi 0, %s176
    %s180 = sphi 0, %s179
    %s196 = sphi 0, %s180
    %s202 = sphi 0, %s204
    %s205 = sphi 0, %s202
    %s206 = sphi 0, %s205
    %s222 = sphi 0, %s206
  $region4: #{sppcspc_pallas.7} parent=0 // loop_header_branch
    %17 = sbr.rel (%p15) target = $region8
  $region5: #{sppcspc_pallas.7} parent=0 // loop_body
    %s19 = ssub.s32 %s14, 1
    %s20 = ssub.s32 %s14, 2
    %s21 = sadd.s32 %s14, 1
    %s23 = sadd.s32 %s22, 1
    %p26 = scmp.eq.s32.totalorder %s14, 1
    %p27 = scmp.ne.s32.totalorder %s22, %s24
    %p28 = scmp.eq.s32.totalorder %s14, 0
    %p29 = por %p27, %p28
    %p30 = scmp.ne.s32.totalorder %s22, %s24
    %p31 = scmp.eq.s32.totalorder %s19, 1
    %p32 = por %p30, %p31
    %p33 = scmp.ne.s32.totalorder %s24, %s25
    %p34 = scmp.eq.s32.totalorder %s19, 0
    %p35 = por %p33, %p34
    %p36 = scmp.ne.s32.totalorder %s24, %s25
    %p37 = scmp.eq.s32.totalorder %s20, 1
    %p38 = por %p36, %p37
    %p40 = scmp.ne.s32.totalorder %s25, %s39
    %p41 = scmp.eq.s32.totalorder %s20, 0
    %p42 = por %p40, %p41
    %s44 = sadd.s32 %s43, 1
    %p47 = scmp.eq.s32.totalorder %s14, 1
    %p48 = scmp.ne.s32.totalorder %s43, %s45
    %p49 = scmp.eq.s32.totalorder %s14, 0
    %p50 = por %p48, %p49
    %p51 = scmp.ne.s32.totalorder %s43, %s45
    %p52 = scmp.eq.s32.totalorder %s19, 1
    %p53 = por %p51, %p52
    %p54 = scmp.ne.s32.totalorder %s45, %s46
    %p55 = scmp.eq.s32.totalorder %s19, 0
    %p56 = por %p54, %p55
    %p57 = scmp.ne.s32.totalorder %s45, %s46
    %p58 = scmp.eq.s32.totalorder %s20, 1
    %p59 = por %p57, %p58
    %p61 = scmp.ne.s32.totalorder %s46, %s60
    %p62 = scmp.eq.s32.totalorder %s20, 0
    %p63 = por %p61, %p62
    %s65 = sadd.s32 %s64, 1
    %p68 = scmp.eq.s32.totalorder %s14, 1
    %p69 = scmp.ne.s32.totalorder %s64, %s66
    %p70 = scmp.eq.s32.totalorder %s14, 0
    %p71 = por %p69, %p70
    %p72 = scmp.ne.s32.totalorder %s64, %s66
    %p73 = scmp.eq.s32.totalorder %s19, 1
    %p74 = por %p72, %p73
    %p75 = scmp.ne.s32.totalorder %s66, %s67
    %p76 = scmp.eq.s32.totalorder %s19, 0
    %p77 = por %p75, %p76
    %p78 = scmp.ne.s32.totalorder %s66, %s67
    %p79 = scmp.eq.s32.totalorder %s20, 1
    %p80 = por %p78, %p79
    %p82 = scmp.ne.s32.totalorder %s67, %s81
    %p83 = scmp.eq.s32.totalorder %s20, 0
    %p84 = por %p82, %p83
    %s86 = sadd.s32 %s85, 1
    %p89 = scmp.eq.s32.totalorder %s14, 1
    %p90 = scmp.ne.s32.totalorder %s85, %s87
    %p91 = scmp.eq.s32.totalorder %s14, 0
    %p92 = por %p90, %p91
    %p93 = scmp.ne.s32.totalorder %s85, %s87
    %p94 = scmp.eq.s32.totalorder %s19, 1
    %p95 = por %p93, %p94
    %p96 = scmp.ne.s32.totalorder %s87, %s88
    %p97 = scmp.eq.s32.totalorder %s19, 0
    %p98 = por %p96, %p97
    %p99 = scmp.ne.s32.totalorder %s87, %s88
    %p100 = scmp.eq.s32.totalorder %s20, 1
    %p101 = por %p99, %p100
    %p103 = scmp.ne.s32.totalorder %s88, %s102
    %p104 = scmp.eq.s32.totalorder %s20, 0
    %p105 = por %p103, %p104
    %s107 = sadd.s32 %s106, 1
    %p110 = scmp.eq.s32.totalorder %s14, 1
    %p111 = scmp.ne.s32.totalorder %s106, %s108
    %p112 = scmp.eq.s32.totalorder %s14, 0
    %p113 = por %p111, %p112
    %p114 = scmp.ne.s32.totalorder %s106, %s108
    %p115 = scmp.eq.s32.totalorder %s19, 1
    %p116 = por %p114, %p115
    %p117 = scmp.ne.s32.totalorder %s108, %s109
    %p118 = scmp.eq.s32.totalorder %s19, 0
    %p119 = por %p117, %p118
    %p120 = scmp.ne.s32.totalorder %s108, %s109
    %p121 = scmp.eq.s32.totalorder %s20, 1
    %p122 = por %p120, %p121
    %p124 = scmp.ne.s32.totalorder %s109, %s123
    %p125 = scmp.eq.s32.totalorder %s20, 0
    %p126 = por %p124, %p125
    %s128 = sadd.s32 %s127, 1
    %p131 = scmp.eq.s32.totalorder %s14, 1
    %p132 = scmp.ne.s32.totalorder %s127, %s129
    %p133 = scmp.eq.s32.totalorder %s14, 0
    %p134 = por %p132, %p133
    %p135 = scmp.ne.s32.totalorder %s127, %s129
    %p136 = scmp.eq.s32.totalorder %s19, 1
    %p137 = por %p135, %p136
    %p138 = scmp.ne.s32.totalorder %s129, %s130
    %p139 = scmp.eq.s32.totalorder %s19, 0
    %p140 = por %p138, %p139
    %p141 = scmp.ne.s32.totalorder %s129, %s130
    %p142 = scmp.eq.s32.totalorder %s20, 1
    %p143 = por %p141, %p142
    %p145 = scmp.ne.s32.totalorder %s130, %s144
    %p146 = scmp.eq.s32.totalorder %s20, 0
    %p147 = por %p145, %p146
    %s148 = ssub.s32 %s14, %s21
    %p149 = scmp.eq.s32.totalorder %s148, 0
    %s151 = sadd.s32 %s150, 1
    %s152 = scalar_select %p149, %s150, %s151
    %p155 = pneg %p149
    %p156 = scmp.eq.s32.totalorder %s14, 1
    %p157 = por %p155, %p156
    %p158 = scmp.ne.s32.totalorder %s150, %s153
    %p159 = scmp.eq.s32.totalorder %s14, 0
    %p160 = por %p158, %p159
    %p161 = scmp.ne.s32.totalorder %s150, %s153
    %p162 = scmp.eq.s32.totalorder %s19, 1
    %p163 = por %p161, %p162
    %p164 = scmp.ne.s32.totalorder %s153, %s154
    %p165 = scmp.eq.s32.totalorder %s19, 0
    %p166 = por %p164, %p165
    %p167 = scmp.ne.s32.totalorder %s153, %s154
    %p168 = scmp.eq.s32.totalorder %s20, 1
    %p169 = por %p167, %p168
    %p171 = scmp.ne.s32.totalorder %s154, %s170
    %p172 = scmp.eq.s32.totalorder %s20, 0
    %p173 = por %p171, %p172
    %s174 = ssub.s32 %s14, %s21
    %p175 = scmp.eq.s32.totalorder %s174, 0
    %s177 = sadd.s32 %s176, 1
    %s178 = scalar_select %p175, %s176, %s177
    %p181 = pneg %p175
    %p182 = scmp.eq.s32.totalorder %s14, 1
    %p183 = por %p181, %p182
    %p184 = scmp.ne.s32.totalorder %s176, %s179
    %p185 = scmp.eq.s32.totalorder %s14, 0
    %p186 = por %p184, %p185
    %p187 = scmp.ne.s32.totalorder %s176, %s179
    %p188 = scmp.eq.s32.totalorder %s19, 1
    %p189 = por %p187, %p188
    %p190 = scmp.ne.s32.totalorder %s179, %s180
    %p191 = scmp.eq.s32.totalorder %s19, 0
    %p192 = por %p190, %p191
    %p193 = scmp.ne.s32.totalorder %s179, %s180
    %p194 = scmp.eq.s32.totalorder %s20, 1
    %p195 = por %p193, %p194
    %p197 = scmp.ne.s32.totalorder %s180, %s196
    %p198 = scmp.eq.s32.totalorder %s20, 0
    %p199 = por %p197, %p198
    %s200 = ssub.s32 %s14, %s21
    %p201 = scmp.eq.s32.totalorder %s200, 0
    %s203 = sadd.s32 %s202, 1
    %s204 = scalar_select %p201, %s202, %s203
    %p207 = pneg %p201
    %p208 = scmp.eq.s32.totalorder %s14, 1
    %p209 = por %p207, %p208
    %p210 = scmp.ne.s32.totalorder %s202, %s205
    %p211 = scmp.eq.s32.totalorder %s14, 0
    %p212 = por %p210, %p211
    %p213 = scmp.ne.s32.totalorder %s202, %s205
    %p214 = scmp.eq.s32.totalorder %s19, 1
    %p215 = por %p213, %p214
    %p216 = scmp.ne.s32.totalorder %s205, %s206
    %p217 = scmp.eq.s32.totalorder %s19, 0
    %p218 = por %p216, %p217
    %p219 = scmp.ne.s32.totalorder %s205, %s206
    %p220 = scmp.eq.s32.totalorder %s20, 1
    %p221 = por %p219, %p220
    %p223 = scmp.ne.s32.totalorder %s206, %s222
    %p224 = scmp.eq.s32.totalorder %s20, 0
    %p225 = por %p223, %p224
    %p226 = scmp.le.s32.totalorder 1, %s14
    %p227 = scmp.lt.s32.totalorder %s14, 3
    %p228 = pnand %p226, %p227
    %p229 = pneg %p228
    // Predicated region
    $region9: #{sppcspc_pallas.7} parent=5 // pred_check
      _
    $region10: #{sppcspc_pallas.7} parent=5 // pred_check_branch
      %231 = sbr.rel (%p228) target = $region12
    $region11: #{sppcspc_pallas.7} parent=5 // pred_region
      %s232 = ssub.s32 %s14, 1
      // Predicated region
      $region13: #{sppcspc_pallas.7} parent=11 // pred_check
        %p233 = pneg %p35
      $region14: #{sppcspc_pallas.7} parent=11 // pred_check_branch
        %235 = sbr.rel (%p233) target = $region16
      $region15: #{sppcspc_pallas.7} parent=11 // pred_region
        _
      $region16: #{sppcspc_pallas.7} parent=11 // pred_fallthru
        _
      // Predicated region
      $region17: #{sppcspc_pallas.7} parent=11 // pred_check
        %p236 = pneg %p56
      $region18: #{sppcspc_pallas.7} parent=11 // pred_check_branch
        %238 = sbr.rel (%p236) target = $region20
      $region19: #{sppcspc_pallas.7} parent=11 // pred_region
        _
      $region20: #{sppcspc_pallas.7} parent=11 // pred_fallthru
        _
      // Predicated region
      $region21: #{sppcspc_pallas.7} parent=11 // pred_check
        %p239 = pneg %p77
      $region22: #{sppcspc_pallas.7} parent=11 // pred_check_branch
        %241 = sbr.rel (%p239) target = $region24
      $region23: #{sppcspc_pallas.7} parent=11 // pred_region
        _
      $region24: #{sppcspc_pallas.7} parent=11 // pred_fallthru
        _
      // Predicated region
      $region25: #{sppcspc_pallas.7} parent=11 // pred_check
        %p242 = pneg %p98
      $region26: #{sppcspc_pallas.7} parent=11 // pred_check_branch
        %244 = sbr.rel (%p242) target = $region28
      $region27: #{sppcspc_pallas.7} parent=11 // pred_region
        _
      $region28: #{sppcspc_pallas.7} parent=11 // pred_fallthru
        _
      // Predicated region
      $region29: #{sppcspc_pallas.7} parent=11 // pred_check
        %p245 = pneg %p119
      $region30: #{sppcspc_pallas.7} parent=11 // pred_check_branch
        %247 = sbr.rel (%p245) target = $region32
      $region31: #{sppcspc_pallas.7} parent=11 // pred_region
        _
      $region32: #{sppcspc_pallas.7} parent=11 // pred_fallthru
        _
      // Predicated region
      $region33: #{sppcspc_pallas.7} parent=11 // pred_check
        %p248 = pneg %p140
      $region34: #{sppcspc_pallas.7} parent=11 // pred_check_branch
        %250 = sbr.rel (%p248) target = $region36
      $region35: #{sppcspc_pallas.7} parent=11 // pred_region
        _
      $region36: #{sppcspc_pallas.7} parent=11 // pred_fallthru
        _
    $region12: #{sppcspc_pallas.7} parent=5 // pred_fallthru
      _
    %p251 = scmp.lt.s32.totalorder %s14, 2
    // Predicated region
    $region37: #{sppcspc_pallas.7} parent=5 // pred_check
      %p252 = pneg %p251
    $region38: #{sppcspc_pallas.7} parent=5 // pred_check_branch
      %254 = sbr.rel (%p252) target = $region40
    $region39: #{sppcspc_pallas.7} parent=5 // pred_region
      // Predicated region
      $region41: #{sppcspc_pallas.7} parent=39 // pred_check
        %p255 = pneg %p160
      $region42: #{sppcspc_pallas.7} parent=39 // pred_check_branch
        %257 = sbr.rel (%p255) target = $region44
      $region43: #{sppcspc_pallas.7} parent=39 // pred_region
        %p258 = scmp.lt.s32.totalorder %s14, 1
        %s259 = scalar_select %p258, %s14, 1
        %s260 = smul.addr %s259, 2
        %s261 = smul.addr %s260, 8
        %s262 = scalar_lea.vmem %s6, %s261
      $region44: #{sppcspc_pallas.7} parent=39 // pred_fallthru
        _
      // Predicated region
      $region45: #{sppcspc_pallas.7} parent=39 // pred_check
        %p263 = pneg %p186
      $region46: #{sppcspc_pallas.7} parent=39 // pred_check_branch
        %265 = sbr.rel (%p263) target = $region48
      $region47: #{sppcspc_pallas.7} parent=39 // pred_region
        %p266 = scmp.lt.s32.totalorder %s14, 1
        %s267 = scalar_select %p266, %s14, 1
        %s268 = smul.addr %s267, 2
        %s269 = smul.addr %s268, 8
        %s270 = scalar_lea.vmem %s7, %s269
      $region48: #{sppcspc_pallas.7} parent=39 // pred_fallthru
        _
    $region40: #{sppcspc_pallas.7} parent=5 // pred_fallthru
      _
    %p271 = scmp.le.s32.totalorder 1, %s14
    %p272 = scmp.lt.s32.totalorder %s14, 3
    %p273 = pnand %p271, %p272
    %p274 = pneg %p273
    // Predicated region
    $region49: #{sppcspc_pallas.7} parent=5 // pred_check
      _
    $region50: #{sppcspc_pallas.7} parent=5 // pred_check_branch
      %276 = sbr.rel (%p273) target = $region52
    $region51: #{sppcspc_pallas.7} parent=5 // pred_region
      %s277 = ssub.s32 %s14, 1
      %p278 = pneg %p35
      %p279 = pneg %p32
      %p280 = pneg %p56
      %p281 = pneg %p53
      %p282 = pneg %p77
      %p283 = pneg %p74
      %p284 = pneg %p98
      %p285 = pneg %p95
      %p286 = pneg %p119
      %p287 = pneg %p116
      %p288 = pneg %p140
      %p289 = pneg %p137
      %p290 = scmp.lt.s32.totalorder %s19, 1
      %s291 = scalar_select %p290, %s19, 1
      %s292 = smul.addr %s291, 2
      %s293 = smul.addr %s292, 8
      %s294 = scalar_lea.vmem %s6, %s293
      %p295 = pneg %p166
      %p296 = pneg %p163
      %p297 = scmp.lt.s32.totalorder %s19, 1
      %s298 = scalar_select %p297, %s19, 1
      %s299 = smul.addr %s298, 2
      %s300 = smul.addr %s299, 8
      %s301 = scalar_lea.vmem %s7, %s300
      %p302 = pneg %p192
      %p303 = pneg %p189
      %p304 = pneg %p218
      %p305 = pneg %p215
      %p306 = scmp.lt.s32.totalorder %s19, 1
      %s307 = scalar_select %p306, %s19, 1
      %s308 = smul.addr %s307, 2
      %s309 = smul.addr %s308, 8
      %s310 = scalar_lea.vmem %s8, %s309
      %p311 = scmp.lt.s32.totalorder %s19, 1
      %s312 = scalar_select %p311, %s19, 1
      %s313 = smul.addr %s312, 2
      %s314 = smul.addr %s313, 8
      %s315 = scalar_lea.vmem %s6, %s314
      %p316 = scmp.lt.s32.totalorder %s19, 1
      %s317 = scalar_select %p316, %s19, 1
      %s318 = smul.addr %s317, 2
      %s319 = smul.addr %s318, 8
      %s320 = scalar_lea.vmem %s7, %s319
      %p321 = scmp.lt.s32.totalorder %s19, 1
      %s322 = scalar_select %p321, %s19, 1
      %s323 = smul.addr %s322, 2
      %s324 = smul.addr %s323, 8
      %s325 = scalar_lea.vmem %s8, %s324
      %v326 = vld [vmem:[%s315] sm:$0xff]
      %v327 = vld [vmem:[%s315 + $0x8] sm:$0xff]
      %v328 = vld [vmem:[%s5] sm:$0xf]
      %v329 = vlaneseq
      %v330 = vshrl.u32 %v329, 7
      %v331 = vsub.s32 0, %v330
      %v332 = vrot.slane %v328, %v331
      %v333 = vlaneseq
      %v334 = vshrl.u32 %v333, 7
      %v335 = vsub.s32 2, %v334
      %v336 = vrot.slane %v328, %v335
      %v337 = vlaneseq
      %v338 = vshrl.u32 %v337, 7
      %v339 = vsub.s32 0, %v338
      %v340 = vrot.slane %v332, %v339
      %v341 = vlaneseq
      %v342 = vshrl.u32 %v341, 7
      %v343 = vsub.s32 0, %v342
      %v344 = vrot.slane %v336, %v343
      %v345 = vlaneseq
      %v346 = vshrl.u32 %v345, 7
      %v347 = vsub.s32 1, %v346
      %v348 = vrot.slane %v328, %v347
      %v349 = vlaneseq
      %v350 = vshrl.u32 %v349, 7
      %v351 = vsub.s32 3, %v350
      %v352 = vrot.slane %v328, %v351
      %v353 = vlaneseq
      %v354 = vshrl.u32 %v353, 7
      %v355 = vsub.s32 1, %v354
      %v356 = vrot.slane %v348, %v355
      %v357 = vlaneseq
      %v358 = vshrl.u32 %v357, 7
      %v359 = vsub.s32 1, %v358
      %v360 = vrot.slane %v352, %v359
      %361 = vrot.lane.b32.xlu0 %v326, 17
      %v362 = vpop.permute.xlu0 %361
      %363 = vrot.lane.b32.xlu0 %v327, 17
      %v364 = vpop.permute.xlu0 %363
      %v365 = vlaneseq
      %v366 = vand.u32 %v365, 127
      %vm367 = vcmp.lt.s32.totalorder %v366, 17
      %v368 = vsel %vm367, %v362, %v364
      %v369 = vsel %vm367, %v364, %v362
      %vm370 = vcmp.ge.s32.totalorder %v340, 1
      %vm371 = vcmp.ge.s32.totalorder %v344, 1
      %vm372 = vcmp.ge.s32.totalorder %v356, 1
      %vm373 = vcmp.ge.s32.totalorder %v360, 1
      %vm374 = vmand %vm370, %vm372
      %vm375 = vmand %vm371, %vm373
      %v376 = vsel %vm374, %v369, 0.0
      %v377 = vsel %vm375, %v368, 0.0
      %v378 = vld [vmem:[%s0] sm:$0xff]
      %379 = vrot.lane.b32.xlu0 %v326, 16
      %v380 = vpop.permute.xlu0 %379
      %381 = vrot.lane.b32.xlu0 %v327, 16
      %v382 = vpop.permute.xlu0 %381
      %vm383 = vcmp.lt.s32.totalorder %v366, 16
      %v384 = vsel %vm383, %v380, %v382
      %v385 = vsel %vm383, %v382, %v380
      %v386 = vsel %vm370, %v385, 0.0
      %v387 = vsel %vm371, %v384, 0.0
      %s388 = scalar_lea.vmem %s0, 8
      %v389 = vld [vmem:[%s388] sm:$0xff]
      %vm390 = vcmask 64512
      %v392 = vsel %vm390, %v389, 0
      %394 = vmatprep.subr.mxu0 0.0
      %395 = vmatpush1.msra.mxu0 0.0
      %396 = vmatprep.subr.mxu0 0.0
      %397 = vmatpush1.msra.mxu0 0.0
      %398 = vmatprep.subr.mxu0 0.0
      %399 = vmatpush1.msra.mxu0 0.0
      %400 = vmatprep.subr.mxu0 0.0
      %401 = vmatpush1.msra.mxu0 0.0
      %402 = vmatprep.subr.mxu0 0.0
      %403 = vmatpush1.msra.mxu0 0.0
      %404 = vmatprep.subr.mxu0 0.0
      %405 = vmatpush1.msra.mxu0 0.0
      %406 = vmatprep.subr.mxu0 0.0
      %407 = vmatpush1.msra.mxu0 0.0
      %408 = vmatprep.subr.mxu0 0.0
      %409 = vmatpush1.msra.mxu0 0.0
      %410 = vmatprep.subr.mxu0 0.0
      %411 = vmatpush1.msra.mxu0 0.0
      %412 = vmatprep.subr.mxu0 0.0
      %413 = vmatpush1.msra.mxu0 0.0
      %414 = vmatprep.subr.mxu0 0.0
      %415 = vmatpush1.msra.mxu0 0.0
      %416 = vmatprep.subr.mxu0 0.0
      %417 = vmatpush1.msra.mxu0 0.0
      %418 = vmatprep.subr.mxu0 0.0
      %419 = vmatpush1.msra.mxu0 0.0
      %420 = vmatprep.subr.mxu0 0.0
      %421 = vmatpush1.msra.mxu0 0.0
      %422 = vmatprep.subr.mxu0 0.0
      %423 = vmatpush1.msra.mxu0 0.0
      %424 = vmatprep.subr.mxu0 %v387
      %425 = vmatpush1.msra.mxu0 %v386
      %426 = vmatprep.subr.mxu0 0.0
      %427 = vmatpush2.msra.mxu0 0.0
      %428 = vmatprep.subr.mxu0 0.0
      %429 = vmatpush2.msra.mxu0 0.0
      %430 = vmatprep.subr.mxu0 0.0
      %431 = vmatpush2.msra.mxu0 0.0
      %432 = vmatprep.subr.mxu0 0.0
      %433 = vmatpush2.msra.mxu0 0.0
      %434 = vmatprep.subr.mxu0 0.0
      %435 = vmatpush2.msra.mxu0 0.0
      %436 = vmatprep.subr.mxu0 0.0
      %437 = vmatpush2.msra.mxu0 0.0
      %438 = vmatprep.subr.mxu0 0.0
      %439 = vmatpush2.msra.mxu0 0.0
      %440 = vmatprep.subr.mxu0 0.0
      %441 = vmatpush2.msra.mxu0 0.0
      %442 = vmatprep.subr.mxu0 0.0
      %443 = vmatpush2.msra.mxu0 0.0
      %444 = vmatprep.subr.mxu0 0.0
      %445 = vmatpush2.msra.mxu0 0.0
      %446 = vmatprep.subr.mxu0 0.0
      %447 = vmatpush2.msra.mxu0 0.0
      %448 = vmatprep.subr.mxu0 0.0
      %449 = vmatpush2.msra.mxu0 0.0
      %450 = vmatprep.subr.mxu0 0.0
      %451 = vmatpush2.msra.mxu0 0.0
      %452 = vmatprep.subr.mxu0 0.0
      %453 = vmatpush2.msra.mxu0 0.0
      %454 = vmatprep.subr.mxu0 0.0
      %455 = vmatpush2.msra.mxu0 0.0
      %456 = vmatprep.subr.mxu0 0.0
      %457 = vmatpush2.msra.mxu0 0.0
      %458 = vmatprep.mubr.f32.mxu0 0.0
      %459 = vmatmul.mubr.f32.gmra.mxu0 %v392
      %v460 = vpop.f32.mrf.mxu0
      %v461 = vadd.f32 0.0, %v460
      %v462 = vpop.f32.mrf.mxu0
      %v463 = vadd.f32 0.0, %v462
      %464 = vdwg.mxu0
      %v466 = vsel %vm390, %v378, 0
      %468 = vmatprep.subr.mxu0 0.0
      %469 = vmatpush1.msra.mxu0 0.0
      %470 = vmatprep.subr.mxu0 0.0
      %471 = vmatpush1.msra.mxu0 0.0
      %472 = vmatprep.subr.mxu0 0.0
      %473 = vmatpush1.msra.mxu0 0.0
      %474 = vmatprep.subr.mxu0 0.0
      %475 = vmatpush1.msra.mxu0 0.0
      %476 = vmatprep.subr.mxu0 0.0
      %477 = vmatpush1.msra.mxu0 0.0
      %478 = vmatprep.subr.mxu0 0.0
      %479 = vmatpush1.msra.mxu0 0.0
      %480 = vmatprep.subr.mxu0 0.0
      %481 = vmatpush1.msra.mxu0 0.0
      %482 = vmatprep.subr.mxu0 0.0
      %483 = vmatpush1.msra.mxu0 0.0
      %484 = vmatprep.subr.mxu0 0.0
      %485 = vmatpush1.msra.mxu0 0.0
      %486 = vmatprep.subr.mxu0 0.0
      %487 = vmatpush1.msra.mxu0 0.0
      %488 = vmatprep.subr.mxu0 0.0
      %489 = vmatpush1.msra.mxu0 0.0
      %490 = vmatprep.subr.mxu0 0.0
      %491 = vmatpush1.msra.mxu0 0.0
      %492 = vmatprep.subr.mxu0 0.0
      %493 = vmatpush1.msra.mxu0 0.0
      %494 = vmatprep.subr.mxu0 0.0
      %495 = vmatpush1.msra.mxu0 0.0
      %496 = vmatprep.subr.mxu0 0.0
      %497 = vmatpush1.msra.mxu0 0.0
      %498 = vmatprep.subr.mxu0 %v377
      %499 = vmatpush1.msra.mxu0 %v376
      %500 = vmatprep.subr.mxu0 0.0
      %501 = vmatpush2.msra.mxu0 0.0
      %502 = vmatprep.subr.mxu0 0.0
      %503 = vmatpush2.msra.mxu0 0.0
      %504 = vmatprep.subr.mxu0 0.0
      %505 = vmatpush2.msra.mxu0 0.0
      %506 = vmatprep.subr.mxu0 0.0
      %507 = vmatpush2.msra.mxu0 0.0
      %508 = vmatprep.subr.mxu0 0.0
      %509 = vmatpush2.msra.mxu0 0.0
      %510 = vmatprep.subr.mxu0 0.0
      %511 = vmatpush2.msra.mxu0 0.0
      %512 = vmatprep.subr.mxu0 0.0
      %513 = vmatpush2.msra.mxu0 0.0
      %514 = vmatprep.subr.mxu0 0.0
      %515 = vmatpush2.msra.mxu0 0.0
      %516 = vmatprep.subr.mxu0 0.0
      %517 = vmatpush2.msra.mxu0 0.0
      %518 = vmatprep.subr.mxu0 0.0
      %519 = vmatpush2.msra.mxu0 0.0
      %520 = vmatprep.subr.mxu0 0.0
      %521 = vmatpush2.msra.mxu0 0.0
      %522 = vmatprep.subr.mxu0 0.0
      %523 = vmatpush2.msra.mxu0 0.0
      %524 = vmatprep.subr.mxu0 0.0
      %525 = vmatpush2.msra.mxu0 0.0
      %526 = vmatprep.subr.mxu0 0.0
      %527 = vmatpush2.msra.mxu0 0.0
      %528 = vmatprep.subr.mxu0 0.0
      %529 = vmatpush2.msra.mxu0 0.0
      %530 = vmatprep.subr.mxu0 0.0
      %531 = vmatpush2.msra.mxu0 0.0
      %532 = vmatprep.mubr.f32.mxu0 0.0
      %533 = vmatmul.mubr.f32.gmra.mxu0 %v466
      %v534 = vpop.f32.mrf.mxu0
      %v535 = vadd.f32 %v461, %v534
      %v536 = vpop.f32.mrf.mxu0
      %v537 = vadd.f32 %v463, %v536
      %538 = vdwg.mxu0
      %539 = vrot.lane.b32.xlu0 %v326, 15
      %v540 = vpop.permute.xlu0 %539
      %541 = vrot.lane.b32.xlu0 %v327, 15
      %v542 = vpop.permute.xlu0 %541
      %vm543 = vcmp.lt.s32.totalorder %v366, 15
      %v544 = vsel %vm543, %v540, %v542
      %v545 = vsel %vm543, %v542, %v540
      %vm546 = vcmp.lt.s32.totalorder %v356, 15
      %vm547 = vcmp.lt.s32.totalorder %v360, 15
      %vm548 = vmand %vm370, %vm546
      %vm549 = vmand %vm371, %vm547
      %v550 = vsel %vm548, %v545, 0.0
      %v551 = vsel %vm549, %v544, 0.0
      %s552 = scalar_lea.vmem %s0, 16
      %v553 = vld [vmem:[%s552] sm:$0xff]
      %v555 = vsel %vm390, %v553, 0
      %557 = vmatprep.subr.mxu0 0.0
      %558 = vmatpush1.msra.mxu0 0.0
      %559 = vmatprep.subr.mxu0 0.0
      %560 = vmatpush1.msra.mxu0 0.0
      %561 = vmatprep.subr.mxu0 0.0
      %562 = vmatpush1.msra.mxu0 0.0
      %563 = vmatprep.subr.mxu0 0.0
      %564 = vmatpush1.msra.mxu0 0.0
      %565 = vmatprep.subr.mxu0 0.0
      %566 = vmatpush1.msra.mxu0 0.0
      %567 = vmatprep.subr.mxu0 0.0
      %568 = vmatpush1.msra.mxu0 0.0
      %569 = vmatprep.subr.mxu0 0.0
      %570 = vmatpush1.msra.mxu0 0.0
      %571 = vmatprep.subr.mxu0 0.0
      %572 = vmatpush1.msra.mxu0 0.0
      %573 = vmatprep.subr.mxu0 0.0
      %574 = vmatpush1.msra.mxu0 0.0
      %575 = vmatprep.subr.mxu0 0.0
      %576 = vmatpush1.msra.mxu0 0.0
      %577 = vmatprep.subr.mxu0 0.0
      %578 = vmatpush1.msra.mxu0 0.0
      %579 = vmatprep.subr.mxu0 0.0
      %580 = vmatpush1.msra.mxu0 0.0
      %581 = vmatprep.subr.mxu0 0.0
      %582 = vmatpush1.msra.mxu0 0.0
      %583 = vmatprep.subr.mxu0 0.0
      %584 = vmatpush1.msra.mxu0 0.0
      %585 = vmatprep.subr.mxu0 0.0
      %586 = vmatpush1.msra.mxu0 0.0
      %587 = vmatprep.subr.mxu0 %v551
      %588 = vmatpush1.msra.mxu0 %v550
      %589 = vmatprep.subr.mxu0 0.0
      %590 = vmatpush2.msra.mxu0 0.0
      %591 = vmatprep.subr.mxu0 0.0
      %592 = vmatpush2.msra.mxu0 0.0
      %593 = vmatprep.subr.mxu0 0.0
      %594 = vmatpush2.msra.mxu0 0.0
      %595 = vmatprep.subr.mxu0 0.0
      %596 = vmatpush2.msra.mxu0 0.0
      %597 = vmatprep.subr.mxu0 0.0
      %598 = vmatpush2.msra.mxu0 0.0
      %599 = vmatprep.subr.mxu0 0.0
      %600 = vmatpush2.msra.mxu0 0.0
      %601 = vmatprep.subr.mxu0 0.0
      %602 = vmatpush2.msra.mxu0 0.0
      %603 = vmatprep.subr.mxu0 0.0
      %604 = vmatpush2.msra.mxu0 0.0
      %605 = vmatprep.subr.mxu0 0.0
      %606 = vmatpush2.msra.mxu0 0.0
      %607 = vmatprep.subr.mxu0 0.0
      %608 = vmatpush2.msra.mxu0 0.0
      %609 = vmatprep.subr.mxu0 0.0
      %610 = vmatpush2.msra.mxu0 0.0
      %611 = vmatprep.subr.mxu0 0.0
      %612 = vmatpush2.msra.mxu0 0.0
      %613 = vmatprep.subr.mxu0 0.0
      %614 = vmatpush2.msra.mxu0 0.0
      %615 = vmatprep.subr.mxu0 0.0
      %616 = vmatpush2.msra.mxu0 0.0
      %617 = vmatprep.subr.mxu0 0.0
      %618 = vmatpush2.msra.mxu0 0.0
      %619 = vmatprep.subr.mxu0 0.0
      %620 = vmatpush2.msra.mxu0 0.0
      %621 = vmatprep.mubr.f32.mxu0 0.0
      %622 = vmatmul.mubr.f32.gmra.mxu0 %v555
      %v623 = vpop.f32.mrf.mxu0
      %v624 = vadd.f32 0.0, %v623
      %v625 = vpop.f32.mrf.mxu0
      %v626 = vadd.f32 0.0, %v625
      %627 = vdwg.mxu0
      %v628 = vadd.f32 %v535, %v624
      %v629 = vadd.f32 %v537, %v626
      %630 = vrot.lane.b32.xlu0 %v326, 1
      %v631 = vpop.permute.xlu0 %630
      %632 = vrot.lane.b32.xlu0 %v327, 1
      %v633 = vpop.permute.xlu0 %632
      %vm634 = vcmp.lt.s32.totalorder %v366, 1
      %v635 = vsel %vm634, %v631, %v633
      %v636 = vsel %vm634, %v633, %v631
      %v637 = vsel %vm372, %v636, 0.0
      %v638 = vsel %vm373, %v635, 0.0
      %s639 = scalar_lea.vmem %s0, 24
      %v640 = vld [vmem:[%s639] sm:$0xff]
      %v642 = vsel %vm390, %v640, 0
      %644 = vmatprep.subr.mxu0 0.0
      %645 = vmatpush1.msra.mxu0 0.0
      %646 = vmatprep.subr.mxu0 0.0
      %647 = vmatpush1.msra.mxu0 0.0
      %648 = vmatprep.subr.mxu0 0.0
      %649 = vmatpush1.msra.mxu0 0.0
      %650 = vmatprep.subr.mxu0 0.0
      %651 = vmatpush1.msra.mxu0 0.0
      %652 = vmatprep.subr.mxu0 0.0
      %653 = vmatpush1.msra.mxu0 0.0
      %654 = vmatprep.subr.mxu0 0.0
      %655 = vmatpush1.msra.mxu0 0.0
      %656 = vmatprep.subr.mxu0 0.0
      %657 = vmatpush1.msra.mxu0 0.0
      %658 = vmatprep.subr.mxu0 0.0
      %659 = vmatpush1.msra.mxu0 0.0
      %660 = vmatprep.subr.mxu0 0.0
      %661 = vmatpush1.msra.mxu0 0.0
      %662 = vmatprep.subr.mxu0 0.0
      %663 = vmatpush1.msra.mxu0 0.0
      %664 = vmatprep.subr.mxu0 0.0
      %665 = vmatpush1.msra.mxu0 0.0
      %666 = vmatprep.subr.mxu0 0.0
      %667 = vmatpush1.msra.mxu0 0.0
      %668 = vmatprep.subr.mxu0 0.0
      %669 = vmatpush1.msra.mxu0 0.0
      %670 = vmatprep.subr.mxu0 0.0
      %671 = vmatpush1.msra.mxu0 0.0
      %672 = vmatprep.subr.mxu0 0.0
      %673 = vmatpush1.msra.mxu0 0.0
      %674 = vmatprep.subr.mxu0 %v638
      %675 = vmatpush1.msra.mxu0 %v637
      %676 = vmatprep.subr.mxu0 0.0
      %677 = vmatpush2.msra.mxu0 0.0
      %678 = vmatprep.subr.mxu0 0.0
      %679 = vmatpush2.msra.mxu0 0.0
      %680 = vmatprep.subr.mxu0 0.0
      %681 = vmatpush2.msra.mxu0 0.0
      %682 = vmatprep.subr.mxu0 0.0
      %683 = vmatpush2.msra.mxu0 0.0
      %684 = vmatprep.subr.mxu0 0.0
      %685 = vmatpush2.msra.mxu0 0.0
      %686 = vmatprep.subr.mxu0 0.0
      %687 = vmatpush2.msra.mxu0 0.0
      %688 = vmatprep.subr.mxu0 0.0
      %689 = vmatpush2.msra.mxu0 0.0
      %690 = vmatprep.subr.mxu0 0.0
      %691 = vmatpush2.msra.mxu0 0.0
      %692 = vmatprep.subr.mxu0 0.0
      %693 = vmatpush2.msra.mxu0 0.0
      %694 = vmatprep.subr.mxu0 0.0
      %695 = vmatpush2.msra.mxu0 0.0
      %696 = vmatprep.subr.mxu0 0.0
      %697 = vmatpush2.msra.mxu0 0.0
      %698 = vmatprep.subr.mxu0 0.0
      %699 = vmatpush2.msra.mxu0 0.0
      %700 = vmatprep.subr.mxu0 0.0
      %701 = vmatpush2.msra.mxu0 0.0
      %702 = vmatprep.subr.mxu0 0.0
      %703 = vmatpush2.msra.mxu0 0.0
      %704 = vmatprep.subr.mxu0 0.0
      %705 = vmatpush2.msra.mxu0 0.0
      %706 = vmatprep.subr.mxu0 0.0
      %707 = vmatpush2.msra.mxu0 0.0
      %708 = vmatprep.mubr.f32.mxu0 0.0
      %709 = vmatmul.mubr.f32.gmra.mxu0 %v642
      %v710 = vpop.f32.mrf.mxu0
      %v711 = vadd.f32 0.0, %v710
      %v712 = vpop.f32.mrf.mxu0
      %v713 = vadd.f32 0.0, %v712
      %714 = vdwg.mxu0
      %v715 = vadd.f32 %v628, %v711
      %v716 = vadd.f32 %v629, %v713
      %s717 = scalar_lea.vmem %s0, 32
      %v718 = vld [vmem:[%s717] sm:$0xff]
      %v720 = vsel %vm390, %v718, 0
      %722 = vmatprep.subr.mxu0 0.0
      %723 = vmatpush1.msra.mxu0 0.0
      %724 = vmatprep.subr.mxu0 0.0
      %725 = vmatpush1.msra.mxu0 0.0
      %726 = vmatprep.subr.mxu0 0.0
      %727 = vmatpush1.msra.mxu0 0.0
      %728 = vmatprep.subr.mxu0 0.0
      %729 = vmatpush1.msra.mxu0 0.0
      %730 = vmatprep.subr.mxu0 0.0
      %731 = vmatpush1.msra.mxu0 0.0
      %732 = vmatprep.subr.mxu0 0.0
      %733 = vmatpush1.msra.mxu0 0.0
      %734 = vmatprep.subr.mxu0 0.0
      %735 = vmatpush1.msra.mxu0 0.0
      %736 = vmatprep.subr.mxu0 0.0
      %737 = vmatpush1.msra.mxu0 0.0
      %738 = vmatprep.subr.mxu0 0.0
      %739 = vmatpush1.msra.mxu0 0.0
      %740 = vmatprep.subr.mxu0 0.0
      %741 = vmatpush1.msra.mxu0 0.0
      %742 = vmatprep.subr.mxu0 0.0
      %743 = vmatpush1.msra.mxu0 0.0
      %744 = vmatprep.subr.mxu0 0.0
      %745 = vmatpush1.msra.mxu0 0.0
      %746 = vmatprep.subr.mxu0 0.0
      %747 = vmatpush1.msra.mxu0 0.0
      %748 = vmatprep.subr.mxu0 0.0
      %749 = vmatpush1.msra.mxu0 0.0
      %750 = vmatprep.subr.mxu0 0.0
      %751 = vmatpush1.msra.mxu0 0.0
      %752 = vmatprep.subr.mxu0 %v327
      %753 = vmatpush1.msra.mxu0 %v326
      %754 = vmatprep.subr.mxu0 0.0
      %755 = vmatpush2.msra.mxu0 0.0
      %756 = vmatprep.subr.mxu0 0.0
      %757 = vmatpush2.msra.mxu0 0.0
      %758 = vmatprep.subr.mxu0 0.0
      %759 = vmatpush2.msra.mxu0 0.0
      %760 = vmatprep.subr.mxu0 0.0
      %761 = vmatpush2.msra.mxu0 0.0
      %762 = vmatprep.subr.mxu0 0.0
      %763 = vmatpush2.msra.mxu0 0.0
      %764 = vmatprep.subr.mxu0 0.0
      %765 = vmatpush2.msra.mxu0 0.0
      %766 = vmatprep.subr.mxu0 0.0
      %767 = vmatpush2.msra.mxu0 0.0
      %768 = vmatprep.subr.mxu0 0.0
      %769 = vmatpush2.msra.mxu0 0.0
      %770 = vmatprep.subr.mxu0 0.0
      %771 = vmatpush2.msra.mxu0 0.0
      %772 = vmatprep.subr.mxu0 0.0
      %773 = vmatpush2.msra.mxu0 0.0
      %774 = vmatprep.subr.mxu0 0.0
      %775 = vmatpush2.msra.mxu0 0.0
      %776 = vmatprep.subr.mxu0 0.0
      %777 = vmatpush2.msra.mxu0 0.0
      %778 = vmatprep.subr.mxu0 0.0
      %779 = vmatpush2.msra.mxu0 0.0
      %780 = vmatprep.subr.mxu0 0.0
      %781 = vmatpush2.msra.mxu0 0.0
      %782 = vmatprep.subr.mxu0 0.0
      %783 = vmatpush2.msra.mxu0 0.0
      %784 = vmatprep.subr.mxu0 0.0
      %785 = vmatpush2.msra.mxu0 0.0
      %786 = vmatprep.mubr.f32.mxu0 0.0
      %787 = vmatmul.mubr.f32.gmra.mxu0 %v720
      %v788 = vpop.f32.mrf.mxu0
      %v789 = vadd.f32 0.0, %v788
      %v790 = vpop.f32.mrf.mxu0
      %v791 = vadd.f32 0.0, %v790
      %792 = vdwg.mxu0
      %v793 = vadd.f32 %v715, %v789
      %v794 = vadd.f32 %v716, %v791
      %795 = vrot.lane.b32.xlu0 %v326, 127
      %v796 = vpop.permute.xlu0 %795
      %797 = vrot.lane.b32.xlu0 %v327, 127
      %v798 = vpop.permute.xlu0 %797
      %vm799 = vcmp.lt.s32.totalorder %v366, 127
      %v800 = vsel %vm799, %v796, %v798
      %v801 = vsel %vm799, %v798, %v796
      %v802 = vsel %vm546, %v800, 0.0
      %v803 = vsel %vm547, %v801, 0.0
      %s804 = scalar_lea.vmem %s0, 40
      %v805 = vld [vmem:[%s804] sm:$0xff]
      %v807 = vsel %vm390, %v805, 0
      %809 = vmatprep.subr.mxu0 0.0
      %810 = vmatpush1.msra.mxu0 0.0
      %811 = vmatprep.subr.mxu0 0.0
      %812 = vmatpush1.msra.mxu0 0.0
      %813 = vmatprep.subr.mxu0 0.0
      %814 = vmatpush1.msra.mxu0 0.0
      %815 = vmatprep.subr.mxu0 0.0
      %816 = vmatpush1.msra.mxu0 0.0
      %817 = vmatprep.subr.mxu0 0.0
      %818 = vmatpush1.msra.mxu0 0.0
      %819 = vmatprep.subr.mxu0 0.0
      %820 = vmatpush1.msra.mxu0 0.0
      %821 = vmatprep.subr.mxu0 0.0
      %822 = vmatpush1.msra.mxu0 0.0
      %823 = vmatprep.subr.mxu0 0.0
      %824 = vmatpush1.msra.mxu0 0.0
      %825 = vmatprep.subr.mxu0 0.0
      %826 = vmatpush1.msra.mxu0 0.0
      %827 = vmatprep.subr.mxu0 0.0
      %828 = vmatpush1.msra.mxu0 0.0
      %829 = vmatprep.subr.mxu0 0.0
      %830 = vmatpush1.msra.mxu0 0.0
      %831 = vmatprep.subr.mxu0 0.0
      %832 = vmatpush1.msra.mxu0 0.0
      %833 = vmatprep.subr.mxu0 0.0
      %834 = vmatpush1.msra.mxu0 0.0
      %835 = vmatprep.subr.mxu0 0.0
      %836 = vmatpush1.msra.mxu0 0.0
      %837 = vmatprep.subr.mxu0 0.0
      %838 = vmatpush1.msra.mxu0 0.0
      %839 = vmatprep.subr.mxu0 %v803
      %840 = vmatpush1.msra.mxu0 %v802
      %841 = vmatprep.subr.mxu0 0.0
      %842 = vmatpush2.msra.mxu0 0.0
      %843 = vmatprep.subr.mxu0 0.0
      %844 = vmatpush2.msra.mxu0 0.0
      %845 = vmatprep.subr.mxu0 0.0
      %846 = vmatpush2.msra.mxu0 0.0
      %847 = vmatprep.subr.mxu0 0.0
      %848 = vmatpush2.msra.mxu0 0.0
      %849 = vmatprep.subr.mxu0 0.0
      %850 = vmatpush2.msra.mxu0 0.0
      %851 = vmatprep.subr.mxu0 0.0
      %852 = vmatpush2.msra.mxu0 0.0
      %853 = vmatprep.subr.mxu0 0.0
      %854 = vmatpush2.msra.mxu0 0.0
      %855 = vmatprep.subr.mxu0 0.0
      %856 = vmatpush2.msra.mxu0 0.0
      %857 = vmatprep.subr.mxu0 0.0
      %858 = vmatpush2.msra.mxu0 0.0
      %859 = vmatprep.subr.mxu0 0.0
      %860 = vmatpush2.msra.mxu0 0.0
      %861 = vmatprep.subr.mxu0 0.0
      %862 = vmatpush2.msra.mxu0 0.0
      %863 = vmatprep.subr.mxu0 0.0
      %864 = vmatpush2.msra.mxu0 0.0
      %865 = vmatprep.subr.mxu0 0.0
      %866 = vmatpush2.msra.mxu0 0.0
      %867 = vmatprep.subr.mxu0 0.0
      %868 = vmatpush2.msra.mxu0 0.0
      %869 = vmatprep.subr.mxu0 0.0
      %870 = vmatpush2.msra.mxu0 0.0
      %871 = vmatprep.subr.mxu0 0.0
      %872 = vmatpush2.msra.mxu0 0.0
      %873 = vmatprep.mubr.f32.mxu0 0.0
      %874 = vmatmul.mubr.f32.gmra.mxu0 %v807
      %v875 = vpop.f32.mrf.mxu0
      %v876 = vadd.f32 0.0, %v875
      %v877 = vpop.f32.mrf.mxu0
      %v878 = vadd.f32 0.0, %v877
      %879 = vdwg.mxu0
      %v880 = vadd.f32 %v793, %v876
      %v881 = vadd.f32 %v794, %v878
      %882 = vrot.lane.b32.xlu0 %v326, 113
      %v883 = vpop.permute.xlu0 %882
      %884 = vrot.lane.b32.xlu0 %v327, 113
      %v885 = vpop.permute.xlu0 %884
      %vm886 = vcmp.lt.s32.totalorder %v366, 113
      %v887 = vsel %vm886, %v883, %v885
      %v888 = vsel %vm886, %v885, %v883
      %vm889 = vcmp.lt.s32.totalorder %v340, 15
      %vm890 = vcmp.lt.s32.totalorder %v344, 15
      %vm891 = vmand %vm889, %vm372
      %vm892 = vmand %vm890, %vm373
      %v893 = vsel %vm891, %v887, 0.0
      %v894 = vsel %vm892, %v888, 0.0
      %s895 = scalar_lea.vmem %s0, 48
      %v896 = vld [vmem:[%s895] sm:$0xff]
      %v898 = vsel %vm390, %v896, 0
      %900 = vmatprep.subr.mxu0 0.0
      %901 = vmatpush1.msra.mxu0 0.0
      %902 = vmatprep.subr.mxu0 0.0
      %903 = vmatpush1.msra.mxu0 0.0
      %904 = vmatprep.subr.mxu0 0.0
      %905 = vmatpush1.msra.mxu0 0.0
      %906 = vmatprep.subr.mxu0 0.0
      %907 = vmatpush1.msra.mxu0 0.0
      %908 = vmatprep.subr.mxu0 0.0
      %909 = vmatpush1.msra.mxu0 0.0
      %910 = vmatprep.subr.mxu0 0.0
      %911 = vmatpush1.msra.mxu0 0.0
      %912 = vmatprep.subr.mxu0 0.0
      %913 = vmatpush1.msra.mxu0 0.0
      %914 = vmatprep.subr.mxu0 0.0
      %915 = vmatpush1.msra.mxu0 0.0
      %916 = vmatprep.subr.mxu0 0.0
      %917 = vmatpush1.msra.mxu0 0.0
      %918 = vmatprep.subr.mxu0 0.0
      %919 = vmatpush1.msra.mxu0 0.0
      %920 = vmatprep.subr.mxu0 0.0
      %921 = vmatpush1.msra.mxu0 0.0
      %922 = vmatprep.subr.mxu0 0.0
      %923 = vmatpush1.msra.mxu0 0.0
      %924 = vmatprep.subr.mxu0 0.0
      %925 = vmatpush1.msra.mxu0 0.0
      %926 = vmatprep.subr.mxu0 0.0
      %927 = vmatpush1.msra.mxu0 0.0
      %928 = vmatprep.subr.mxu0 0.0
      %929 = vmatpush1.msra.mxu0 0.0
      %930 = vmatprep.subr.mxu0 %v894
      %931 = vmatpush1.msra.mxu0 %v893
      %932 = vmatprep.subr.mxu0 0.0
      %933 = vmatpush2.msra.mxu0 0.0
      %934 = vmatprep.subr.mxu0 0.0
      %935 = vmatpush2.msra.mxu0 0.0
      %936 = vmatprep.subr.mxu0 0.0
      %937 = vmatpush2.msra.mxu0 0.0
      %938 = vmatprep.subr.mxu0 0.0
      %939 = vmatpush2.msra.mxu0 0.0
      %940 = vmatprep.subr.mxu0 0.0
      %941 = vmatpush2.msra.mxu0 0.0
      %942 = vmatprep.subr.mxu0 0.0
      %943 = vmatpush2.msra.mxu0 0.0
      %944 = vmatprep.subr.mxu0 0.0
      %945 = vmatpush2.msra.mxu0 0.0
      %946 = vmatprep.subr.mxu0 0.0
      %947 = vmatpush2.msra.mxu0 0.0
      %948 = vmatprep.subr.mxu0 0.0
      %949 = vmatpush2.msra.mxu0 0.0
      %950 = vmatprep.subr.mxu0 0.0
      %951 = vmatpush2.msra.mxu0 0.0
      %952 = vmatprep.subr.mxu0 0.0
      %953 = vmatpush2.msra.mxu0 0.0
      %954 = vmatprep.subr.mxu0 0.0
      %955 = vmatpush2.msra.mxu0 0.0
      %956 = vmatprep.subr.mxu0 0.0
      %957 = vmatpush2.msra.mxu0 0.0
      %958 = vmatprep.subr.mxu0 0.0
      %959 = vmatpush2.msra.mxu0 0.0
      %960 = vmatprep.subr.mxu0 0.0
      %961 = vmatpush2.msra.mxu0 0.0
      %962 = vmatprep.subr.mxu0 0.0
      %963 = vmatpush2.msra.mxu0 0.0
      %964 = vmatprep.mubr.f32.mxu0 0.0
      %965 = vmatmul.mubr.f32.gmra.mxu0 %v898
      %v966 = vpop.f32.mrf.mxu0
      %v967 = vadd.f32 0.0, %v966
      %v968 = vpop.f32.mrf.mxu0
      %v969 = vadd.f32 0.0, %v968
      %970 = vdwg.mxu0
      %v971 = vadd.f32 %v880, %v967
      %v972 = vadd.f32 %v881, %v969
      %973 = vrot.lane.b32.xlu0 %v326, 112
      %v974 = vpop.permute.xlu0 %973
      %975 = vrot.lane.b32.xlu0 %v327, 112
      %v976 = vpop.permute.xlu0 %975
      %vm977 = vcmp.lt.s32.totalorder %v366, 112
      %v978 = vsel %vm977, %v974, %v976
      %v979 = vsel %vm977, %v976, %v974
      %v980 = vsel %vm889, %v978, 0.0
      %v981 = vsel %vm890, %v979, 0.0
      %s982 = scalar_lea.vmem %s0, 56
      %v983 = vld [vmem:[%s982] sm:$0xff]
      %v985 = vsel %vm390, %v983, 0
      %987 = vmatprep.subr.mxu0 0.0
      %988 = vmatpush1.msra.mxu0 0.0
      %989 = vmatprep.subr.mxu0 0.0
      %990 = vmatpush1.msra.mxu0 0.0
      %991 = vmatprep.subr.mxu0 0.0
      %992 = vmatpush1.msra.mxu0 0.0
      %993 = vmatprep.subr.mxu0 0.0
      %994 = vmatpush1.msra.mxu0 0.0
      %995 = vmatprep.subr.mxu0 0.0
      %996 = vmatpush1.msra.mxu0 0.0
      %997 = vmatprep.subr.mxu0 0.0
      %998 = vmatpush1.msra.mxu0 0.0
      %999 = vmatprep.subr.mxu0 0.0
      %1000 = vmatpush1.msra.mxu0 0.0
      %1001 = vmatprep.subr.mxu0 0.0
      %1002 = vmatpush1.msra.mxu0 0.0
      %1003 = vmatprep.subr.mxu0 0.0
      %1004 = vmatpush1.msra.mxu0 0.0
      %1005 = vmatprep.subr.mxu0 0.0
      %1006 = vmatpush1.msra.mxu0 0.0
      %1007 = vmatprep.subr.mxu0 0.0
      %1008 = vmatpush1.msra.mxu0 0.0
      %1009 = vmatprep.subr.mxu0 0.0
      %1010 = vmatpush1.msra.mxu0 0.0
      %1011 = vmatprep.subr.mxu0 0.0
      %1012 = vmatpush1.msra.mxu0 0.0
      %1013 = vmatprep.subr.mxu0 0.0
      %1014 = vmatpush1.msra.mxu0 0.0
      %1015 = vmatprep.subr.mxu0 0.0
      %1016 = vmatpush1.msra.mxu0 0.0
      %1017 = vmatprep.subr.mxu0 %v981
      %1018 = vmatpush1.msra.mxu0 %v980
      %1019 = vmatprep.subr.mxu0 0.0
      %1020 = vmatpush2.msra.mxu0 0.0
      %1021 = vmatprep.subr.mxu0 0.0
      %1022 = vmatpush2.msra.mxu0 0.0
      %1023 = vmatprep.subr.mxu0 0.0
      %1024 = vmatpush2.msra.mxu0 0.0
      %1025 = vmatprep.subr.mxu0 0.0
      %1026 = vmatpush2.msra.mxu0 0.0
      %1027 = vmatprep.subr.mxu0 0.0
      %1028 = vmatpush2.msra.mxu0 0.0
      %1029 = vmatprep.subr.mxu0 0.0
      %1030 = vmatpush2.msra.mxu0 0.0
      %1031 = vmatprep.subr.mxu0 0.0
      %1032 = vmatpush2.msra.mxu0 0.0
      %1033 = vmatprep.subr.mxu0 0.0
      %1034 = vmatpush2.msra.mxu0 0.0
      %1035 = vmatprep.subr.mxu0 0.0
      %1036 = vmatpush2.msra.mxu0 0.0
      %1037 = vmatprep.subr.mxu0 0.0
      %1038 = vmatpush2.msra.mxu0 0.0
      %1039 = vmatprep.subr.mxu0 0.0
      %1040 = vmatpush2.msra.mxu0 0.0
      %1041 = vmatprep.subr.mxu0 0.0
      %1042 = vmatpush2.msra.mxu0 0.0
      %1043 = vmatprep.subr.mxu0 0.0
      %1044 = vmatpush2.msra.mxu0 0.0
      %1045 = vmatprep.subr.mxu0 0.0
      %1046 = vmatpush2.msra.mxu0 0.0
      %1047 = vmatprep.subr.mxu0 0.0
      %1048 = vmatpush2.msra.mxu0 0.0
      %1049 = vmatprep.subr.mxu0 0.0
      %1050 = vmatpush2.msra.mxu0 0.0
      %1051 = vmatprep.mubr.f32.mxu0 0.0
      %1052 = vmatmul.mubr.f32.gmra.mxu0 %v985
      %v1053 = vpop.f32.mrf.mxu0
      %v1054 = vadd.f32 0.0, %v1053
      %v1055 = vpop.f32.mrf.mxu0
      %v1056 = vadd.f32 0.0, %v1055
      %1057 = vdwg.mxu0
      %v1058 = vadd.f32 %v971, %v1054
      %v1059 = vadd.f32 %v972, %v1056
      %1060 = vrot.lane.b32.xlu0 %v326, 111
      %v1061 = vpop.permute.xlu0 %1060
      %1062 = vrot.lane.b32.xlu0 %v327, 111
      %v1063 = vpop.permute.xlu0 %1062
      %vm1064 = vcmp.lt.s32.totalorder %v366, 111
      %v1065 = vsel %vm1064, %v1061, %v1063
      %v1066 = vsel %vm1064, %v1063, %v1061
      %vm1067 = vmand %vm889, %vm546
      %vm1068 = vmand %vm890, %vm547
      %v1069 = vsel %vm1067, %v1065, 0.0
      %v1070 = vsel %vm1068, %v1066, 0.0
      %s1071 = scalar_lea.vmem %s0, 64
      %v1072 = vld [vmem:[%s1071] sm:$0xff]
      %v1074 = vsel %vm390, %v1072, 0
      %1076 = vmatprep.subr.mxu0 0.0
      %1077 = vmatpush1.msra.mxu0 0.0
      %1078 = vmatprep.subr.mxu0 0.0
      %1079 = vmatpush1.msra.mxu0 0.0
      %1080 = vmatprep.subr.mxu0 0.0
      %1081 = vmatpush1.msra.mxu0 0.0
      %1082 = vmatprep.subr.mxu0 0.0
      %1083 = vmatpush1.msra.mxu0 0.0
      %1084 = vmatprep.subr.mxu0 0.0
      %1085 = vmatpush1.msra.mxu0 0.0
      %1086 = vmatprep.subr.mxu0 0.0
      %1087 = vmatpush1.msra.mxu0 0.0
      %1088 = vmatprep.subr.mxu0 0.0
      %1089 = vmatpush1.msra.mxu0 0.0
      %1090 = vmatprep.subr.mxu0 0.0
      %1091 = vmatpush1.msra.mxu0 0.0
      %1092 = vmatprep.subr.mxu0 0.0
      %1093 = vmatpush1.msra.mxu0 0.0
      %1094 = vmatprep.subr.mxu0 0.0
      %1095 = vmatpush1.msra.mxu0 0.0
      %1096 = vmatprep.subr.mxu0 0.0
      %1097 = vmatpush1.msra.mxu0 0.0
      %1098 = vmatprep.subr.mxu0 0.0
      %1099 = vmatpush1.msra.mxu0 0.0
      %1100 = vmatprep.subr.mxu0 0.0
      %1101 = vmatpush1.msra.mxu0 0.0
      %1102 = vmatprep.subr.mxu0 0.0
      %1103 = vmatpush1.msra.mxu0 0.0
      %1104 = vmatprep.subr.mxu0 0.0
      %1105 = vmatpush1.msra.mxu0 0.0
      %1106 = vmatprep.subr.mxu0 %v1070
      %1107 = vmatpush1.msra.mxu0 %v1069
      %1108 = vmatprep.subr.mxu0 0.0
      %1109 = vmatpush2.msra.mxu0 0.0
      %1110 = vmatprep.subr.mxu0 0.0
      %1111 = vmatpush2.msra.mxu0 0.0
      %1112 = vmatprep.subr.mxu0 0.0
      %1113 = vmatpush2.msra.mxu0 0.0
      %1114 = vmatprep.subr.mxu0 0.0
      %1115 = vmatpush2.msra.mxu0 0.0
      %1116 = vmatprep.subr.mxu0 0.0
      %1117 = vmatpush2.msra.mxu0 0.0
      %1118 = vmatprep.subr.mxu0 0.0
      %1119 = vmatpush2.msra.mxu0 0.0
      %1120 = vmatprep.subr.mxu0 0.0
      %1121 = vmatpush2.msra.mxu0 0.0
      %1122 = vmatprep.subr.mxu0 0.0
      %1123 = vmatpush2.msra.mxu0 0.0
      %1124 = vmatprep.subr.mxu0 0.0
      %1125 = vmatpush2.msra.mxu0 0.0
      %1126 = vmatprep.subr.mxu0 0.0
      %1127 = vmatpush2.msra.mxu0 0.0
      %1128 = vmatprep.subr.mxu0 0.0
      %1129 = vmatpush2.msra.mxu0 0.0
      %1130 = vmatprep.subr.mxu0 0.0
      %1131 = vmatpush2.msra.mxu0 0.0
      %1132 = vmatprep.subr.mxu0 0.0
      %1133 = vmatpush2.msra.mxu0 0.0
      %1134 = vmatprep.subr.mxu0 0.0
      %1135 = vmatpush2.msra.mxu0 0.0
      %1136 = vmatprep.subr.mxu0 0.0
      %1137 = vmatpush2.msra.mxu0 0.0
      %1138 = vmatprep.subr.mxu0 0.0
      %1139 = vmatpush2.msra.mxu0 0.0
      %1140 = vmatprep.mubr.f32.mxu0 0.0
      %1141 = vmatmul.mubr.f32.gmra.mxu0 %v1074
      %v1142 = vpop.f32.mrf.mxu0
      %v1143 = vadd.f32 0.0, %v1142
      %v1144 = vpop.f32.mrf.mxu0
      %v1145 = vadd.f32 0.0, %v1144
      %1146 = vdwg.mxu0
      %v1147 = vadd.f32 %v1058, %v1143
      %v1148 = vadd.f32 %v1059, %v1145
      %v1149 = vld [vmem:[%s1] sm:$0xff]
      %1151 = vset.pattern.permute.xlu0 0
      %1152 = vperm.xlu0 %1151, %v1149
      %v1153 = vpop.permute.xlu0 %1152
      %v1155 = vadd.f32 %v1147, %v1153
      %v1156 = vadd.f32 %v1148, %v1153
      %v1157 = vmul.f32 %v1155, 0.5
      %v1158 = vmul.f32 %v1156, 0.5
      %v1159 = vtanh.pop %v1157
      %v1160 = vtanh.pop %v1158
      %v1161 = vmul.f32 %v1159, 0.5
      %v1162 = vmul.f32 %v1160, 0.5
      %v1163 = vadd.f32 %v1161, 0.5
      %v1164 = vadd.f32 %v1162, 0.5
      %v1165 = vmul.f32 %v1155, %v1163
      %v1166 = vmul.f32 %v1156, %v1164
      %v1167 = vld [vmem:[%s2] sm:$0xff]
      %v1168 = vld [vmem:[%s3] sm:$0xff]
      %v1169 = vld [vmem:[%s320] sm:$0xff]
      %v1170 = vld [vmem:[%s320 + $0x8] sm:$0xff]
      %v1172 = vsel %vm390, %v1168, 0
      %1174 = vmatprep.subr.mxu0 0.0
      %1175 = vmatpush1.msra.mxu0 0.0
      %1176 = vmatprep.subr.mxu0 0.0
      %1177 = vmatpush1.msra.mxu0 0.0
      %1178 = vmatprep.subr.mxu0 0.0
      %1179 = vmatpush1.msra.mxu0 0.0
      %1180 = vmatprep.subr.mxu0 0.0
      %1181 = vmatpush1.msra.mxu0 0.0
      %1182 = vmatprep.subr.mxu0 0.0
      %1183 = vmatpush1.msra.mxu0 0.0
      %1184 = vmatprep.subr.mxu0 0.0
      %1185 = vmatpush1.msra.mxu0 0.0
      %1186 = vmatprep.subr.mxu0 0.0
      %1187 = vmatpush1.msra.mxu0 0.0
      %1188 = vmatprep.subr.mxu0 0.0
      %1189 = vmatpush1.msra.mxu0 0.0
      %1190 = vmatprep.subr.mxu0 0.0
      %1191 = vmatpush1.msra.mxu0 0.0
      %1192 = vmatprep.subr.mxu0 0.0
      %1193 = vmatpush1.msra.mxu0 0.0
      %1194 = vmatprep.subr.mxu0 0.0
      %1195 = vmatpush1.msra.mxu0 0.0
      %1196 = vmatprep.subr.mxu0 0.0
      %1197 = vmatpush1.msra.mxu0 0.0
      %1198 = vmatprep.subr.mxu0 0.0
      %1199 = vmatpush1.msra.mxu0 0.0
      %1200 = vmatprep.subr.mxu0 0.0
      %1201 = vmatpush1.msra.mxu0 0.0
      %1202 = vmatprep.subr.mxu0 0.0
      %1203 = vmatpush1.msra.mxu0 0.0
      %1204 = vmatprep.subr.mxu0 %v1170
      %1205 = vmatpush1.msra.mxu0 %v1169
      %1206 = vmatprep.subr.mxu0 0.0
      %1207 = vmatpush2.msra.mxu0 0.0
      %1208 = vmatprep.subr.mxu0 0.0
      %1209 = vmatpush2.msra.mxu0 0.0
      %1210 = vmatprep.subr.mxu0 0.0
      %1211 = vmatpush2.msra.mxu0 0.0
      %1212 = vmatprep.subr.mxu0 0.0
      %1213 = vmatpush2.msra.mxu0 0.0
      %1214 = vmatprep.subr.mxu0 0.0
      %1215 = vmatpush2.msra.mxu0 0.0
      %1216 = vmatprep.subr.mxu0 0.0
      %1217 = vmatpush2.msra.mxu0 0.0
      %1218 = vmatprep.subr.mxu0 0.0
      %1219 = vmatpush2.msra.mxu0 0.0
      %1220 = vmatprep.subr.mxu0 0.0
      %1221 = vmatpush2.msra.mxu0 0.0
      %1222 = vmatprep.subr.mxu0 0.0
      %1223 = vmatpush2.msra.mxu0 0.0
      %1224 = vmatprep.subr.mxu0 0.0
      %1225 = vmatpush2.msra.mxu0 0.0
      %1226 = vmatprep.subr.mxu0 0.0
      %1227 = vmatpush2.msra.mxu0 0.0
      %1228 = vmatprep.subr.mxu0 0.0
      %1229 = vmatpush2.msra.mxu0 0.0
      %1230 = vmatprep.subr.mxu0 0.0
      %1231 = vmatpush2.msra.mxu0 0.0
      %1232 = vmatprep.subr.mxu0 0.0
      %1233 = vmatpush2.msra.mxu0 0.0
      %1234 = vmatprep.subr.mxu0 0.0
      %1235 = vmatpush2.msra.mxu0 0.0
      %1236 = vmatprep.subr.mxu0 0.0
      %1237 = vmatpush2.msra.mxu0 0.0
      %1238 = vmatprep.mubr.f32.mxu0 0.0
      %1239 = vmatmul.mubr.f32.gmra.mxu0 %v1172
      %v1240 = vpop.f32.mrf.mxu0
      %v1241 = vadd.f32 0.0, %v1240
      %v1242 = vpop.f32.mrf.mxu0
      %v1243 = vadd.f32 0.0, %v1242
      %1244 = vdwg.mxu0
      %v1246 = vsel %vm390, %v1167, 0
      %1248 = vmatprep.subr.mxu0 0.0
      %1249 = vmatpush1.msra.mxu0 0.0
      %1250 = vmatprep.subr.mxu0 0.0
      %1251 = vmatpush1.msra.mxu0 0.0
      %1252 = vmatprep.subr.mxu0 0.0
      %1253 = vmatpush1.msra.mxu0 0.0
      %1254 = vmatprep.subr.mxu0 0.0
      %1255 = vmatpush1.msra.mxu0 0.0
      %1256 = vmatprep.subr.mxu0 0.0
      %1257 = vmatpush1.msra.mxu0 0.0
      %1258 = vmatprep.subr.mxu0 0.0
      %1259 = vmatpush1.msra.mxu0 0.0
      %1260 = vmatprep.subr.mxu0 0.0
      %1261 = vmatpush1.msra.mxu0 0.0
      %1262 = vmatprep.subr.mxu0 0.0
      %1263 = vmatpush1.msra.mxu0 0.0
      %1264 = vmatprep.subr.mxu0 0.0
      %1265 = vmatpush1.msra.mxu0 0.0
      %1266 = vmatprep.subr.mxu0 0.0
      %1267 = vmatpush1.msra.mxu0 0.0
      %1268 = vmatprep.subr.mxu0 0.0
      %1269 = vmatpush1.msra.mxu0 0.0
      %1270 = vmatprep.subr.mxu0 0.0
      %1271 = vmatpush1.msra.mxu0 0.0
      %1272 = vmatprep.subr.mxu0 0.0
      %1273 = vmatpush1.msra.mxu0 0.0
      %1274 = vmatprep.subr.mxu0 0.0
      %1275 = vmatpush1.msra.mxu0 0.0
      %1276 = vmatprep.subr.mxu0 0.0
      %1277 = vmatpush1.msra.mxu0 0.0
      %1278 = vmatprep.subr.mxu0 %v1166
      %1279 = vmatpush1.msra.mxu0 %v1165
      %1280 = vmatprep.subr.mxu0 0.0
      %1281 = vmatpush2.msra.mxu0 0.0
      %1282 = vmatprep.subr.mxu0 0.0
      %1283 = vmatpush2.msra.mxu0 0.0
      %1284 = vmatprep.subr.mxu0 0.0
      %1285 = vmatpush2.msra.mxu0 0.0
      %1286 = vmatprep.subr.mxu0 0.0
      %1287 = vmatpush2.msra.mxu0 0.0
      %1288 = vmatprep.subr.mxu0 0.0
      %1289 = vmatpush2.msra.mxu0 0.0
      %1290 = vmatprep.subr.mxu0 0.0
      %1291 = vmatpush2.msra.mxu0 0.0
      %1292 = vmatprep.subr.mxu0 0.0
      %1293 = vmatpush2.msra.mxu0 0.0
      %1294 = vmatprep.subr.mxu0 0.0
      %1295 = vmatpush2.msra.mxu0 0.0
      %1296 = vmatprep.subr.mxu0 0.0
      %1297 = vmatpush2.msra.mxu0 0.0
      %1298 = vmatprep.subr.mxu0 0.0
      %1299 = vmatpush2.msra.mxu0 0.0
      %1300 = vmatprep.subr.mxu0 0.0
      %1301 = vmatpush2.msra.mxu0 0.0
      %1302 = vmatprep.subr.mxu0 0.0
      %1303 = vmatpush2.msra.mxu0 0.0
      %1304 = vmatprep.subr.mxu0 0.0
      %1305 = vmatpush2.msra.mxu0 0.0
      %1306 = vmatprep.subr.mxu0 0.0
      %1307 = vmatpush2.msra.mxu0 0.0
      %1308 = vmatprep.subr.mxu0 0.0
      %1309 = vmatpush2.msra.mxu0 0.0
      %1310 = vmatprep.subr.mxu0 0.0
      %1311 = vmatpush2.msra.mxu0 0.0
      %1312 = vmatprep.mubr.f32.mxu0 0.0
      %1313 = vmatmul.mubr.f32.gmra.mxu0 %v1246
      %v1314 = vpop.f32.mrf.mxu0
      %v1315 = vadd.f32 %v1241, %v1314
      %v1316 = vpop.f32.mrf.mxu0
      %v1317 = vadd.f32 %v1243, %v1316
      %1318 = vdwg.mxu0
      %v1319 = vld [vmem:[%s4] sm:$0xff]
      %1321 = vset.pattern.permute.xlu0 0
      %1322 = vperm.xlu0 %1321, %v1319
      %v1323 = vpop.permute.xlu0 %1322
      %v1325 = vadd.f32 %v1315, %v1323
      %v1326 = vadd.f32 %v1317, %v1323
      %v1327 = vmul.f32 %v1325, 0.5
      %v1328 = vmul.f32 %v1326, 0.5
      %v1329 = vtanh.pop %v1327
      %v1330 = vtanh.pop %v1328
      %v1331 = vmul.f32 %v1329, 0.5
      %v1332 = vmul.f32 %v1330, 0.5
      %v1333 = vadd.f32 %v1331, 0.5
      %v1334 = vadd.f32 %v1332, 0.5
      %v1335 = vmul.f32 %v1325, %v1333
      %v1336 = vmul.f32 %v1326, %v1334
      %1337 = vst [vmem:[%s325] sm:$0xff] %v1335
      %1338 = vst [vmem:[%s325 + $0x8] sm:$0xff] %v1336
      %p1339 = scmp.lt.s32.totalorder %s19, 1
      %s1340 = scalar_select %p1339, %s19, 1
      %s1341 = smul.addr %s1340, 2
      %s1342 = smul.addr %s1341, 8
      %s1343 = scalar_lea.vmem %s8, %s1342
      // Predicated region
      $region53: #{sppcspc_pallas.7} parent=51 // pred_check
        %p1344 = pneg %p215
      $region54: #{sppcspc_pallas.7} parent=51 // pred_check_branch
        %1346 = sbr.rel (%p1344) target = $region56
      $region55: #{sppcspc_pallas.7} parent=51 // pred_region
        _
      $region56: #{sppcspc_pallas.7} parent=51 // pred_fallthru
        _
    $region52: #{sppcspc_pallas.7} parent=5 // pred_fallthru
      _
    %p1347 = scmp.le.s32.totalorder 2, %s14
    // Predicated region
    $region57: #{sppcspc_pallas.7} parent=5 // pred_check
      %p1348 = pneg %p1347
    $region58: #{sppcspc_pallas.7} parent=5 // pred_check_branch
      %1350 = sbr.rel (%p1348) target = $region60
    $region59: #{sppcspc_pallas.7} parent=5 // pred_region
      %s1351 = ssub.s32 %s14, 2
      // Predicated region
      $region61: #{sppcspc_pallas.7} parent=59 // pred_check
        %p1352 = pneg %p221
      $region62: #{sppcspc_pallas.7} parent=59 // pred_check_branch
        %1354 = sbr.rel (%p1352) target = $region64
      $region63: #{sppcspc_pallas.7} parent=59 // pred_region
        %p1355 = scmp.lt.s32.totalorder %s20, 1
        %s1356 = scalar_select %p1355, %s20, 1
        %s1357 = smul.addr %s1356, 2
        %s1358 = smul.addr %s1357, 8
        %s1359 = scalar_lea.vmem %s8, %s1358
      $region64: #{sppcspc_pallas.7} parent=59 // pred_fallthru
        _
    $region60: #{sppcspc_pallas.7} parent=5 // pred_fallthru
      _
  $region6: #{sppcspc_pallas.7} parent=0 // loop_footer
    %s18 = sadd.s32 1, %s14
  $region7: #{sppcspc_pallas.7} parent=0 // loop_footer_branch
    %13 = sbr.rel target = $region3
  $region8: #{sppcspc_pallas.7} parent=0 // loop_exit
    _

</llo_original>
